<compile_context>
chip_gen: v5e
topology: v5e:2x2
jax: 0.10.0
libtpu: 0.0.40
codegen_flags: <defaults>
</compile_context>

<pallas_src>
from functools import partial

import numpy as np
import jax
import jax.numpy as jnp
from jax.experimental import pallas as pl
from jax.experimental.pallas import tpu as pltpu


# ---------------------------------------------------------------------------
# Pass 1: expand (1x1) + depthwise 3x3 per (batch, row-block) tile,
#         accumulating per-channel pooled sums for the SE module.
# ---------------------------------------------------------------------------
def _mbconv_pass1_kernel(stride, th_out,
                         x_ref, w1_ref, b1_ref, dw_ref, b2_ref,
                         h2_ref, pooled_ref, hpad_ref):
    H, W, Cin = x_ref.shape
    Ctmp = w1_ref.shape[1]
    TH = th_out                       # output rows in this tile
    THi = TH * stride                 # central input rows in this tile
    Wo = W // stride
    r = pl.program_id(1)
    nr = pl.num_programs(1)
    f32 = jnp.float32
    bf16 = jnp.bfloat16

    w1 = w1_ref[...]                  # (Cin, Ctmp) bf16, VMEM-resident
    b1 = b1_ref[...]                  # (1, Ctmp)   f32

    def expand_rows(x_rows, nrows):
        # 1x1 expand conv + folded-BN bias + SiLU for `nrows` input rows.
        h = jnp.dot(x_rows.reshape(nrows * W, Cin).astype(bf16), w1,
                    preferred_element_type=f32)
        h = h + b1
        h = h * jax.nn.sigmoid(h)                       # SiLU
        return h.reshape(nrows, W, Ctmp).astype(hpad_ref.dtype)

    # Stage the zero-padded, post-SiLU expand activation for this tile into a
    # bf16 VMEM scratch (rows = THi + halo, cols = W + 2).  The zero write
    # provides the conv padding on the image borders / halo rows.
    hpad_ref[...] = jnp.zeros(hpad_ref.shape, hpad_ref.dtype)

    row0 = pl.multiple_of(r * THi, THi)                 # first central input row
    hpad_ref[1:THi + 1, 1:W + 1, :] = expand_rows(
        x_ref[pl.ds(row0, THi), :, :], THi)

    @pl.when(r > 0)
    def _top_halo():
        hpad_ref[0:1, 1:W + 1, :] = expand_rows(
            x_ref[pl.ds(row0 - 1, 1), :, :], 1)

    if stride == 1:
        @pl.when(r < nr - 1)
        def _bottom_halo():
            hpad_ref[THi + 1:THi + 2, 1:W + 1, :] = expand_rows(
                x_ref[pl.ds(row0 + THi, 1), :, :], 1)
    # stride == 2: the bottom halo row is never read by the 3x3/stride-2 window.

    # ---- depthwise 3x3 (+ folded BN scale) + bias + SiLU ---------------------
    dw = dw_ref[...]                                    # (3, 3, Ctmp) f32

    if stride == 1:
        def tap(ki, kj):
            # plain (sublane-offset) slices straight off the scratch ref
            return hpad_ref[ki:ki + TH, kj:kj + W, :].astype(f32)
    else:
        def tap(ki, kj):
            # strided reads: only the (Ho, Wo) output grid is ever touched
            return hpad_ref[pl.ds(ki, TH, stride=2),
                            pl.ds(kj, Wo, stride=2), :].astype(f32)

    acc = tap(0, 0) * dw[0, 0]                          # first tap inits acc
    for ki in range(3):
        for kj in range(3):
            if ki == 0 and kj == 0:
                continue
            acc = acc + tap(ki, kj) * dw[ki, kj]

    h2 = acc + b2_ref[...]
    h2 = h2 * jax.nn.sigmoid(h2)                        # (TH, Wo, Ctmp) f32

    h2_ref[...] = h2.astype(h2_ref.dtype)               # bf16 inter-pass tensor

    # SE pooled sums: per-batch accumulator (block index constant across r).
    @pl.when(r == 0)
    def _init_pool():
        pooled_ref[...] = jnp.zeros_like(pooled_ref)
    pooled_ref[...] += jnp.sum(h2.reshape(TH * Wo, Ctmp), axis=0, keepdims=True)


# ---------------------------------------------------------------------------
# Pass 2: SE gate (once per batch) -> SE scale -> 1x1 project -> (+residual)
# ---------------------------------------------------------------------------
def _mbconv_pass2_kernel(add_residual, inv_hw,
                         h2_ref, pooled_ref, sew1_ref, seb1_ref,
                         sew2_ref, seb2_ref, w3_ref, b3_ref, *rest):
    if add_residual:
        x_ref, out_ref, gate_ref = rest
    else:
        out_ref, gate_ref = rest
        x_ref = None
    TH, Wo, Ctmp = h2_ref.shape
    Cout = w3_ref.shape[1]
    r = pl.program_id(1)
    f32 = jnp.float32
    bf16 = jnp.bfloat16

    # Compute the SE gate once per batch image, keep it in a persistent scratch.
    @pl.when(r == 0)
    def _se_gate():
        pooled = pooled_ref[...] * inv_hw               # (1, Ctmp) mean
        se = jnp.dot(pooled.astype(bf16), sew1_ref[...],
                     preferred_element_type=f32) + seb1_ref[...]
        se = se * jax.nn.sigmoid(se)                    # SiLU
        se = jnp.dot(se.astype(bf16), sew2_ref[...],
                     preferred_element_type=f32) + seb2_ref[...]
        gate_ref[...] = jax.nn.sigmoid(se)              # (1, Ctmp)

    h2 = h2_ref[...].astype(f32) * gate_ref[...]        # SE scale
    h3 = jnp.dot(h2.reshape(TH * Wo, Ctmp).astype(bf16), w3_ref[...],
                 preferred_element_type=f32) + b3_ref[...]
    h3 = h3.reshape(TH, Wo, Cout)
    if add_residual:
        h3 = h3 + x_ref[...]                            # x re-read per tile
    out_ref[...] = h3.astype(out_ref.dtype)


# ---------------------------------------------------------------------------
# Wrapper
# ---------------------------------------------------------------------------
def _const_spec(shape):
    nd = len(shape)

    def idx(b, r):
        return (0,) * nd

    return pl.BlockSpec(shape, idx)


def _nbytes(shape, dtype):
    return int(np.prod(shape)) * np.dtype(dtype).itemsize


def _vmem_limit(block_bytes, scratch_bytes):
    # 2x for double-buffered blocks, 2x safety margin + 2 MiB slack, >= 8 MiB.
    need = 2 * sum(block_bytes) + scratch_bytes
    return int(min(100 * 2**20, max(8 * 2**20, 2 * need + 2 * 2**20)))


@partial(jax.jit, static_argnames=("stride", "add_residual", "rows_per_block"))
def mbconv_pallas(x_nhwc, w1, b1, dw, b2, sew1, seb1, sew2, seb2, w3, b3,
                  *, stride, add_residual, rows_per_block=8):
    B, H, W, Cin = x_nhwc.shape
    Ctmp = w1.shape[1]
    Cout = w3.shape[1]
    if stride == 2:
        assert H % 2 == 0 and W % 2 == 0, "stride-2 path assumes even H, W"
    if add_residual:
        assert stride == 1 and Cin == Cout
    Ho, Wo = H // stride, W // stride

    TH = min(rows_per_block, Ho)                        # output rows per tile
    assert Ho % TH == 0, "Ho must be divisible by rows_per_block"
    NR = Ho // TH
    THi = TH * stride
    n_hpad_rows = THi + 2 if stride == 1 else THi + 1   # stride-2 needs no bottom halo
    bf16 = jnp.bfloat16
    f32 = jnp.float32

    # ---------------- pass 1: expand + depthwise + pooled sums ----------------
    p1_blocks = [
        _nbytes((H, W, Cin), x_nhwc.dtype),             # x (full image per batch)
        _nbytes(w1.shape, w1.dtype), _nbytes(b1.shape, b1.dtype),
        _nbytes(dw.shape, dw.dtype), _nbytes(b2.shape, b2.dtype),
        _nbytes((TH, Wo, Ctmp), bf16),                  # h2 tile out
        _nbytes((1, Ctmp), f32),                        # pooled out
    ]
    p1_scratch = _nbytes((n_hpad_rows, W + 2, Ctmp), bf16)

    h2, pooled = pl.pallas_call(
        partial(_mbconv_pass1_kernel, stride, TH),
        grid=(B, NR),
        in_specs=[
            # full image per batch, constant across the row axis (VMEM resident)
            pl.BlockSpec((None, H, W, Cin), lambda b, r: (b, 0, 0, 0)),
            _const_spec(w1.shape), _const_spec(b1.shape),
            _const_spec(dw.shape), _const_spec(b2.shape),
        ],
        out_specs=(
            pl.BlockSpec((None, TH, Wo, Ctmp), lambda b, r: (b, r, 0, 0)),
            pl.BlockSpec((None, 1, Ctmp), lambda b, r: (b, 0, 0)),   # accumulator
        ),
        out_shape=(
            jax.ShapeDtypeStruct((B, Ho, Wo, Ctmp), bf16),
            jax.ShapeDtypeStruct((B, 1, Ctmp), f32),
        ),
        scratch_shapes=[pltpu.VMEM((n_hpad_rows, W + 2, Ctmp), bf16)],
        compiler_params=pltpu.CompilerParams(
            dimension_semantics=("parallel", "arbitrary"),
            vmem_limit_bytes=_vmem_limit(p1_blocks, p1_scratch)),
    )(x_nhwc, w1, b1, dw, b2)

    # ---------------- pass 2: SE gate + scale + project (+ residual) ----------
    in_specs2 = [
        pl.BlockSpec((None, TH, Wo, Ctmp), lambda b, r: (b, r, 0, 0)),
        pl.BlockSpec((None, 1, Ctmp), lambda b, r: (b, 0, 0)),
        _const_spec(sew1.shape), _const_spec(seb1.shape),
        _const_spec(sew2.shape), _const_spec(seb2.shape),
        _const_spec(w3.shape), _const_spec(b3.shape),
    ]
    args2 = [h2, pooled, sew1, seb1, sew2, seb2, w3, b3]
    p2_blocks = [
        _nbytes((TH, Wo, Ctmp), bf16), _nbytes((1, Ctmp), f32),
        _nbytes(sew1.shape, sew1.dtype), _nbytes(seb1.shape, seb1.dtype),
        _nbytes(sew2.shape, sew2.dtype), _nbytes(seb2.shape, seb2.dtype),
        _nbytes(w3.shape, w3.dtype), _nbytes(b3.shape, b3.dtype),
        _nbytes((TH, Wo, Cout), x_nhwc.dtype),          # out tile
    ]
    if add_residual:
        in_specs2.append(pl.BlockSpec((None, TH, Wo, Cin),
                                      lambda b, r: (b, r, 0, 0)))
        args2.append(x_nhwc)
        p2_blocks.append(_nbytes((TH, Wo, Cin), x_nhwc.dtype))

    out = pl.pallas_call(
        partial(_mbconv_pass2_kernel, add_residual, 1.0 / float(Ho * Wo)),
        grid=(B, NR),
        in_specs=in_specs2,
        out_specs=pl.BlockSpec((None, TH, Wo, Cout), lambda b, r: (b, r, 0, 0)),
        out_shape=jax.ShapeDtypeStruct((B, Ho, Wo, Cout), x_nhwc.dtype),
        scratch_shapes=[pltpu.VMEM((1, Ctmp), f32)],    # SE gate, per-batch
        compiler_params=pltpu.CompilerParams(
            dimension_semantics=("parallel", "arbitrary"),
            vmem_limit_bytes=_vmem_limit(p2_blocks, _nbytes((1, Ctmp), f32))),
    )(*args2)
    return out


# ---------------------------------------------------------------------------
# Pure-JAX reference mirroring the kernel math (same bf16 matmul operands,
# bf16 staging / inter-pass storage, f32 accumulation).
# ---------------------------------------------------------------------------
def mbconv_ref(x_nhwc, p, stride, add_residual):
    bf16 = jnp.bfloat16
    f32 = jnp.float32
    B, H, W, Cin = x_nhwc.shape
    Ctmp = p["w1"].shape[1]
    Cout = p["w3"].shape[1]
    Ho, Wo = H // stride, W // stride

    h = jnp.dot(x_nhwc.reshape(B * H * W, Cin).astype(bf16), p["w1"],
                preferred_element_type=f32) + p["b1"]
    h = h * jax.nn.sigmoid(h)
    h = h.reshape(B, H, W, Ctmp).astype(bf16).astype(f32)   # bf16 staging

    xp = jnp.pad(h, ((0, 0), (1, 1), (1, 1), (0, 0)))
    acc = jnp.zeros((B, Ho, Wo, Ctmp), f32)
    for ki in range(3):
        for kj in range(3):
            tap = xp[:, ki:ki + stride * (Ho - 1) + 1:stride,
                     kj:kj + stride * (Wo - 1) + 1:stride, :]
            acc = acc + tap * p["dw"][ki, kj]
    h2 = acc + p["b2"]
    h2 = h2 * jax.nn.sigmoid(h2)

    pooled = jnp.mean(h2, axis=(1, 2))                       # from f32 h2
    h2 = h2.astype(bf16).astype(f32)                         # bf16 inter-pass

    se = jnp.dot(pooled.astype(bf16), p["sew1"],
                 preferred_element_type=f32) + p["seb1"]
    se = se * jax.nn.sigmoid(se)
    se = jnp.dot(se.astype(bf16), p["sew2"],
                 preferred_element_type=f32) + p["seb2"]
    se = jax.nn.sigmoid(se)
    h2 = h2 * se[:, None, None, :]

    h3 = jnp.dot(h2.reshape(B * Ho * Wo, Ctmp).astype(bf16), p["w3"],
                 preferred_element_type=f32) + p["b3"]
    h3 = h3.reshape(B, Ho, Wo, Cout)
    if add_residual:
        h3 = h3 + x_nhwc
    return h3


# ---------------------------------------------------------------------------
# Parameters (PyTorch layouts -> folded / NHWC layouts)
# ---------------------------------------------------------------------------
def make_raw_params(key, Cin, Cout, factor):
    Ctmp = Cin * factor
    Cse = Ctmp // 4                                          # SE reduction = 4
    ks = jax.random.split(key, 19)
    raw = dict(
        w1=0.3 * jax.random.normal(ks[0], (Ctmp, Cin, 1, 1), jnp.float32),
        dw=0.3 * jax.random.normal(ks[1], (Ctmp, 1, 3, 3), jnp.float32),
        w3=0.3 * jax.random.normal(ks[2], (Cout, Ctmp, 1, 1), jnp.float32),
        sew1=0.3 * jax.random.normal(ks[3], (Cse, Ctmp), jnp.float32),
        seb1=0.1 * jax.random.normal(ks[4], (Cse,), jnp.float32),
        sew2=0.3 * jax.random.normal(ks[5], (Ctmp, Cse), jnp.float32),
        seb2=0.1 * jax.random.normal(ks[6], (Ctmp,), jnp.float32),
    )

    def bn(kg, kb, km, kv, C):
        gamma = 1.0 + 0.1 * jax.random.normal(kg, (C,), jnp.float32)
        beta = 0.1 * jax.random.normal(kb, (C,), jnp.float32)
        mean = 0.1 * jax.random.normal(km, (C,), jnp.float32)
        var = 0.5 + jax.random.uniform(kv, (C,), jnp.float32)
        return gamma, beta, mean, var

    raw["bn1"] = bn(ks[7], ks[8], ks[9], ks[10], Ctmp)
    raw["bn2"] = bn(ks[11], ks[12], ks[13], ks[14], Ctmp)
    raw["bn3"] = bn(ks[15], ks[16], ks[17], ks[18], Cout)
    return raw


def prepare_params(raw, eps=1e-5):
    def fold(gamma, beta, mean, var):
        scale = gamma / jnp.sqrt(var + eps)
        bias = beta - mean * scale
        return scale, bias

    s1, b1 = fold(*raw["bn1"])
    s2, b2 = fold(*raw["bn2"])
    s3, b3 = fold(*raw["bn3"])

    w1 = jnp.transpose(raw["w1"][:, :, 0, 0], (1, 0)) * s1[None, :]     # (Cin, Ctmp)
    dw = jnp.transpose(raw["dw"][:, 0], (1, 2, 0)) * s2[None, None, :]  # (3, 3, Ctmp)
    w3 = jnp.transpose(raw["w3"][:, :, 0, 0], (1, 0)) * s3[None, :]     # (Ctmp, Cout)
    sew1 = jnp.transpose(raw["sew1"], (1, 0))                           # (Ctmp, Cse)
    sew2 = jnp.transpose(raw["sew2"], (1, 0))                           # (Cse, Ctmp)

    bf16 = jnp.bfloat16
    return dict(
        w1=w1.astype(bf16), b1=b1[None, :],
        dw=dw, b2=b2[None, :],
        sew1=sew1.astype(bf16), seb1=raw["seb1"][None, :],
        sew2=sew2.astype(bf16), seb2=raw["seb2"][None, :],
        w3=w3.astype(bf16), b3=b3[None, :],
    )


def run_case(key, *, B, Cin, Cout, H, W, factor, downsample, rows_per_block):
    stride = 2 if downsample else 1
    add_residual = (stride == 1 and Cin == Cout)

    kx, kp = jax.random.split(key)
    x_nchw = jax.random.normal(kx, (B, Cin, H, W), jnp.float32)
    p = prepare_params(make_raw_params(kp, Cin, Cout, factor))

    x_nhwc = jnp.transpose(x_nchw, (0, 2, 3, 1))             # NCHW -> NHWC
    out_nhwc = mbconv_pallas(
        x_nhwc, p["w1"], p["b1"], p["dw"], p["b2"],
        p["sew1"], p["seb1"], p["sew2"], p["seb2"], p["w3"], p["b3"],
        stride=stride, add_residual=add_residual, rows_per_block=rows_per_block)
    jax.block_until_ready(out_nhwc)

    ref_nhwc = mbconv_ref(x_nhwc, p, stride, add_residual)
    np.testing.assert_allclose(np.asarray(out_nhwc), np.asarray(ref_nhwc),
                               rtol=2e-3, atol=2e-3)

    out_nchw = jnp.transpose(out_nhwc, (0, 3, 1, 2))         # back to NCHW
    assert out_nchw.shape == (B, Cout, H // stride, W // stride)
    return out_nchw


if __name__ == "__main__":
    key = jax.random.PRNGKey(0)
    k1, k2 = jax.random.split(key)

    # MBConv(in_channels=4, out_channels=4, channels_factor=4, downsample=False)
    # stride-1 path, residual; 2 row-blocks per image (exercises halo + SE acc).
    run_case(k1, B=2, Cin=4, Cout=4, H=16, W=16, factor=4, downsample=False,
             rows_per_block=8)

    # MBConv(in_channels=4, out_channels=8, channels_factor=4, downsample=True)
    # stride-2 (strided-read depthwise) path, no residual; 2 row-blocks.
    run_case(k2, B=2, Cin=4, Cout=8, H=16, W=16, factor=4, downsample=True,
             rows_per_block=4)

    print("KERNEL_OK")
</pallas_src>

<mosaic_0001>
module attributes {stable_mosaic.version = 11 : i64} {
  func.func @_mbconv_pass2_kernel(%arg0: i32, %arg1: i32, %arg2: memref<1x8x16x16xbf16, #tpu.memory_space<vmem>>, %arg3: memref<1x1x16xf32, #tpu.memory_space<vmem>>, %arg4: memref<16x4xbf16, #tpu.memory_space<vmem>>, %arg5: memref<1x4xf32, #tpu.memory_space<vmem>>, %arg6: memref<4x16xbf16, #tpu.memory_space<vmem>>, %arg7: memref<1x16xf32, #tpu.memory_space<vmem>>, %arg8: memref<16x4xbf16, #tpu.memory_space<vmem>>, %arg9: memref<1x4xf32, #tpu.memory_space<vmem>>, %arg10: memref<1x8x16x4xf32, #tpu.memory_space<vmem>>, %arg11: memref<1x8x16x4xf32, #tpu.memory_space<vmem>>, %arg12: memref<1x16xf32, #tpu.memory_space<vmem>>) attributes {dimension_semantics = [#tpu.dimension_semantics<parallel>, #tpu.dimension_semantics<arbitrary>], iteration_bounds = array<i64: 2, 2>, scalar_prefetch = 0 : i64, scratch_operands = 1 : i64, tpu.core_type = #tpu.core_type<tc>, window_params = [{transform_indices = @transform_0, window_bounds = array<i64: 1, 8, 16, 16>}, {transform_indices = @transform_1, window_bounds = array<i64: 1, 1, 16>}, {pipeline_mode = #tpu.pipeline_mode<synchronous>, transform_indices = @transform_2, window_bounds = array<i64: 16, 4>}, {pipeline_mode = #tpu.pipeline_mode<synchronous>, transform_indices = @transform_3, window_bounds = array<i64: 1, 4>}, {pipeline_mode = #tpu.pipeline_mode<synchronous>, transform_indices = @transform_4, window_bounds = array<i64: 4, 16>}, {pipeline_mode = #tpu.pipeline_mode<synchronous>, transform_indices = @transform_5, window_bounds = array<i64: 1, 16>}, {pipeline_mode = #tpu.pipeline_mode<synchronous>, transform_indices = @transform_6, window_bounds = array<i64: 16, 4>}, {pipeline_mode = #tpu.pipeline_mode<synchronous>, transform_indices = @transform_7, window_bounds = array<i64: 1, 4>}, {transform_indices = @transform_8, window_bounds = array<i64: 1, 8, 16, 4>}, {transform_indices = @transform_9, window_bounds = array<i64: 1, 8, 16, 4>}]} {
    %c0_i32 = arith.constant 0 : i32
    %0 = arith.cmpi eq, %arg1, %c0_i32 : i32
    %1 = arith.extui %0 : i1 to i32
    %c0_i32_0 = arith.constant 0 : i32
    %2 = arith.cmpi ne, %1, %c0_i32_0 : i32
    scf.if %2 {
      %c0_18 = arith.constant 0 : index
      %c0_19 = arith.constant 0 : index
      %c0_20 = arith.constant 0 : index
      %24 = vector.load %arg3[%c0_18, %c0_19, %c0_20] : memref<1x1x16xf32, #tpu.memory_space<vmem>>, vector<1x1x16xf32>
      %25 = vector.shape_cast %24 : vector<1x1x16xf32> to vector<1x16xf32>
      %cst_21 = arith.constant 3.906250e-03 : f32
      %26 = vector.broadcast %cst_21 : f32 to vector<1x16xf32>
      %27 = arith.mulf %25, %26 : vector<1x16xf32>
      %28 = arith.truncf %27 : vector<1x16xf32> to vector<1x16xbf16>
      %c0_22 = arith.constant 0 : index
      %c0_23 = arith.constant 0 : index
      %29 = vector.load %arg4[%c0_22, %c0_23] : memref<16x4xbf16, #tpu.memory_space<vmem>>, vector<16x4xbf16>
      %cst_24 = arith.constant dense<0.000000e+00> : vector<1x4xf32>
      %30 = tpu.matmul %28, %29, %cst_24 {dimension_numbers = #tpu.dot_dimension_numbers<[1], [0], [0], [1], [0, 0, 1, 1], [], []>} : vector<1x16xbf16>, vector<16x4xbf16>, vector<1x4xf32> -> vector<1x4xf32>
      %c0_25 = arith.constant 0 : index
      %c0_26 = arith.constant 0 : index
      %31 = vector.load %arg5[%c0_25, %c0_26] : memref<1x4xf32, #tpu.memory_space<vmem>>, vector<1x4xf32>
      %32 = arith.addf %30, %31 : vector<1x4xf32>
      %33 = arith.negf %32 : vector<1x4xf32>
      %34 = math.exp %33 : vector<1x4xf32>
      %cst_27 = arith.constant 1.000000e+00 : f32
      %35 = vector.broadcast %cst_27 : f32 to vector<1x4xf32>
      %36 = arith.addf %35, %34 : vector<1x4xf32>
      %37 = arith.divf %35, %36 : vector<1x4xf32>
      %38 = arith.mulf %32, %37 : vector<1x4xf32>
      %39 = arith.truncf %38 : vector<1x4xf32> to vector<1x4xbf16>
      %c0_28 = arith.constant 0 : index
      %c0_29 = arith.constant 0 : index
      %40 = vector.load %arg6[%c0_28, %c0_29] : memref<4x16xbf16, #tpu.memory_space<vmem>>, vector<4x16xbf16>
      %cst_30 = arith.constant dense<0.000000e+00> : vector<1x16xf32>
      %41 = tpu.matmul %39, %40, %cst_30 {dimension_numbers = #tpu.dot_dimension_numbers<[1], [0], [0], [1], [0, 0, 1, 1], [], []>} : vector<1x4xbf16>, vector<4x16xbf16>, vector<1x16xf32> -> vector<1x16xf32>
      %c0_31 = arith.constant 0 : index
      %c0_32 = arith.constant 0 : index
      %42 = vector.load %arg7[%c0_31, %c0_32] : memref<1x16xf32, #tpu.memory_space<vmem>>, vector<1x16xf32>
      %43 = arith.addf %41, %42 : vector<1x16xf32>
      %44 = arith.negf %43 : vector<1x16xf32>
      %45 = math.exp %44 : vector<1x16xf32>
      %cst_33 = arith.constant 1.000000e+00 : f32
      %46 = vector.broadcast %cst_33 : f32 to vector<1x16xf32>
      %47 = arith.addf %46, %45 : vector<1x16xf32>
      %48 = arith.divf %46, %47 : vector<1x16xf32>
      %c0_34 = arith.constant 0 : index
      %c0_35 = arith.constant 0 : index
      %49 = vector.load %arg12[%c0_34, %c0_35] : memref<1x16xf32, #tpu.memory_space<vmem>>, vector<1x16xf32>
      tpu.vector_store %arg12[%c0_34, %c0_35], %48 {strides = array<i32>} : memref<1x16xf32, #tpu.memory_space<vmem>>, vector<1x16xf32>,
    } else {
    }
    %c0 = arith.constant 0 : index
    %c0_1 = arith.constant 0 : index
    %c0_2 = arith.constant 0 : index
    %c0_3 = arith.constant 0 : index
    %3 = vector.load %arg2[%c0, %c0_1, %c0_2, %c0_3] : memref<1x8x16x16xbf16, #tpu.memory_space<vmem>>, vector<1x8x16x16xbf16>
    %4 = vector.shape_cast %3 : vector<1x8x16x16xbf16> to vector<8x16x16xbf16>
    %5 = arith.extf %4 : vector<8x16x16xbf16> to vector<8x16x16xf32>
    %c0_4 = arith.constant 0 : index
    %c0_5 = arith.constant 0 : index
    %6 = vector.load %arg12[%c0_4, %c0_5] : memref<1x16xf32, #tpu.memory_space<vmem>>, vector<1x16xf32>
    %7 = vector.shape_cast %6 : vector<1x16xf32> to vector<1x1x16xf32>
    %8 = vector.broadcast %7 : vector<1x1x16xf32> to vector<8x16x16xf32>
    %9 = arith.mulf %5, %8 : vector<8x16x16xf32>
    %10 = vector.shape_cast %9 : vector<8x16x16xf32> to vector<128x16xf32>
    %11 = arith.truncf %10 : vector<128x16xf32> to vector<128x16xbf16>
    %c0_6 = arith.constant 0 : index
    %c0_7 = arith.constant 0 : index
    %12 = vector.load %arg8[%c0_6, %c0_7] : memref<16x4xbf16, #tpu.memory_space<vmem>>, vector<16x4xbf16>
    %cst = arith.constant dense<0.000000e+00> : vector<128x4xf32>
    %13 = tpu.matmul %11, %12, %cst {dimension_numbers = #tpu.dot_dimension_numbers<[1], [0], [0], [1], [0, 0, 1, 1], [], []>} : vector<128x16xbf16>, vector<16x4xbf16>, vector<128x4xf32> -> vector<128x4xf32>
    %c0_8 = arith.constant 0 : index
    %c0_9 = arith.constant 0 : index
    %14 = vector.load %arg9[%c0_8, %c0_9] : memref<1x4xf32, #tpu.memory_space<vmem>>, vector<1x4xf32>
    %15 = vector.broadcast %14 : vector<1x4xf32> to vector<128x4xf32>
    %16 = arith.addf %13, %15 : vector<128x4xf32>
    %17 = vector.shape_cast %16 : vector<128x4xf32> to vector<8x16x4xf32>
    %c0_10 = arith.constant 0 : index
    %c0_11 = arith.constant 0 : index
    %c0_12 = arith.constant 0 : index
    %c0_13 = arith.constant 0 : index
    %18 = vector.load %arg10[%c0_10, %c0_11, %c0_12, %c0_13] : memref<1x8x16x4xf32, #tpu.memory_space<vmem>>, vector<1x8x16x4xf32>
    %19 = vector.shape_cast %18 : vector<1x8x16x4xf32> to vector<8x16x4xf32>
    %20 = arith.addf %17, %19 : vector<8x16x4xf32>
    %c0_14 = arith.constant 0 : index
    %c0_15 = arith.constant 0 : index
    %c0_16 = arith.constant 0 : index
    %c0_17 = arith.constant 0 : index
    %21 = vector.load %arg11[%c0_14, %c0_15, %c0_16, %c0_17] : memref<1x8x16x4xf32, #tpu.memory_space<vmem>>, vector<1x8x16x4xf32>
    %22 = vector.shape_cast %21 : vector<1x8x16x4xf32> to vector<8x16x4xf32>
    %23 = vector.shape_cast %20 : vector<8x16x4xf32> to vector<1x8x16x4xf32>
    tpu.vector_store %arg11[%c0_14, %c0_15, %c0_16, %c0_17], %23 {strides = array<i32>} : memref<1x8x16x4xf32, #tpu.memory_space<vmem>>, vector<1x8x16x4xf32>,
    return
  }
  func.func @transform_0(%arg0: i32, %arg1: i32) -> (i32, i32, i32, i32) {
    %c0_i32 = arith.constant 0 : i32
    %c0_i32_0 = arith.constant 0 : i32
    %c0_i32_1 = arith.constant 0 : i32
    return %arg0, %arg1, %c0_i32, %c0_i32_0 : i32, i32, i32, i32
  }
  func.func @transform_1(%arg0: i32, %arg1: i32) -> (i32, i32, i32) {
    %c0_i32 = arith.constant 0 : i32
    %c0_i32_0 = arith.constant 0 : i32
    %c0_i32_1 = arith.constant 0 : i32
    return %arg0, %c0_i32, %c0_i32_0 : i32, i32, i32
  }
  func.func @transform_2(%arg0: i32, %arg1: i32) -> (i32, i32) {
    %c0_i32 = arith.constant 0 : i32
    %c0_i32_0 = arith.constant 0 : i32
    %c0_i32_1 = arith.constant 0 : i32
    return %c0_i32, %c0_i32_0 : i32, i32
  }
  func.func @transform_3(%arg0: i32, %arg1: i32) -> (i32, i32) {
    %c0_i32 = arith.constant 0 : i32
    %c0_i32_0 = arith.constant 0 : i32
    %c0_i32_1 = arith.constant 0 : i32
    return %c0_i32, %c0_i32_0 : i32, i32
  }
  func.func @transform_4(%arg0: i32, %arg1: i32) -> (i32, i32) {
    %c0_i32 = arith.constant 0 : i32
    %c0_i32_0 = arith.constant 0 : i32
    %c0_i32_1 = arith.constant 0 : i32
    return %c0_i32, %c0_i32_0 : i32, i32
  }
  func.func @transform_5(%arg0: i32, %arg1: i32) -> (i32, i32) {
    %c0_i32 = arith.constant 0 : i32
    %c0_i32_0 = arith.constant 0 : i32
    %c0_i32_1 = arith.constant 0 : i32
    return %c0_i32, %c0_i32_0 : i32, i32
  }
  func.func @transform_6(%arg0: i32, %arg1: i32) -> (i32, i32) {
    %c0_i32 = arith.constant 0 : i32
    %c0_i32_0 = arith.constant 0 : i32
    %c0_i32_1 = arith.constant 0 : i32
    return %c0_i32, %c0_i32_0 : i32, i32
  }
  func.func @transform_7(%arg0: i32, %arg1: i32) -> (i32, i32) {
    %c0_i32 = arith.constant 0 : i32
    %c0_i32_0 = arith.constant 0 : i32
    %c0_i32_1 = arith.constant 0 : i32
    return %c0_i32, %c0_i32_0 : i32, i32
  }
  func.func @transform_8(%arg0: i32, %arg1: i32) -> (i32, i32, i32, i32) {
    %c0_i32 = arith.constant 0 : i32
    %c0_i32_0 = arith.constant 0 : i32
    %c0_i32_1 = arith.constant 0 : i32
    return %arg0, %arg1, %c0_i32, %c0_i32_0 : i32, i32, i32, i32
  }
  func.func @transform_9(%arg0: i32, %arg1: i32) -> (i32, i32, i32, i32) {
    %c0_i32 = arith.constant 0 : i32
    %c0_i32_0 = arith.constant 0 : i32
    %c0_i32_1 = arith.constant 0 : i32
    return %arg0, %arg1, %c0_i32, %c0_i32_0 : i32, i32, i32, i32
  }
}

module attributes {stable_mosaic.version = 11 : i64} {
  func.func @_mbconv_pass1_kernel(%arg0: i32, %arg1: i32, %arg2: memref<1x16x16x4xf32, #tpu.memory_space<vmem>>, %arg3: memref<4x16xbf16, #tpu.memory_space<vmem>>, %arg4: memref<1x16xf32, #tpu.memory_space<vmem>>, %arg5: memref<3x3x16xf32, #tpu.memory_space<vmem>>, %arg6: memref<1x16xf32, #tpu.memory_space<vmem>>, %arg7: memref<1x8x16x16xbf16, #tpu.memory_space<vmem>>, %arg8: memref<1x1x16xf32, #tpu.memory_space<vmem>>, %arg9: memref<10x18x16xbf16, #tpu.memory_space<vmem>>) attributes {dimension_semantics = [#tpu.dimension_semantics<parallel>, #tpu.dimension_semantics<arbitrary>], iteration_bounds = array<i64: 2, 2>, scalar_prefetch = 0 : i64, scratch_operands = 1 : i64, tpu.core_type = #tpu.core_type<tc>, window_params = [{transform_indices = @transform_0, window_bounds = array<i64: 1, 16, 16, 4>}, {pipeline_mode = #tpu.pipeline_mode<synchronous>, transform_indices = @transform_1, window_bounds = array<i64: 4, 16>}, {pipeline_mode = #tpu.pipeline_mode<synchronous>, transform_indices = @transform_2, window_bounds = array<i64: 1, 16>}, {pipeline_mode = #tpu.pipeline_mode<synchronous>, transform_indices = @transform_3, window_bounds = array<i64: 3, 3, 16>}, {pipeline_mode = #tpu.pipeline_mode<synchronous>, transform_indices = @transform_4, window_bounds = array<i64: 1, 16>}, {transform_indices = @transform_5, window_bounds = array<i64: 1, 8, 16, 16>}, {transform_indices = @transform_6, window_bounds = array<i64: 1, 1, 16>}]} {
    %c0 = arith.constant 0 : index
    %c0_0 = arith.constant 0 : index
    %0 = vector.load %arg3[%c0, %c0_0] : memref<4x16xbf16, #tpu.memory_space<vmem>>, vector<4x16xbf16>
    %c0_1 = arith.constant 0 : index
    %c0_2 = arith.constant 0 : index
    %1 = vector.load %arg4[%c0_1, %c0_2] : memref<1x16xf32, #tpu.memory_space<vmem>>, vector<1x16xf32>
    %cst = arith.constant 0.000000e+00 : bf16
    %2 = vector.broadcast %cst : bf16 to vector<10x18x16xbf16>
    %c0_3 = arith.constant 0 : index
    %c0_4 = arith.constant 0 : index
    %c0_5 = arith.constant 0 : index
    %3 = vector.load %arg9[%c0_3, %c0_4, %c0_5] : memref<10x18x16xbf16, #tpu.memory_space<vmem>>, vector<10x18x16xbf16>
    tpu.vector_store %arg9[%c0_3, %c0_4, %c0_5], %2 {strides = array<i32>} : memref<10x18x16xbf16, #tpu.memory_space<vmem>>, vector<10x18x16xbf16>,
    %c8_i32 = arith.constant 8 : i32
    %4 = arith.muli %arg1, %c8_i32 : i32
    %5 = tpu.assume_multiple %4, 8 : i32
    %c0_6 = arith.constant 0 : index
    %6 = arith.index_cast %5 : i32 to index
    %c0_7 = arith.constant 0 : index
    %c0_8 = arith.constant 0 : index
    %7 = vector.load %arg2[%c0_6, %6, %c0_7, %c0_8] : memref<1x16x16x4xf32, #tpu.memory_space<vmem>>, vector<1x8x16x4xf32>
    %8 = vector.shape_cast %7 : vector<1x8x16x4xf32> to vector<8x16x4xf32>
    %9 = vector.shape_cast %8 : vector<8x16x4xf32> to vector<128x4xf32>
    %10 = arith.truncf %9 : vector<128x4xf32> to vector<128x4xbf16>
    %cst_9 = arith.constant dense<0.000000e+00> : vector<128x16xf32>
    %11 = tpu.matmul %10, %0, %cst_9 {dimension_numbers = #tpu.dot_dimension_numbers<[1], [0], [0], [1], [0, 0, 1, 1], [], []>} : vector<128x4xbf16>, vector<4x16xbf16>, vector<128x16xf32> -> vector<128x16xf32>
    %12 = vector.broadcast %1 : vector<1x16xf32> to vector<128x16xf32>
    %13 = arith.addf %11, %12 : vector<128x16xf32>
    %14 = arith.negf %13 : vector<128x16xf32>
    %15 = math.exp %14 : vector<128x16xf32>
    %cst_10 = arith.constant 1.000000e+00 : f32
    %16 = vector.broadcast %cst_10 : f32 to vector<128x16xf32>
    %17 = arith.addf %16, %15 : vector<128x16xf32>
    %18 = arith.divf %16, %17 : vector<128x16xf32>
    %19 = arith.mulf %13, %18 : vector<128x16xf32>
    %20 = vector.shape_cast %19 : vector<128x16xf32> to vector<8x16x16xf32>
    %21 = arith.truncf %20 : vector<8x16x16xf32> to vector<8x16x16xbf16>
    %c1 = arith.constant 1 : index
    %c1_11 = arith.constant 1 : index
    %c0_12 = arith.constant 0 : index
    %22 = vector.load %arg9[%c1, %c1_11, %c0_12] : memref<10x18x16xbf16, #tpu.memory_space<vmem>>, vector<8x16x16xbf16>
    tpu.vector_store %arg9[%c1, %c1_11, %c0_12], %21 {strides = array<i32>} : memref<10x18x16xbf16, #tpu.memory_space<vmem>>, vector<8x16x16xbf16>,
    %c0_i32 = arith.constant 0 : i32
    %23 = arith.cmpi sgt, %arg1, %c0_i32 : i32
    %24 = arith.extui %23 : i1 to i32
    %c0_i32_13 = arith.constant 0 : i32
    %25 = arith.cmpi ne, %24, %c0_i32_13 : i32
    scf.if %25 {
      %c1_i32_60 = arith.constant 1 : i32
      %127 = arith.subi %5, %c1_i32_60 : i32
      %c0_61 = arith.constant 0 : index
      %128 = arith.index_cast %127 : i32 to index
      %c0_62 = arith.constant 0 : index
      %c0_63 = arith.constant 0 : index
      %129 = vector.load %arg2[%c0_61, %128, %c0_62, %c0_63] : memref<1x16x16x4xf32, #tpu.memory_space<vmem>>, vector<1x1x16x4xf32>
      %130 = vector.shape_cast %129 : vector<1x1x16x4xf32> to vector<1x16x4xf32>
      %131 = vector.shape_cast %130 : vector<1x16x4xf32> to vector<16x4xf32>
      %132 = arith.truncf %131 : vector<16x4xf32> to vector<16x4xbf16>
      %cst_64 = arith.constant dense<0.000000e+00> : vector<16x16xf32>
      %133 = tpu.matmul %132, %0, %cst_64 {dimension_numbers = #tpu.dot_dimension_numbers<[1], [0], [0], [1], [0, 0, 1, 1], [], []>} : vector<16x4xbf16>, vector<4x16xbf16>, vector<16x16xf32> -> vector<16x16xf32>
      %134 = vector.broadcast %1 : vector<1x16xf32> to vector<16x16xf32>
      %135 = arith.addf %133, %134 : vector<16x16xf32>
      %136 = arith.negf %135 : vector<16x16xf32>
      %137 = math.exp %136 : vector<16x16xf32>
      %cst_65 = arith.constant 1.000000e+00 : f32
      %138 = vector.broadcast %cst_65 : f32 to vector<16x16xf32>
      %139 = arith.addf %138, %137 : vector<16x16xf32>
      %140 = arith.divf %138, %139 : vector<16x16xf32>
      %141 = arith.mulf %135, %140 : vector<16x16xf32>
      %142 = vector.shape_cast %141 : vector<16x16xf32> to vector<1x16x16xf32>
      %143 = arith.truncf %142 : vector<1x16x16xf32> to vector<1x16x16xbf16>
      %c0_66 = arith.constant 0 : index
      %c1_67 = arith.constant 1 : index
      %c0_68 = arith.constant 0 : index
      %144 = vector.load %arg9[%c0_66, %c1_67, %c0_68] : memref<10x18x16xbf16, #tpu.memory_space<vmem>>, vector<1x16x16xbf16>
      tpu.vector_store %arg9[%c0_66, %c1_67, %c0_68], %143 {strides = array<i32>} : memref<10x18x16xbf16, #tpu.memory_space<vmem>>, vector<1x16x16xbf16>,
    } else {
    }
    %c1_i32 = arith.constant 1 : i32
    %26 = arith.cmpi slt, %arg1, %c1_i32 : i32
    %27 = arith.extui %26 : i1 to i32
    %c0_i32_14 = arith.constant 0 : i32
    %28 = arith.cmpi ne, %27, %c0_i32_14 : i32
    scf.if %28 {
      %c8_i32_60 = arith.constant 8 : i32
      %127 = arith.addi %5, %c8_i32_60 : i32
      %c0_61 = arith.constant 0 : index
      %128 = arith.index_cast %127 : i32 to index
      %c0_62 = arith.constant 0 : index
      %c0_63 = arith.constant 0 : index
      %129 = vector.load %arg2[%c0_61, %128, %c0_62, %c0_63] : memref<1x16x16x4xf32, #tpu.memory_space<vmem>>, vector<1x1x16x4xf32>
      %130 = vector.shape_cast %129 : vector<1x1x16x4xf32> to vector<1x16x4xf32>
      %131 = vector.shape_cast %130 : vector<1x16x4xf32> to vector<16x4xf32>
      %132 = arith.truncf %131 : vector<16x4xf32> to vector<16x4xbf16>
      %cst_64 = arith.constant dense<0.000000e+00> : vector<16x16xf32>
      %133 = tpu.matmul %132, %0, %cst_64 {dimension_numbers = #tpu.dot_dimension_numbers<[1], [0], [0], [1], [0, 0, 1, 1], [], []>} : vector<16x4xbf16>, vector<4x16xbf16>, vector<16x16xf32> -> vector<16x16xf32>
      %134 = vector.broadcast %1 : vector<1x16xf32> to vector<16x16xf32>
      %135 = arith.addf %133, %134 : vector<16x16xf32>
      %136 = arith.negf %135 : vector<16x16xf32>
      %137 = math.exp %136 : vector<16x16xf32>
      %cst_65 = arith.constant 1.000000e+00 : f32
      %138 = vector.broadcast %cst_65 : f32 to vector<16x16xf32>
      %139 = arith.addf %138, %137 : vector<16x16xf32>
      %140 = arith.divf %138, %139 : vector<16x16xf32>
      %141 = arith.mulf %135, %140 : vector<16x16xf32>
      %142 = vector.shape_cast %141 : vector<16x16xf32> to vector<1x16x16xf32>
      %143 = arith.truncf %142 : vector<1x16x16xf32> to vector<1x16x16xbf16>
      %c9 = arith.constant 9 : index
      %c1_66 = arith.constant 1 : index
      %c0_67 = arith.constant 0 : index
      %144 = vector.load %arg9[%c9, %c1_66, %c0_67] : memref<10x18x16xbf16, #tpu.memory_space<vmem>>, vector<1x16x16xbf16>
      tpu.vector_store %arg9[%c9, %c1_66, %c0_67], %143 {strides = array<i32>} : memref<10x18x16xbf16, #tpu.memory_space<vmem>>, vector<1x16x16xbf16>,
    } else {
    }
    %c0_15 = arith.constant 0 : index
    %c0_16 = arith.constant 0 : index
    %c0_17 = arith.constant 0 : index
    %29 = vector.load %arg5[%c0_15, %c0_16, %c0_17] : memref<3x3x16xf32, #tpu.memory_space<vmem>>, vector<3x3x16xf32>
    %c0_18 = arith.constant 0 : index
    %c0_19 = arith.constant 0 : index
    %c0_20 = arith.constant 0 : index
    %30 = vector.load %arg9[%c0_18, %c0_19, %c0_20] : memref<10x18x16xbf16, #tpu.memory_space<vmem>>, vector<8x16x16xbf16>
    %31 = arith.extf %30 : vector<8x16x16xbf16> to vector<8x16x16xf32>
    %32 = vector.extract_strided_slice %29 {offsets = [0, 0, 0], sizes = [1, 1, 16], strides = [1, 1, 1]} : vector<3x3x16xf32> to vector<1x1x16xf32>
    %33 = vector.shape_cast %32 : vector<1x1x16xf32> to vector<16xf32>
    %34 = vector.shape_cast %33 : vector<16xf32> to vector<1x1x16xf32>
    %35 = vector.broadcast %34 : vector<1x1x16xf32> to vector<8x16x16xf32>
    %36 = arith.mulf %31, %35 : vector<8x16x16xf32>
    %c0_21 = arith.constant 0 : index
    %c1_22 = arith.constant 1 : index
    %c0_23 = arith.constant 0 : index
    %37 = vector.load %arg9[%c0_21, %c1_22, %c0_23] : memref<10x18x16xbf16, #tpu.memory_space<vmem>>, vector<8x16x16xbf16>
    %38 = arith.extf %37 : vector<8x16x16xbf16> to vector<8x16x16xf32>
    %39 = vector.extract_strided_slice %29 {offsets = [0, 1, 0], sizes = [1, 1, 16], strides = [1, 1, 1]} : vector<3x3x16xf32> to vector<1x1x16xf32>
    %40 = vector.shape_cast %39 : vector<1x1x16xf32> to vector<16xf32>
    %41 = vector.shape_cast %40 : vector<16xf32> to vector<1x1x16xf32>
    %42 = vector.broadcast %41 : vector<1x1x16xf32> to vector<8x16x16xf32>
    %43 = arith.mulf %38, %42 : vector<8x16x16xf32>
    %44 = arith.addf %36, %43 : vector<8x16x16xf32>
    %c0_24 = arith.constant 0 : index
    %c2 = arith.constant 2 : index
    %c0_25 = arith.constant 0 : index
    %45 = vector.load %arg9[%c0_24, %c2, %c0_25] : memref<10x18x16xbf16, #tpu.memory_space<vmem>>, vector<8x16x16xbf16>
    %46 = arith.extf %45 : vector<8x16x16xbf16> to vector<8x16x16xf32>
    %47 = vector.extract_strided_slice %29 {offsets = [0, 2, 0], sizes = [1, 1, 16], strides = [1, 1, 1]} : vector<3x3x16xf32> to vector<1x1x16xf32>
    %48 = vector.shape_cast %47 : vector<1x1x16xf32> to vector<16xf32>
    %49 = vector.shape_cast %48 : vector<16xf32> to vector<1x1x16xf32>
    %50 = vector.broadcast %49 : vector<1x1x16xf32> to vector<8x16x16xf32>
    %51 = arith.mulf %46, %50 : vector<8x16x16xf32>
    %52 = arith.addf %44, %51 : vector<8x16x16xf32>
    %c1_26 = arith.constant 1 : index
    %c0_27 = arith.constant 0 : index
    %c0_28 = arith.constant 0 : index
    %53 = vector.load %arg9[%c1_26, %c0_27, %c0_28] : memref<10x18x16xbf16, #tpu.memory_space<vmem>>, vector<8x16x16xbf16>
    %54 = arith.extf %53 : vector<8x16x16xbf16> to vector<8x16x16xf32>
    %55 = vector.extract_strided_slice %29 {offsets = [1, 0, 0], sizes = [1, 1, 16], strides = [1, 1, 1]} : vector<3x3x16xf32> to vector<1x1x16xf32>
    %56 = vector.shape_cast %55 : vector<1x1x16xf32> to vector<16xf32>
    %57 = vector.shape_cast %56 : vector<16xf32> to vector<1x1x16xf32>
    %58 = vector.broadcast %57 : vector<1x1x16xf32> to vector<8x16x16xf32>
    %59 = arith.mulf %54, %58 : vector<8x16x16xf32>
    %60 = arith.addf %52, %59 : vector<8x16x16xf32>
    %c1_29 = arith.constant 1 : index
    %c1_30 = arith.constant 1 : index
    %c0_31 = arith.constant 0 : index
    %61 = vector.load %arg9[%c1_29, %c1_30, %c0_31] : memref<10x18x16xbf16, #tpu.memory_space<vmem>>, vector<8x16x16xbf16>
    %62 = arith.extf %61 : vector<8x16x16xbf16> to vector<8x16x16xf32>
    %63 = vector.extract_strided_slice %29 {offsets = [1, 1, 0], sizes = [1, 1, 16], strides = [1, 1, 1]} : vector<3x3x16xf32> to vector<1x1x16xf32>
    %64 = vector.shape_cast %63 : vector<1x1x16xf32> to vector<16xf32>
    %65 = vector.shape_cast %64 : vector<16xf32> to vector<1x1x16xf32>
    %66 = vector.broadcast %65 : vector<1x1x16xf32> to vector<8x16x16xf32>
    %67 = arith.mulf %62, %66 : vector<8x16x16xf32>
    %68 = arith.addf %60, %67 : vector<8x16x16xf32>
    %c1_32 = arith.constant 1 : index
    %c2_33 = arith.constant 2 : index
    %c0_34 = arith.constant 0 : index
    %69 = vector.load %arg9[%c1_32, %c2_33, %c0_34] : memref<10x18x16xbf16, #tpu.memory_space<vmem>>, vector<8x16x16xbf16>
    %70 = arith.extf %69 : vector<8x16x16xbf16> to vector<8x16x16xf32>
    %71 = vector.extract_strided_slice %29 {offsets = [1, 2, 0], sizes = [1, 1, 16], strides = [1, 1, 1]} : vector<3x3x16xf32> to vector<1x1x16xf32>
    %72 = vector.shape_cast %71 : vector<1x1x16xf32> to vector<16xf32>
    %73 = vector.shape_cast %72 : vector<16xf32> to vector<1x1x16xf32>
    %74 = vector.broadcast %73 : vector<1x1x16xf32> to vector<8x16x16xf32>
    %75 = arith.mulf %70, %74 : vector<8x16x16xf32>
    %76 = arith.addf %68, %75 : vector<8x16x16xf32>
    %c2_35 = arith.constant 2 : index
    %c0_36 = arith.constant 0 : index
    %c0_37 = arith.constant 0 : index
    %77 = vector.load %arg9[%c2_35, %c0_36, %c0_37] : memref<10x18x16xbf16, #tpu.memory_space<vmem>>, vector<8x16x16xbf16>
    %78 = arith.extf %77 : vector<8x16x16xbf16> to vector<8x16x16xf32>
    %79 = vector.extract_strided_slice %29 {offsets = [2, 0, 0], sizes = [1, 1, 16], strides = [1, 1, 1]} : vector<3x3x16xf32> to vector<1x1x16xf32>
    %80 = vector.shape_cast %79 : vector<1x1x16xf32> to vector<16xf32>
    %81 = vector.shape_cast %80 : vector<16xf32> to vector<1x1x16xf32>
    %82 = vector.broadcast %81 : vector<1x1x16xf32> to vector<8x16x16xf32>
    %83 = arith.mulf %78, %82 : vector<8x16x16xf32>
    %84 = arith.addf %76, %83 : vector<8x16x16xf32>
    %c2_38 = arith.constant 2 : index
    %c1_39 = arith.constant 1 : index
    %c0_40 = arith.constant 0 : index
    %85 = vector.load %arg9[%c2_38, %c1_39, %c0_40] : memref<10x18x16xbf16, #tpu.memory_space<vmem>>, vector<8x16x16xbf16>
    %86 = arith.extf %85 : vector<8x16x16xbf16> to vector<8x16x16xf32>
    %87 = vector.extract_strided_slice %29 {offsets = [2, 1, 0], sizes = [1, 1, 16], strides = [1, 1, 1]} : vector<3x3x16xf32> to vector<1x1x16xf32>
    %88 = vector.shape_cast %87 : vector<1x1x16xf32> to vector<16xf32>
    %89 = vector.shape_cast %88 : vector<16xf32> to vector<1x1x16xf32>
    %90 = vector.broadcast %89 : vector<1x1x16xf32> to vector<8x16x16xf32>
    %91 = arith.mulf %86, %90 : vector<8x16x16xf32>
    %92 = arith.addf %84, %91 : vector<8x16x16xf32>
    %c2_41 = arith.constant 2 : index
    %c2_42 = arith.constant 2 : index
    %c0_43 = arith.constant 0 : index
    %93 = vector.load %arg9[%c2_41, %c2_42, %c0_43] : memref<10x18x16xbf16, #tpu.memory_space<vmem>>, vector<8x16x16xbf16>
    %94 = arith.extf %93 : vector<8x16x16xbf16> to vector<8x16x16xf32>
    %95 = vector.extract_strided_slice %29 {offsets = [2, 2, 0], sizes = [1, 1, 16], strides = [1, 1, 1]} : vector<3x3x16xf32> to vector<1x1x16xf32>
    %96 = vector.shape_cast %95 : vector<1x1x16xf32> to vector<16xf32>
    %97 = vector.shape_cast %96 : vector<16xf32> to vector<1x1x16xf32>
    %98 = vector.broadcast %97 : vector<1x1x16xf32> to vector<8x16x16xf32>
    %99 = arith.mulf %94, %98 : vector<8x16x16xf32>
    %100 = arith.addf %92, %99 : vector<8x16x16xf32>
    %c0_44 = arith.constant 0 : index
    %c0_45 = arith.constant 0 : index
    %101 = vector.load %arg6[%c0_44, %c0_45] : memref<1x16xf32, #tpu.memory_space<vmem>>, vector<1x16xf32>
    %102 = vector.shape_cast %101 : vector<1x16xf32> to vector<1x1x16xf32>
    %103 = vector.broadcast %102 : vector<1x1x16xf32> to vector<8x16x16xf32>
    %104 = arith.addf %100, %103 : vector<8x16x16xf32>
    %105 = arith.negf %104 : vector<8x16x16xf32>
    %106 = math.exp %105 : vector<8x16x16xf32>
    %cst_46 = arith.constant 1.000000e+00 : f32
    %107 = vector.broadcast %cst_46 : f32 to vector<8x16x16xf32>
    %108 = arith.addf %107, %106 : vector<8x16x16xf32>
    %109 = arith.divf %107, %108 : vector<8x16x16xf32>
    %110 = arith.mulf %104, %109 : vector<8x16x16xf32>
    %111 = arith.truncf %110 : vector<8x16x16xf32> to vector<8x16x16xbf16>
    %c0_47 = arith.constant 0 : index
    %c0_48 = arith.constant 0 : index
    %c0_49 = arith.constant 0 : index
    %c0_50 = arith.constant 0 : index
    %112 = vector.load %arg7[%c0_47, %c0_48, %c0_49, %c0_50] : memref<1x8x16x16xbf16, #tpu.memory_space<vmem>>, vector<1x8x16x16xbf16>
    %113 = vector.shape_cast %112 : vector<1x8x16x16xbf16> to vector<8x16x16xbf16>
    %114 = vector.shape_cast %111 : vector<8x16x16xbf16> to vector<1x8x16x16xbf16>
    tpu.vector_store %arg7[%c0_47, %c0_48, %c0_49, %c0_50], %114 {strides = array<i32>} : memref<1x8x16x16xbf16, #tpu.memory_space<vmem>>, vector<1x8x16x16xbf16>,
    %c0_i32_51 = arith.constant 0 : i32
    %115 = arith.cmpi eq, %arg1, %c0_i32_51 : i32
    %116 = arith.extui %115 : i1 to i32
    %c0_i32_52 = arith.constant 0 : i32
    %117 = arith.cmpi ne, %116, %c0_i32_52 : i32
    scf.if %117 {
      %cst_60 = arith.constant 0.000000e+00 : f32
      %127 = vector.broadcast %cst_60 : f32 to vector<1x16xf32>
      %c0_61 = arith.constant 0 : index
      %c0_62 = arith.constant 0 : index
      %c0_63 = arith.constant 0 : index
      %128 = vector.load %arg8[%c0_61, %c0_62, %c0_63] : memref<1x1x16xf32, #tpu.memory_space<vmem>>, vector<1x1x16xf32>
      %129 = vector.shape_cast %128 : vector<1x1x16xf32> to vector<1x16xf32>
      %130 = vector.shape_cast %127 : vector<1x16xf32> to vector<1x1x16xf32>
      tpu.vector_store %arg8[%c0_61, %c0_62, %c0_63], %130 {strides = array<i32>} : memref<1x1x16xf32, #tpu.memory_space<vmem>>, vector<1x1x16xf32>,
    } else {
    }
    %c0_53 = arith.constant 0 : index
    %c0_54 = arith.constant 0 : index
    %c0_55 = arith.constant 0 : index
    %118 = vector.load %arg8[%c0_53, %c0_54, %c0_55] : memref<1x1x16xf32, #tpu.memory_space<vmem>>, vector<1x1x16xf32>
    %119 = vector.shape_cast %118 : vector<1x1x16xf32> to vector<1x16xf32>
    %120 = vector.shape_cast %110 : vector<8x16x16xf32> to vector<128x16xf32>
    %cst_56 = arith.constant dense<0.000000e+00> : vector<16xf32>
    %121 = vector.multi_reduction <add>, %120, %cst_56 [0] : vector<128x16xf32> to vector<16xf32>
    %122 = vector.shape_cast %121 : vector<16xf32> to vector<1x16xf32>
    %123 = arith.addf %119, %122 : vector<1x16xf32>
    %c0_57 = arith.constant 0 : index
    %c0_58 = arith.constant 0 : index
    %c0_59 = arith.constant 0 : index
    %124 = vector.load %arg8[%c0_57, %c0_58, %c0_59] : memref<1x1x16xf32, #tpu.memory_space<vmem>>, vector<1x1x16xf32>
    %125 = vector.shape_cast %124 : vector<1x1x16xf32> to vector<1x16xf32>
    %126 = vector.shape_cast %123 : vector<1x16xf32> to vector<1x1x16xf32>
    tpu.vector_store %arg8[%c0_57, %c0_58, %c0_59], %126 {strides = array<i32>} : memref<1x1x16xf32, #tpu.memory_space<vmem>>, vector<1x1x16xf32>,
    return
  }
  func.func @transform_0(%arg0: i32, %arg1: i32) -> (i32, i32, i32, i32) {
    %c0_i32 = arith.constant 0 : i32
    %c0_i32_0 = arith.constant 0 : i32
    %c0_i32_1 = arith.constant 0 : i32
    %c0_i32_2 = arith.constant 0 : i32
    return %arg0, %c0_i32, %c0_i32_0, %c0_i32_1 : i32, i32, i32, i32
  }
  func.func @transform_1(%arg0: i32, %arg1: i32) -> (i32, i32) {
    %c0_i32 = arith.constant 0 : i32
    %c0_i32_0 = arith.constant 0 : i32
    %c0_i32_1 = arith.constant 0 : i32
    return %c0_i32, %c0_i32_0 : i32, i32
  }
  func.func @transform_2(%arg0: i32, %arg1: i32) -> (i32, i32) {
    %c0_i32 = arith.constant 0 : i32
    %c0_i32_0 = arith.constant 0 : i32
    %c0_i32_1 = arith.constant 0 : i32
    return %c0_i32, %c0_i32_0 : i32, i32
  }
  func.func @transform_3(%arg0: i32, %arg1: i32) -> (i32, i32, i32) {
    %c0_i32 = arith.constant 0 : i32
    %c0_i32_0 = arith.constant 0 : i32
    %c0_i32_1 = arith.constant 0 : i32
    %c0_i32_2 = arith.constant 0 : i32
    return %c0_i32, %c0_i32_0, %c0_i32_1 : i32, i32, i32
  }
  func.func @transform_4(%arg0: i32, %arg1: i32) -> (i32, i32) {
    %c0_i32 = arith.constant 0 : i32
    %c0_i32_0 = arith.constant 0 : i32
    %c0_i32_1 = arith.constant 0 : i32
    return %c0_i32, %c0_i32_0 : i32, i32
  }
  func.func @transform_5(%arg0: i32, %arg1: i32) -> (i32, i32, i32, i32) {
    %c0_i32 = arith.constant 0 : i32
    %c0_i32_0 = arith.constant 0 : i32
    %c0_i32_1 = arith.constant 0 : i32
    return %arg0, %arg1, %c0_i32, %c0_i32_0 : i32, i32, i32, i32
  }
  func.func @transform_6(%arg0: i32, %arg1: i32) -> (i32, i32, i32) {
    %c0_i32 = arith.constant 0 : i32
    %c0_i32_0 = arith.constant 0 : i32
    %c0_i32_1 = arith.constant 0 : i32
    return %arg0, %c0_i32, %c0_i32_0 : i32, i32, i32
  }
}

</mosaic_0001>

<llo_original>
// kernel: mbconv_pallas.3
$region0: #{mbconv_pallas.3}
  #allocation0 [shape = 'u32[]', space=smem, size = 0x4, offset = 0x4, fixed_abs, tag = 'smem constant byte address 0x4 - core index']
  #allocation1 [shape = 'u32[72,128]{1,0:T(1,128)}', space=vmem, size = 0x9000, scoped, tag = 'internal scratch']
  #allocation2 [shape = 'f32[1,16]{1,0:T(1,128)}', space=vmem, size = 0x200, scoped, tag = 'scratch operand']
  %s0 = inlined_call_operand.vmem [shape: bf16[2,16,16,16], index: 0, kind: input, shape index: {}]
  %s1 = inlined_call_operand.vmem [shape: f32[2,1,16], index: 1, kind: input, shape index: {}]
  %s2 = inlined_call_operand.vmem [shape: bf16[16,4], index: 2, kind: input, shape index: {}]
  %s3 = inlined_call_operand.vmem [shape: f32[1,4], index: 3, kind: input, shape index: {}]
  %s4 = inlined_call_operand.vmem [shape: bf16[4,16], index: 4, kind: input, shape index: {}]
  %s5 = inlined_call_operand.vmem [shape: f32[1,16], index: 5, kind: input, shape index: {}]
  %s6 = inlined_call_operand.vmem [shape: bf16[16,4], index: 6, kind: input, shape index: {}]
  %s7 = inlined_call_operand.vmem [shape: f32[1,4], index: 7, kind: input, shape index: {}]
  %s8 = inlined_call_operand.vmem [shape: f32[2,16,16,4], index: 8, kind: input, shape index: {}]
  %s9 = inlined_call_operand.vmem [shape: f32[2,16,16,4], index: 9, kind: output, shape index: {}]
  %s10 = sld [smem:[#allocation0]]
  $region73: #{mbconv_pallas.3} parent=0
    _
  %s12 = ssub.s32 1, %s10
  %s13 = scalar_select 0, %s12, %s10
  loop: start=0, step=1, limit=6
  $region2: #{mbconv_pallas.3} parent=0 // loop_pre_header
    _
  $region3: #{mbconv_pallas.3} parent=0 // loop_header
    %s15 = sphi 0, %s19
    %p16 = scmp.ge.s32.totalorder %s15, 6
    %s22 = sphi 0, %s34
    %s23 = sphi 0, %s30
    %s24 = sphi 0, %s22
    %s25 = sphi 0, %s23
    %s26 = sphi 0, %s24
    %s27 = sphi 0, %s25
    %s39 = sphi 0, %s41
    %s42 = sphi 0, %s39
    %s43 = sphi 0, %s42
    %s59 = sphi 0, %s43
    %s65 = sphi 0, %s67
    %s68 = sphi 0, %s65
    %s69 = sphi 0, %s68
    %s85 = sphi 0, %s69
    %s89 = sphi 0, %s89
    %s91 = sphi 0, %s89
    %s92 = sphi 0, %s91
    %s106 = sphi 0, %s92
    %s110 = sphi 0, %s110
    %s112 = sphi 0, %s110
    %s113 = sphi 0, %s112
    %s127 = sphi 0, %s113
    %s131 = sphi 0, %s131
    %s133 = sphi 0, %s131
    %s134 = sphi 0, %s133
    %s148 = sphi 0, %s134
    %s152 = sphi 0, %s152
    %s154 = sphi 0, %s152
    %s155 = sphi 0, %s154
    %s169 = sphi 0, %s155
    %s173 = sphi 0, %s173
    %s175 = sphi 0, %s173
    %s176 = sphi 0, %s175
    %s190 = sphi 0, %s176
    %s194 = sphi 0, %s194
    %s196 = sphi 0, %s194
    %s197 = sphi 0, %s196
    %s211 = sphi 0, %s197
    %s219 = sphi 0, %s221
    %s222 = sphi 0, %s219
    %s223 = sphi 0, %s222
    %s239 = sphi 0, %s223
    %s247 = sphi 0, %s249
    %s250 = sphi 0, %s247
    %s251 = sphi 0, %s250
    %s267 = sphi 0, %s251
  $region4: #{mbconv_pallas.3} parent=0 // loop_header_branch
    %18 = sbr.rel (%p16) target = $region8
  $region5: #{mbconv_pallas.3} parent=0 // loop_body
    %s20 = ssub.s32 %s15, 1
    %s21 = ssub.s32 %s15, 2
    %s28 = sadd.s32 1, %s23
    %p29 = scmp.ge.s32.totalorder %s28, 2
    %s30 = scalar_select %p29, 0, %s28
    %s31 = sadd.s32 1, %s22
    %s32 = scalar_select %p29, %s31, %s22
    %p33 = scmp.ge.s32.totalorder %s32, 2
    %s34 = scalar_select %p33, 0, %s32
    %s35 = ssub.s32 %s22, %s34
    %s36 = ssub.s32 %s23, %s30
    %s37 = sor.u32 %s35, %s36
    %p38 = scmp.eq.s32.totalorder %s37, 0
    %s40 = sadd.s32 %s39, 1
    %s41 = scalar_select %p38, %s39, %s40
    %p44 = pneg %p38
    %p45 = scmp.eq.s32.totalorder %s15, 3
    %p46 = por %p44, %p45
    %p47 = scmp.ne.s32.totalorder %s39, %s42
    %p48 = scmp.eq.s32.totalorder %s15, 0
    %p49 = por %p47, %p48
    %p50 = scmp.ne.s32.totalorder %s39, %s42
    %p51 = scmp.eq.s32.totalorder %s20, 3
    %p52 = por %p50, %p51
    %p53 = scmp.ne.s32.totalorder %s42, %s43
    %p54 = scmp.eq.s32.totalorder %s20, 0
    %p55 = por %p53, %p54
    %p56 = scmp.ne.s32.totalorder %s42, %s43
    %p57 = scmp.eq.s32.totalorder %s21, 3
    %p58 = por %p56, %p57
    %p60 = scmp.ne.s32.totalorder %s43, %s59
    %p61 = scmp.eq.s32.totalorder %s21, 0
    %p62 = por %p60, %p61
    %s63 = ssub.s32 %s22, %s34
    %p64 = scmp.eq.s32.totalorder %s63, 0
    %s66 = sadd.s32 %s65, 1
    %s67 = scalar_select %p64, %s65, %s66
    %p70 = pneg %p64
    %p71 = scmp.eq.s32.totalorder %s15, 3
    %p72 = por %p70, %p71
    %p73 = scmp.ne.s32.totalorder %s65, %s68
    %p74 = scmp.eq.s32.totalorder %s15, 0
    %p75 = por %p73, %p74
    %p76 = scmp.ne.s32.totalorder %s65, %s68
    %p77 = scmp.eq.s32.totalorder %s20, 3
    %p78 = por %p76, %p77
    %p79 = scmp.ne.s32.totalorder %s68, %s69
    %p80 = scmp.eq.s32.totalorder %s20, 0
    %p81 = por %p79, %p80
    %p82 = scmp.ne.s32.totalorder %s68, %s69
    %p83 = scmp.eq.s32.totalorder %s21, 3
    %p84 = por %p82, %p83
    %p86 = scmp.ne.s32.totalorder %s69, %s85
    %p87 = scmp.eq.s32.totalorder %s21, 0
    %p88 = por %p86, %p87
    %s90 = sadd.s32 %s89, 1
    %p93 = scmp.eq.s32.totalorder %s15, 3
    %p94 = scmp.ne.s32.totalorder %s89, %s91
    %p95 = scmp.eq.s32.totalorder %s15, 0
    %p96 = por %p94, %p95
    %p97 = scmp.ne.s32.totalorder %s89, %s91
    %p98 = scmp.eq.s32.totalorder %s20, 3
    %p99 = por %p97, %p98
    %p100 = scmp.ne.s32.totalorder %s91, %s92
    %p101 = scmp.eq.s32.totalorder %s20, 0
    %p102 = por %p100, %p101
    %p103 = scmp.ne.s32.totalorder %s91, %s92
    %p104 = scmp.eq.s32.totalorder %s21, 3
    %p105 = por %p103, %p104
    %p107 = scmp.ne.s32.totalorder %s92, %s106
    %p108 = scmp.eq.s32.totalorder %s21, 0
    %p109 = por %p107, %p108
    %s111 = sadd.s32 %s110, 1
    %p114 = scmp.eq.s32.totalorder %s15, 3
    %p115 = scmp.ne.s32.totalorder %s110, %s112
    %p116 = scmp.eq.s32.totalorder %s15, 0
    %p117 = por %p115, %p116
    %p118 = scmp.ne.s32.totalorder %s110, %s112
    %p119 = scmp.eq.s32.totalorder %s20, 3
    %p120 = por %p118, %p119
    %p121 = scmp.ne.s32.totalorder %s112, %s113
    %p122 = scmp.eq.s32.totalorder %s20, 0
    %p123 = por %p121, %p122
    %p124 = scmp.ne.s32.totalorder %s112, %s113
    %p125 = scmp.eq.s32.totalorder %s21, 3
    %p126 = por %p124, %p125
    %p128 = scmp.ne.s32.totalorder %s113, %s127
    %p129 = scmp.eq.s32.totalorder %s21, 0
    %p130 = por %p128, %p129
    %s132 = sadd.s32 %s131, 1
    %p135 = scmp.eq.s32.totalorder %s15, 3
    %p136 = scmp.ne.s32.totalorder %s131, %s133
    %p137 = scmp.eq.s32.totalorder %s15, 0
    %p138 = por %p136, %p137
    %p139 = scmp.ne.s32.totalorder %s131, %s133
    %p140 = scmp.eq.s32.totalorder %s20, 3
    %p141 = por %p139, %p140
    %p142 = scmp.ne.s32.totalorder %s133, %s134
    %p143 = scmp.eq.s32.totalorder %s20, 0
    %p144 = por %p142, %p143
    %p145 = scmp.ne.s32.totalorder %s133, %s134
    %p146 = scmp.eq.s32.totalorder %s21, 3
    %p147 = por %p145, %p146
    %p149 = scmp.ne.s32.totalorder %s134, %s148
    %p150 = scmp.eq.s32.totalorder %s21, 0
    %p151 = por %p149, %p150
    %s153 = sadd.s32 %s152, 1
    %p156 = scmp.eq.s32.totalorder %s15, 3
    %p157 = scmp.ne.s32.totalorder %s152, %s154
    %p158 = scmp.eq.s32.totalorder %s15, 0
    %p159 = por %p157, %p158
    %p160 = scmp.ne.s32.totalorder %s152, %s154
    %p161 = scmp.eq.s32.totalorder %s20, 3
    %p162 = por %p160, %p161
    %p163 = scmp.ne.s32.totalorder %s154, %s155
    %p164 = scmp.eq.s32.totalorder %s20, 0
    %p165 = por %p163, %p164
    %p166 = scmp.ne.s32.totalorder %s154, %s155
    %p167 = scmp.eq.s32.totalorder %s21, 3
    %p168 = por %p166, %p167
    %p170 = scmp.ne.s32.totalorder %s155, %s169
    %p171 = scmp.eq.s32.totalorder %s21, 0
    %p172 = por %p170, %p171
    %s174 = sadd.s32 %s173, 1
    %p177 = scmp.eq.s32.totalorder %s15, 3
    %p178 = scmp.ne.s32.totalorder %s173, %s175
    %p179 = scmp.eq.s32.totalorder %s15, 0
    %p180 = por %p178, %p179
    %p181 = scmp.ne.s32.totalorder %s173, %s175
    %p182 = scmp.eq.s32.totalorder %s20, 3
    %p183 = por %p181, %p182
    %p184 = scmp.ne.s32.totalorder %s175, %s176
    %p185 = scmp.eq.s32.totalorder %s20, 0
    %p186 = por %p184, %p185
    %p187 = scmp.ne.s32.totalorder %s175, %s176
    %p188 = scmp.eq.s32.totalorder %s21, 3
    %p189 = por %p187, %p188
    %p191 = scmp.ne.s32.totalorder %s176, %s190
    %p192 = scmp.eq.s32.totalorder %s21, 0
    %p193 = por %p191, %p192
    %s195 = sadd.s32 %s194, 1
    %p198 = scmp.eq.s32.totalorder %s15, 3
    %p199 = scmp.ne.s32.totalorder %s194, %s196
    %p200 = scmp.eq.s32.totalorder %s15, 0
    %p201 = por %p199, %p200
    %p202 = scmp.ne.s32.totalorder %s194, %s196
    %p203 = scmp.eq.s32.totalorder %s20, 3
    %p204 = por %p202, %p203
    %p205 = scmp.ne.s32.totalorder %s196, %s197
    %p206 = scmp.eq.s32.totalorder %s20, 0
    %p207 = por %p205, %p206
    %p208 = scmp.ne.s32.totalorder %s196, %s197
    %p209 = scmp.eq.s32.totalorder %s21, 3
    %p210 = por %p208, %p209
    %p212 = scmp.ne.s32.totalorder %s197, %s211
    %p213 = scmp.eq.s32.totalorder %s21, 0
    %p214 = por %p212, %p213
    %s215 = ssub.s32 %s22, %s34
    %s216 = ssub.s32 %s23, %s30
    %s217 = sor.u32 %s215, %s216
    %p218 = scmp.eq.s32.totalorder %s217, 0
    %s220 = sadd.s32 %s219, 1
    %s221 = scalar_select %p218, %s219, %s220
    %p224 = pneg %p218
    %p225 = scmp.eq.s32.totalorder %s15, 3
    %p226 = por %p224, %p225
    %p227 = scmp.ne.s32.totalorder %s219, %s222
    %p228 = scmp.eq.s32.totalorder %s15, 0
    %p229 = por %p227, %p228
    %p230 = scmp.ne.s32.totalorder %s219, %s222
    %p231 = scmp.eq.s32.totalorder %s20, 3
    %p232 = por %p230, %p231
    %p233 = scmp.ne.s32.totalorder %s222, %s223
    %p234 = scmp.eq.s32.totalorder %s20, 0
    %p235 = por %p233, %p234
    %p236 = scmp.ne.s32.totalorder %s222, %s223
    %p237 = scmp.eq.s32.totalorder %s21, 3
    %p238 = por %p236, %p237
    %p240 = scmp.ne.s32.totalorder %s223, %s239
    %p241 = scmp.eq.s32.totalorder %s21, 0
    %p242 = por %p240, %p241
    %s243 = ssub.s32 %s22, %s34
    %s244 = ssub.s32 %s23, %s30
    %s245 = sor.u32 %s243, %s244
    %p246 = scmp.eq.s32.totalorder %s245, 0
    %s248 = sadd.s32 %s247, 1
    %s249 = scalar_select %p246, %s247, %s248
    %p252 = pneg %p246
    %p253 = scmp.eq.s32.totalorder %s15, 3
    %p254 = por %p252, %p253
    %p255 = scmp.ne.s32.totalorder %s247, %s250
    %p256 = scmp.eq.s32.totalorder %s15, 0
    %p257 = por %p255, %p256
    %p258 = scmp.ne.s32.totalorder %s247, %s250
    %p259 = scmp.eq.s32.totalorder %s20, 3
    %p260 = por %p258, %p259
    %p261 = scmp.ne.s32.totalorder %s250, %s251
    %p262 = scmp.eq.s32.totalorder %s20, 0
    %p263 = por %p261, %p262
    %p264 = scmp.ne.s32.totalorder %s250, %s251
    %p265 = scmp.eq.s32.totalorder %s21, 3
    %p266 = por %p264, %p265
    %p268 = scmp.ne.s32.totalorder %s251, %s267
    %p269 = scmp.eq.s32.totalorder %s21, 0
    %p270 = por %p268, %p269
    %p271 = scmp.le.s32.totalorder 1, %s15
    %p272 = scmp.lt.s32.totalorder %s15, 5
    %p273 = pnand %p271, %p272
    %p274 = pneg %p273
    // Predicated region
    $region9: #{mbconv_pallas.3} parent=5 // pred_check
      _
    $region10: #{mbconv_pallas.3} parent=5 // pred_check_branch
      %276 = sbr.rel (%p273) target = $region12
    $region11: #{mbconv_pallas.3} parent=5 // pred_region
      %s277 = ssub.s32 %s15, 1
      // Predicated region
      $region13: #{mbconv_pallas.3} parent=11 // pred_check
        %p278 = pneg %p102
      $region14: #{mbconv_pallas.3} parent=11 // pred_check_branch
        %280 = sbr.rel (%p278) target = $region16
      $region15: #{mbconv_pallas.3} parent=11 // pred_region
        _
      $region16: #{mbconv_pallas.3} parent=11 // pred_fallthru
        _
      // Predicated region
      $region17: #{mbconv_pallas.3} parent=11 // pred_check
        %p281 = pneg %p123
      $region18: #{mbconv_pallas.3} parent=11 // pred_check_branch
        %283 = sbr.rel (%p281) target = $region20
      $region19: #{mbconv_pallas.3} parent=11 // pred_region
        _
      $region20: #{mbconv_pallas.3} parent=11 // pred_fallthru
        _
      // Predicated region
      $region21: #{mbconv_pallas.3} parent=11 // pred_check
        %p284 = pneg %p144
      $region22: #{mbconv_pallas.3} parent=11 // pred_check_branch
        %286 = sbr.rel (%p284) target = $region24
      $region23: #{mbconv_pallas.3} parent=11 // pred_region
        _
      $region24: #{mbconv_pallas.3} parent=11 // pred_fallthru
        _
      // Predicated region
      $region25: #{mbconv_pallas.3} parent=11 // pred_check
        %p287 = pneg %p165
      $region26: #{mbconv_pallas.3} parent=11 // pred_check_branch
        %289 = sbr.rel (%p287) target = $region28
      $region27: #{mbconv_pallas.3} parent=11 // pred_region
        _
      $region28: #{mbconv_pallas.3} parent=11 // pred_fallthru
        _
      // Predicated region
      $region29: #{mbconv_pallas.3} parent=11 // pred_check
        %p290 = pneg %p186
      $region30: #{mbconv_pallas.3} parent=11 // pred_check_branch
        %292 = sbr.rel (%p290) target = $region32
      $region31: #{mbconv_pallas.3} parent=11 // pred_region
        _
      $region32: #{mbconv_pallas.3} parent=11 // pred_fallthru
        _
      // Predicated region
      $region33: #{mbconv_pallas.3} parent=11 // pred_check
        %p293 = pneg %p207
      $region34: #{mbconv_pallas.3} parent=11 // pred_check_branch
        %295 = sbr.rel (%p293) target = $region36
      $region35: #{mbconv_pallas.3} parent=11 // pred_region
        _
      $region36: #{mbconv_pallas.3} parent=11 // pred_fallthru
        _
    $region12: #{mbconv_pallas.3} parent=5 // pred_fallthru
      _
    %p296 = scmp.lt.s32.totalorder %s15, 4
    // Predicated region
    $region37: #{mbconv_pallas.3} parent=5 // pred_check
      %p297 = pneg %p296
    $region38: #{mbconv_pallas.3} parent=5 // pred_check_branch
      %299 = sbr.rel (%p297) target = $region40
    $region39: #{mbconv_pallas.3} parent=5 // pred_region
      // Predicated region
      $region41: #{mbconv_pallas.3} parent=39 // pred_check
        %p300 = pneg %p49
      $region42: #{mbconv_pallas.3} parent=39 // pred_check_branch
        %302 = sbr.rel (%p300) target = $region44
      $region43: #{mbconv_pallas.3} parent=39 // pred_region
        %s303 = smul.u32 8, %s23
        %p304 = scmp.lt.s32.totalorder %s22, 1
        %s305 = scalar_select %p304, %s22, 1
        %p306 = scmp.lt.s32.totalorder %s303, 15
        %s307 = scalar_select %p306, %s303, 15
        %s308 = smul.addr %s307, 2
        %s309 = smul.addr %s305, 32
        %s310 = sadd.s32 %s308, %s309
        %s311 = smul.addr %s310, 4
        %s312 = scalar_lea.vmem %s0, %s311
        %s313 = smul.u32 8, %s23
      $region44: #{mbconv_pallas.3} parent=39 // pred_fallthru
        _
      // Predicated region
      $region45: #{mbconv_pallas.3} parent=39 // pred_check
        %p314 = pneg %p75
      $region46: #{mbconv_pallas.3} parent=39 // pred_check_branch
        %316 = sbr.rel (%p314) target = $region48
      $region47: #{mbconv_pallas.3} parent=39 // pred_region
        %p317 = scmp.lt.s32.totalorder %s22, 1
        %s318 = scalar_select %p317, %s22, 1
        %s319 = scalar_lea.vmem %s1, %s318
      $region48: #{mbconv_pallas.3} parent=39 // pred_fallthru
        _
      // Predicated region
      $region49: #{mbconv_pallas.3} parent=39 // pred_check
        %p320 = pneg %p229
      $region50: #{mbconv_pallas.3} parent=39 // pred_check_branch
        %322 = sbr.rel (%p320) target = $region52
      $region51: #{mbconv_pallas.3} parent=39 // pred_region
        %s323 = smul.u32 8, %s23
        %p324 = scmp.lt.s32.totalorder %s22, 1
        %s325 = scalar_select %p324, %s22, 1
        %p326 = scmp.lt.s32.totalorder %s323, 15
        %s327 = scalar_select %p326, %s323, 15
        %s328 = smul.addr %s327, 2
        %s329 = smul.addr %s325, 32
        %s330 = sadd.s32 %s328, %s329
        %s331 = smul.addr %s330, 8
        %s332 = scalar_lea.vmem %s8, %s331
        %s333 = smul.u32 8, %s23
      $region52: #{mbconv_pallas.3} parent=39 // pred_fallthru
        _
    $region40: #{mbconv_pallas.3} parent=5 // pred_fallthru
      _
    %p334 = scmp.le.s32.totalorder 1, %s15
    %p335 = scmp.lt.s32.totalorder %s15, 5
    %p336 = pnand %p334, %p335
    %p337 = pneg %p336
    // Predicated region
    $region53: #{mbconv_pallas.3} parent=5 // pred_check
      _
    $region54: #{mbconv_pallas.3} parent=5 // pred_check_branch
      %339 = sbr.rel (%p336) target = $region56
    $region55: #{mbconv_pallas.3} parent=5 // pred_region
      %s340 = ssub.s32 %s15, 1
      %s341 = smul.u32 8, %s25
      %p342 = scmp.lt.s32.totalorder %s24, 1
      %s343 = scalar_select %p342, %s24, 1
      %p344 = scmp.lt.s32.totalorder %s341, 15
      %s345 = scalar_select %p344, %s341, 15
      %s346 = smul.addr %s345, 2
      %s347 = smul.addr %s343, 32
      %s348 = sadd.s32 %s346, %s347
      %s349 = smul.addr %s348, 4
      %s350 = scalar_lea.vmem %s0, %s349
      %p351 = pneg %p55
      %p352 = pneg %p52
      %p353 = scmp.lt.s32.totalorder %s24, 1
      %s354 = scalar_select %p353, %s24, 1
      %s355 = scalar_lea.vmem %s1, %s354
      %p356 = pneg %p81
      %p357 = pneg %p78
      %p358 = pneg %p102
      %p359 = pneg %p99
      %p360 = pneg %p123
      %p361 = pneg %p120
      %p362 = pneg %p144
      %p363 = pneg %p141
      %p364 = pneg %p165
      %p365 = pneg %p162
      %p366 = pneg %p186
      %p367 = pneg %p183
      %p368 = pneg %p207
      %p369 = pneg %p204
      %s370 = smul.u32 8, %s25
      %p371 = scmp.lt.s32.totalorder %s24, 1
      %s372 = scalar_select %p371, %s24, 1
      %p373 = scmp.lt.s32.totalorder %s370, 15
      %s374 = scalar_select %p373, %s370, 15
      %s375 = smul.addr %s374, 2
      %s376 = smul.addr %s372, 32
      %s377 = sadd.s32 %s375, %s376
      %s378 = smul.addr %s377, 8
      %s379 = scalar_lea.vmem %s8, %s378
      %p380 = pneg %p235
      %p381 = pneg %p232
      %p382 = pneg %p263
      %p383 = pneg %p260
      %s384 = smul.u32 8, %s25
      %p385 = scmp.lt.s32.totalorder %s24, 1
      %s386 = scalar_select %p385, %s24, 1
      %p387 = scmp.lt.s32.totalorder %s384, 15
      %s388 = scalar_select %p387, %s384, 15
      %s389 = smul.addr %s388, 2
      %s390 = smul.addr %s386, 32
      %s391 = sadd.s32 %s389, %s390
      %s392 = smul.addr %s391, 8
      %s393 = scalar_lea.vmem %s9, %s392
      %s394 = smul.u32 8, %s25
      %p395 = scmp.lt.s32.totalorder %s24, 1
      %s396 = scalar_select %p395, %s24, 1
      %p397 = scmp.lt.s32.totalorder %s394, 15
      %s398 = scalar_select %p397, %s394, 15
      %s399 = smul.addr %s398, 2
      %s400 = smul.addr %s396, 32
      %s401 = sadd.s32 %s399, %s400
      %s402 = smul.addr %s401, 4
      %s403 = scalar_lea.vmem %s0, %s402
      %s404 = smul.u32 8, %s25
      %p405 = scmp.lt.s32.totalorder %s24, 1
      %s406 = scalar_select %p405, %s24, 1
      %s407 = scalar_lea.vmem %s1, %s406
      %s408 = smul.u32 8, %s25
      %p409 = scmp.lt.s32.totalorder %s24, 1
      %s410 = scalar_select %p409, %s24, 1
      %p411 = scmp.lt.s32.totalorder %s408, 15
      %s412 = scalar_select %p411, %s408, 15
      %s413 = smul.addr %s412, 2
      %s414 = smul.addr %s410, 32
      %s415 = sadd.s32 %s413, %s414
      %s416 = smul.addr %s415, 8
      %s417 = scalar_lea.vmem %s8, %s416
      %s418 = smul.u32 8, %s25
      %s419 = smul.u32 8, %s25
      %p420 = scmp.lt.s32.totalorder %s24, 1
      %s421 = scalar_select %p420, %s24, 1
      %p422 = scmp.lt.s32.totalorder %s419, 15
      %s423 = scalar_select %p422, %s419, 15
      %s424 = smul.addr %s423, 2
      %s425 = smul.addr %s421, 32
      %s426 = sadd.s32 %s424, %s425
      %s427 = smul.addr %s426, 8
      %s428 = scalar_lea.vmem %s9, %s427
      %s429 = smul.u32 8, %s25
      %p431 = scmp.eq.s32.totalorder %s25, 0
      // Predicated region
      $region57: #{mbconv_pallas.3} parent=55 // pred_check
        %p432 = pneg %p431
      $region58: #{mbconv_pallas.3} parent=55 // pred_check_branch
        %434 = sbr.rel (%p432) target = $region60
      $region59: #{mbconv_pallas.3} parent=55 // pred_region
        %v435 = vld [vmem:[%s407] sm:$0x1]
        %v436 = vmul.f32 %v435, 0.00390625
        %v437 = vpack.c.bf16 %v436, %v436
        %v438 = vld [vmem:[%s2] sm:$0xf]
        %v439 = vld [vmem:[%s2 + $0x4] sm:$0xf]
        %v440 = vld [vmem:[%s3] sm:$0x1]
        %v443 = vunpack.c.l.b16 %v438
        %v444 = vunpack.c.l.b16 %v439
        %v445 = vpack.c.b16 %v444, %v443
        %vm447 = vcmask 130048
        %v449 = vsel %vm447, %v437, 0
        %451 = vmatpush.bf16.msra.mxu0 0
        %452 = vmatpush.bf16.msra.mxu0 0
        %453 = vmatpush.bf16.msra.mxu0 0
        %454 = vmatpush.bf16.msra.mxu0 0
        %455 = vmatpush.bf16.msra.mxu0 0
        %456 = vmatpush.bf16.msra.mxu0 0
        %457 = vmatpush.bf16.msra.mxu0 0
        %458 = vmatpush.bf16.msra.mxu0 %v445
        %459 = vmatmul.bf16.gmra.mxu0 %v449
        %v460 = vpop.f32.mrf.mxu0
        %v461 = vadd.f32 %v440, %v460
        %v462 = vpop.f32.mrf.mxu0
        %463 = vdwg.mxu0
        %v464 = vxor.u32 %v461, 2147483648
        %v465 = vmul.f32 %v464, 1.442695
        %v466 = vpow.pop %v465
        %v467 = vadd.f32 %v466, 1.0
        %v468 = vrcp.pop %v467
        %v469 = vmul.f32 %v467, %v468
        %v470 = vsub.f32 1.0, %v469
        %v471 = vmul.f32 %v468, %v470
        %v472 = vadd.f32 %v468, %v471
        %vm473 = vweird.f32 %v467
        %vm474 = vweird.f32 %v468
        %vm475 = vmor %vm473, %vm474
        %v476 = vsel %vm475, %v468, %v472
        %v477 = vand.u32 2147483647, %v467
        %vm478 = vcmp.eq.f32.partialorder %v477, 8.507059e+37
        %v479 = vand.u32 %v467, 2147483648
        %v480 = vor.u32 1.1754944e-38, %v479
        %v481 = vsel %vm478, %v480, %v476
        %v482 = vmul.f32 1.0, %v481
        %v483 = vmul.f32 %v461, %v482
        %v484 = vpack.c.bf16 %v483, %v483
        %v485 = vld [vmem:[%s4] sm:$0x3]
        %v486 = vld [vmem:[%s5] sm:$0x1]
        %vm487 = vcmask 31744
        %v489 = vsel %vm487, %v484, 0
        %vm491 = vcmask 1041408
        %v493 = vsel %vm491, %v485, 0
        %495 = vmatpush.bf16.msra.mxu0 0
        %496 = vmatpush.bf16.msra.mxu0 0
        %497 = vmatpush.bf16.msra.mxu0 0
        %498 = vmatpush.bf16.msra.mxu0 0
        %499 = vmatpush.bf16.msra.mxu0 0
        %500 = vmatpush.bf16.msra.mxu0 0
        %501 = vmatpush.bf16.msra.mxu0 0
        %502 = vmatpush.bf16.msra.mxu0 %v493
        %503 = vmatmul.bf16.gmra.mxu0 %v489
        %v504 = vpop.f32.mrf.mxu0
        %v505 = vadd.f32 %v486, %v504
        %v506 = vpop.f32.mrf.mxu0
        %507 = vdwg.mxu0
        %v508 = vxor.u32 %v505, 2147483648
        %v509 = vmul.f32 %v508, 1.442695
        %v510 = vpow.pop %v509
        %v511 = vadd.f32 %v510, 1.0
        %v512 = vrcp.pop %v511
        %v513 = vmul.f32 %v511, %v512
        %v514 = vsub.f32 1.0, %v513
        %v515 = vmul.f32 %v512, %v514
        %v516 = vadd.f32 %v512, %v515
        %vm517 = vweird.f32 %v511
        %vm518 = vweird.f32 %v512
        %vm519 = vmor %vm517, %vm518
        %v520 = vsel %vm519, %v512, %v516
        %v521 = vand.u32 2147483647, %v511
        %vm522 = vcmp.eq.f32.partialorder %v521, 8.507059e+37
        %v523 = vand.u32 %v511, 2147483648
        %v524 = vor.u32 1.1754944e-38, %v523
        %v525 = vsel %vm522, %v524, %v520
        %v526 = vmul.f32 1.0, %v525
        %vm527 = vcmask 122880
        %528 = vst.msk [vmem:[#allocation2] sm:$0x1] %vm527, %v526
      $region60: #{mbconv_pallas.3} parent=55 // pred_fallthru
        _
      %v529 = vld [vmem:[%s403] sm:$0xf]
      %v530 = vld [vmem:[%s403 + $0x4] sm:$0xf]
      %v531 = vld [vmem:[%s403 + $0x8] sm:$0xf]
      %v532 = vld [vmem:[%s403 + $0xc] sm:$0xf]
      %v533 = vld [vmem:[%s403 + $0x10] sm:$0xf]
      %v534 = vld [vmem:[%s403 + $0x14] sm:$0xf]
      %v535 = vld [vmem:[%s403 + $0x18] sm:$0xf]
      %v536 = vld [vmem:[%s403 + $0x1c] sm:$0xf]
      %v537 = vld [vmem:[%s403 + $0x20] sm:$0xf]
      %v538 = vld [vmem:[%s403 + $0x24] sm:$0xf]
      %v539 = vld [vmem:[%s403 + $0x28] sm:$0xf]
      %v540 = vld [vmem:[%s403 + $0x2c] sm:$0xf]
      %v541 = vld [vmem:[%s403 + $0x30] sm:$0xf]
      %v542 = vld [vmem:[%s403 + $0x34] sm:$0xf]
      %v543 = vld [vmem:[%s403 + $0x38] sm:$0xf]
      %v544 = vld [vmem:[%s403 + $0x3c] sm:$0xf]
      %v545 = vunpack.c.l.bf16 %v529
      %v546 = vunpack.c.l.bf16 %v530
      %v547 = vunpack.c.l.bf16 %v531
      %v548 = vunpack.c.l.bf16 %v532
      %v549 = vunpack.c.l.bf16 %v533
      %v550 = vunpack.c.l.bf16 %v534
      %v551 = vunpack.c.l.bf16 %v535
      %v552 = vunpack.c.l.bf16 %v536
      %v553 = vunpack.c.l.bf16 %v537
      %v554 = vunpack.c.l.bf16 %v538
      %v555 = vunpack.c.l.bf16 %v539
      %v556 = vunpack.c.l.bf16 %v540
      %v557 = vunpack.c.l.bf16 %v541
      %v558 = vunpack.c.l.bf16 %v542
      %v559 = vunpack.c.l.bf16 %v543
      %v560 = vunpack.c.l.bf16 %v544
      %v561 = vld [vmem:[#allocation2] sm:$0x1]
      %v563 = vperm.slane %v561, 0
      %v565 = vmul.f32 %v545, %v563
      %v566 = vmul.f32 %v546, %v563
      %v567 = vmul.f32 %v547, %v563
      %v568 = vmul.f32 %v548, %v563
      %v569 = vmul.f32 %v549, %v563
      %v570 = vmul.f32 %v550, %v563
      %v571 = vmul.f32 %v551, %v563
      %v572 = vmul.f32 %v552, %v563
      %v573 = vmul.f32 %v553, %v563
      %v574 = vmul.f32 %v554, %v563
      %v575 = vmul.f32 %v555, %v563
      %v576 = vmul.f32 %v556, %v563
      %v577 = vmul.f32 %v557, %v563
      %v578 = vmul.f32 %v558, %v563
      %v579 = vmul.f32 %v559, %v563
      %v580 = vmul.f32 %v560, %v563
      %v581 = vpack.c.bf16 %v566, %v565
      %v582 = vpack.c.bf16 %v568, %v567
      %v583 = vpack.c.bf16 %v570, %v569
      %v584 = vpack.c.bf16 %v572, %v571
      %v585 = vpack.c.bf16 %v574, %v573
      %v586 = vpack.c.bf16 %v576, %v575
      %v587 = vpack.c.bf16 %v578, %v577
      %v588 = vpack.c.bf16 %v580, %v579
      %v589 = vld [vmem:[%s6] sm:$0xf]
      %v590 = vld [vmem:[%s6 + $0x4] sm:$0xf]
      %v591 = vld [vmem:[%s7] sm:$0x1]
      %v593 = vperm.slane %v591, 0
      %v597 = vunpack.c.l.b16 %v589
      %v598 = vunpack.c.l.b16 %v590
      %v599 = vpack.c.b16 %v598, %v597
      %vm601 = vcmask 130048
      %v603 = vsel %vm601, %v581, 0
      %v606 = vsel %vm601, %v582, 0
      %v609 = vsel %vm601, %v583, 0
      %v612 = vsel %vm601, %v584, 0
      %v615 = vsel %vm601, %v585, 0
      %v618 = vsel %vm601, %v586, 0
      %v621 = vsel %vm601, %v587, 0
      %v624 = vsel %vm601, %v588, 0
      %626 = vmatpush.bf16.msra.mxu0 0
      %627 = vmatpush.bf16.msra.mxu0 0
      %628 = vmatpush.bf16.msra.mxu0 0
      %629 = vmatpush.bf16.msra.mxu0 0
      %630 = vmatpush.bf16.msra.mxu0 0
      %631 = vmatpush.bf16.msra.mxu0 0
      %632 = vmatpush.bf16.msra.mxu0 0
      %633 = vmatpush.bf16.msra.mxu0 %v599
      %634 = vmatmul.bf16.gmra.mxu0 %v603
      %v635 = vpop.f32.mrf.mxu0
      %v636 = vadd.f32 %v593, %v635
      %v637 = vpop.f32.mrf.mxu0
      %v638 = vadd.f32 %v593, %v637
      %639 = vmatmul.bf16.gmra.mxu0 %v606
      %v640 = vpop.f32.mrf.mxu0
      %v641 = vadd.f32 %v593, %v640
      %v642 = vpop.f32.mrf.mxu0
      %v643 = vadd.f32 %v593, %v642
      %644 = vmatmul.bf16.gmra.mxu0 %v609
      %v645 = vpop.f32.mrf.mxu0
      %v646 = vadd.f32 %v593, %v645
      %v647 = vpop.f32.mrf.mxu0
      %v648 = vadd.f32 %v593, %v647
      %649 = vmatmul.bf16.gmra.mxu0 %v612
      %v650 = vpop.f32.mrf.mxu0
      %v651 = vadd.f32 %v593, %v650
      %v652 = vpop.f32.mrf.mxu0
      %v653 = vadd.f32 %v593, %v652
      %654 = vmatmul.bf16.gmra.mxu0 %v615
      %v655 = vpop.f32.mrf.mxu0
      %v656 = vadd.f32 %v593, %v655
      %v657 = vpop.f32.mrf.mxu0
      %v658 = vadd.f32 %v593, %v657
      %659 = vmatmul.bf16.gmra.mxu0 %v618
      %v660 = vpop.f32.mrf.mxu0
      %v661 = vadd.f32 %v593, %v660
      %v662 = vpop.f32.mrf.mxu0
      %v663 = vadd.f32 %v593, %v662
      %664 = vmatmul.bf16.gmra.mxu0 %v621
      %v665 = vpop.f32.mrf.mxu0
      %v666 = vadd.f32 %v593, %v665
      %v667 = vpop.f32.mrf.mxu0
      %v668 = vadd.f32 %v593, %v667
      %669 = vmatmul.bf16.gmra.mxu0 %v624
      %v670 = vpop.f32.mrf.mxu0
      %v671 = vadd.f32 %v593, %v670
      %v672 = vpop.f32.mrf.mxu0
      %v673 = vadd.f32 %v593, %v672
      %674 = vdwg.mxu0
      %v675 = vld [vmem:[%s417] sm:$0xff]
      %v676 = vld [vmem:[%s417 + $0x8] sm:$0xff]
      %v677 = vld [vmem:[%s417 + $0x10] sm:$0xff]
      %v678 = vld [vmem:[%s417 + $0x18] sm:$0xff]
      %v679 = vld [vmem:[%s417 + $0x20] sm:$0xff]
      %v680 = vld [vmem:[%s417 + $0x28] sm:$0xff]
      %v681 = vld [vmem:[%s417 + $0x30] sm:$0xff]
      %v682 = vld [vmem:[%s417 + $0x38] sm:$0xff]
      %v683 = vld [vmem:[%s417 + $0x40] sm:$0xff]
      %v684 = vld [vmem:[%s417 + $0x48] sm:$0xff]
      %v685 = vld [vmem:[%s417 + $0x50] sm:$0xff]
      %v686 = vld [vmem:[%s417 + $0x58] sm:$0xff]
      %v687 = vld [vmem:[%s417 + $0x60] sm:$0xff]
      %v688 = vld [vmem:[%s417 + $0x68] sm:$0xff]
      %v689 = vld [vmem:[%s417 + $0x70] sm:$0xff]
      %v690 = vld [vmem:[%s417 + $0x78] sm:$0xff]
      %v691 = vadd.f32 %v636, %v675
      %v692 = vadd.f32 %v638, %v676
      %v693 = vadd.f32 %v641, %v677
      %v694 = vadd.f32 %v643, %v678
      %v695 = vadd.f32 %v646, %v679
      %v696 = vadd.f32 %v648, %v680
      %v697 = vadd.f32 %v651, %v681
      %v698 = vadd.f32 %v653, %v682
      %v699 = vadd.f32 %v656, %v683
      %v700 = vadd.f32 %v658, %v684
      %v701 = vadd.f32 %v661, %v685
      %v702 = vadd.f32 %v663, %v686
      %v703 = vadd.f32 %v666, %v687
      %v704 = vadd.f32 %v668, %v688
      %v705 = vadd.f32 %v671, %v689
      %v706 = vadd.f32 %v673, %v690
      %vm707 = vcmask 31744
      %708 = vst.msk [vmem:[%s428] sm:$0xff] %vm707, %v691
      %709 = vst.msk [vmem:[%s428 + $0x8] sm:$0xff] %vm707, %v692
      %710 = vst.msk [vmem:[%s428 + $0x10] sm:$0xff] %vm707, %v693
      %711 = vst.msk [vmem:[%s428 + $0x18] sm:$0xff] %vm707, %v694
      %712 = vst.msk [vmem:[%s428 + $0x20] sm:$0xff] %vm707, %v695
      %713 = vst.msk [vmem:[%s428 + $0x28] sm:$0xff] %vm707, %v696
      %714 = vst.msk [vmem:[%s428 + $0x30] sm:$0xff] %vm707, %v697
      %715 = vst.msk [vmem:[%s428 + $0x38] sm:$0xff] %vm707, %v698
      %716 = vst.msk [vmem:[%s428 + $0x40] sm:$0xff] %vm707, %v699
      %717 = vst.msk [vmem:[%s428 + $0x48] sm:$0xff] %vm707, %v700
      %718 = vst.msk [vmem:[%s428 + $0x50] sm:$0xff] %vm707, %v701
      %719 = vst.msk [vmem:[%s428 + $0x58] sm:$0xff] %vm707, %v702
      %720 = vst.msk [vmem:[%s428 + $0x60] sm:$0xff] %vm707, %v703
      %721 = vst.msk [vmem:[%s428 + $0x68] sm:$0xff] %vm707, %v704
      %722 = vst.msk [vmem:[%s428 + $0x70] sm:$0xff] %vm707, %v705
      %723 = vst.msk [vmem:[%s428 + $0x78] sm:$0xff] %vm707, %v706
      %s724 = smul.u32 8, %s25
      %p725 = scmp.lt.s32.totalorder %s24, 1
      %s726 = scalar_select %p725, %s24, 1
      %p727 = scmp.lt.s32.totalorder %s724, 15
      %s728 = scalar_select %p727, %s724, 15
      %s729 = smul.addr %s728, 2
      %s730 = smul.addr %s726, 32
      %s731 = sadd.s32 %s729, %s730
      %s732 = smul.addr %s731, 8
      %s733 = scalar_lea.vmem %s9, %s732
      // Predicated region
      $region61: #{mbconv_pallas.3} parent=55 // pred_check
        %p734 = pneg %p260
      $region62: #{mbconv_pallas.3} parent=55 // pred_check_branch
        %736 = sbr.rel (%p734) target = $region64
      $region63: #{mbconv_pallas.3} parent=55 // pred_region
        %s737 = smul.u32 8, %s25
      $region64: #{mbconv_pallas.3} parent=55 // pred_fallthru
        _
    $region56: #{mbconv_pallas.3} parent=5 // pred_fallthru
      _
    %p738 = scmp.le.s32.totalorder 2, %s15
    // Predicated region
    $region65: #{mbconv_pallas.3} parent=5 // pred_check
      %p739 = pneg %p738
    $region66: #{mbconv_pallas.3} parent=5 // pred_check_branch
      %741 = sbr.rel (%p739) target = $region68
    $region67: #{mbconv_pallas.3} parent=5 // pred_region
      %s742 = ssub.s32 %s15, 2
      // Predicated region
      $region69: #{mbconv_pallas.3} parent=67 // pred_check
        %p743 = pneg %p266
      $region70: #{mbconv_pallas.3} parent=67 // pred_check_branch
        %745 = sbr.rel (%p743) target = $region72
      $region71: #{mbconv_pallas.3} parent=67 // pred_region
        %s746 = smul.u32 8, %s27
        %p747 = scmp.lt.s32.totalorder %s26, 1
        %s748 = scalar_select %p747, %s26, 1
        %p749 = scmp.lt.s32.totalorder %s746, 15
        %s750 = scalar_select %p749, %s746, 15
        %s751 = smul.addr %s750, 2
        %s752 = smul.addr %s748, 32
        %s753 = sadd.s32 %s751, %s752
        %s754 = smul.addr %s753, 8
        %s755 = scalar_lea.vmem %s9, %s754
      $region72: #{mbconv_pallas.3} parent=67 // pred_fallthru
        _
    $region68: #{mbconv_pallas.3} parent=5 // pred_fallthru
      _
  $region6: #{mbconv_pallas.3} parent=0 // loop_footer
    %s19 = sadd.s32 1, %s15
  $region7: #{mbconv_pallas.3} parent=0 // loop_footer_branch
    %14 = sbr.rel target = $region3
  $region8: #{mbconv_pallas.3} parent=0 // loop_exit
    _

// kernel: mbconv_pallas.2
$region0: #{mbconv_pallas.2}
  #allocation0 [shape = 'u32[]', space=smem, size = 0x4, offset = 0x4, fixed_abs, tag = 'smem constant byte address 0x4 - core index']
  #allocation1 [shape = 'u32[72,128]{1,0:T(1,128)}', space=vmem, size = 0x9000, scoped, tag = 'internal scratch']
  #allocation2 [shape = 'bf16[10,18,16]{2,1,0:T(8,128)(2,1)}', space=vmem, size = 0xf000, scoped, tag = 'scratch operand']
  %s0 = inlined_call_operand.vmem [shape: f32[2,16,16,4], index: 0, kind: input, shape index: {}]
  %s1 = inlined_call_operand.vmem [shape: bf16[4,16], index: 1, kind: input, shape index: {}]
  %s2 = inlined_call_operand.vmem [shape: f32[1,16], index: 2, kind: input, shape index: {}]
  %s3 = inlined_call_operand.vmem [shape: f32[3,3,16], index: 3, kind: input, shape index: {}]
  %s4 = inlined_call_operand.vmem [shape: f32[1,16], index: 4, kind: input, shape index: {}]
  %s5 = inlined_call_operand.vmem [shape: bf16[2,16,16,16], index: 5, kind: output, shape index: {0}]
  %s6 = inlined_call_operand.vmem [shape: f32[2,1,16], index: 6, kind: output, shape index: {1}]
  %7 = xla_tuple %s5, %s6
  %s8 = sld [smem:[#allocation0]]
  $region73: #{mbconv_pallas.2} parent=0
    _
  %s10 = ssub.s32 1, %s8
  %s11 = scalar_select 0, %s10, %s8
  loop: start=0, step=1, limit=6
  $region2: #{mbconv_pallas.2} parent=0 // loop_pre_header
    _
  $region3: #{mbconv_pallas.2} parent=0 // loop_header
    %s13 = sphi 0, %s17
    %p14 = scmp.ge.s32.totalorder %s13, 6
    %s20 = sphi 0, %s32
    %s21 = sphi 0, %s28
    %s22 = sphi 0, %s20
    %s23 = sphi 0, %s21
    %s24 = sphi 0, %s22
    %s25 = sphi 0, %s23
    %s35 = sphi 0, %s37
    %s38 = sphi 0, %s35
    %s39 = sphi 0, %s38
    %s55 = sphi 0, %s39
    %s59 = sphi 0, %s59
    %s61 = sphi 0, %s59
    %s62 = sphi 0, %s61
    %s76 = sphi 0, %s62
    %s80 = sphi 0, %s80
    %s82 = sphi 0, %s80
    %s83 = sphi 0, %s82
    %s97 = sphi 0, %s83
    %s101 = sphi 0, %s101
    %s103 = sphi 0, %s101
    %s104 = sphi 0, %s103
    %s118 = sphi 0, %s104
    %s122 = sphi 0, %s122
    %s124 = sphi 0, %s122
    %s125 = sphi 0, %s124
    %s139 = sphi 0, %s125
    %s147 = sphi 0, %s149
    %s150 = sphi 0, %s147
    %s151 = sphi 0, %s150
    %s167 = sphi 0, %s151
    %s173 = sphi 0, %s175
    %s176 = sphi 0, %s173
    %s177 = sphi 0, %s176
    %s193 = sphi 0, %s177
  $region4: #{mbconv_pallas.2} parent=0 // loop_header_branch
    %16 = sbr.rel (%p14) target = $region8
  $region5: #{mbconv_pallas.2} parent=0 // loop_body
    %s18 = ssub.s32 %s13, 1
    %s19 = ssub.s32 %s13, 2
    %s26 = sadd.s32 1, %s21
    %p27 = scmp.ge.s32.totalorder %s26, 2
    %s28 = scalar_select %p27, 0, %s26
    %s29 = sadd.s32 1, %s20
    %s30 = scalar_select %p27, %s29, %s20
    %p31 = scmp.ge.s32.totalorder %s30, 2
    %s32 = scalar_select %p31, 0, %s30
    %s33 = ssub.s32 %s20, %s32
    %p34 = scmp.eq.s32.totalorder %s33, 0
    %s36 = sadd.s32 %s35, 1
    %s37 = scalar_select %p34, %s35, %s36
    %p40 = pneg %p34
    %p41 = scmp.eq.s32.totalorder %s13, 3
    %p42 = por %p40, %p41
    %p43 = scmp.ne.s32.totalorder %s35, %s38
    %p44 = scmp.eq.s32.totalorder %s13, 0
    %p45 = por %p43, %p44
    %p46 = scmp.ne.s32.totalorder %s35, %s38
    %p47 = scmp.eq.s32.totalorder %s18, 3
    %p48 = por %p46, %p47
    %p49 = scmp.ne.s32.totalorder %s38, %s39
    %p50 = scmp.eq.s32.totalorder %s18, 0
    %p51 = por %p49, %p50
    %p52 = scmp.ne.s32.totalorder %s38, %s39
    %p53 = scmp.eq.s32.totalorder %s19, 3
    %p54 = por %p52, %p53
    %p56 = scmp.ne.s32.totalorder %s39, %s55
    %p57 = scmp.eq.s32.totalorder %s19, 0
    %p58 = por %p56, %p57
    %s60 = sadd.s32 %s59, 1
    %p63 = scmp.eq.s32.totalorder %s13, 3
    %p64 = scmp.ne.s32.totalorder %s59, %s61
    %p65 = scmp.eq.s32.totalorder %s13, 0
    %p66 = por %p64, %p65
    %p67 = scmp.ne.s32.totalorder %s59, %s61
    %p68 = scmp.eq.s32.totalorder %s18, 3
    %p69 = por %p67, %p68
    %p70 = scmp.ne.s32.totalorder %s61, %s62
    %p71 = scmp.eq.s32.totalorder %s18, 0
    %p72 = por %p70, %p71
    %p73 = scmp.ne.s32.totalorder %s61, %s62
    %p74 = scmp.eq.s32.totalorder %s19, 3
    %p75 = por %p73, %p74
    %p77 = scmp.ne.s32.totalorder %s62, %s76
    %p78 = scmp.eq.s32.totalorder %s19, 0
    %p79 = por %p77, %p78
    %s81 = sadd.s32 %s80, 1
    %p84 = scmp.eq.s32.totalorder %s13, 3
    %p85 = scmp.ne.s32.totalorder %s80, %s82
    %p86 = scmp.eq.s32.totalorder %s13, 0
    %p87 = por %p85, %p86
    %p88 = scmp.ne.s32.totalorder %s80, %s82
    %p89 = scmp.eq.s32.totalorder %s18, 3
    %p90 = por %p88, %p89
    %p91 = scmp.ne.s32.totalorder %s82, %s83
    %p92 = scmp.eq.s32.totalorder %s18, 0
    %p93 = por %p91, %p92
    %p94 = scmp.ne.s32.totalorder %s82, %s83
    %p95 = scmp.eq.s32.totalorder %s19, 3
    %p96 = por %p94, %p95
    %p98 = scmp.ne.s32.totalorder %s83, %s97
    %p99 = scmp.eq.s32.totalorder %s19, 0
    %p100 = por %p98, %p99
    %s102 = sadd.s32 %s101, 1
    %p105 = scmp.eq.s32.totalorder %s13, 3
    %p106 = scmp.ne.s32.totalorder %s101, %s103
    %p107 = scmp.eq.s32.totalorder %s13, 0
    %p108 = por %p106, %p107
    %p109 = scmp.ne.s32.totalorder %s101, %s103
    %p110 = scmp.eq.s32.totalorder %s18, 3
    %p111 = por %p109, %p110
    %p112 = scmp.ne.s32.totalorder %s103, %s104
    %p113 = scmp.eq.s32.totalorder %s18, 0
    %p114 = por %p112, %p113
    %p115 = scmp.ne.s32.totalorder %s103, %s104
    %p116 = scmp.eq.s32.totalorder %s19, 3
    %p117 = por %p115, %p116
    %p119 = scmp.ne.s32.totalorder %s104, %s118
    %p120 = scmp.eq.s32.totalorder %s19, 0
    %p121 = por %p119, %p120
    %s123 = sadd.s32 %s122, 1
    %p126 = scmp.eq.s32.totalorder %s13, 3
    %p127 = scmp.ne.s32.totalorder %s122, %s124
    %p128 = scmp.eq.s32.totalorder %s13, 0
    %p129 = por %p127, %p128
    %p130 = scmp.ne.s32.totalorder %s122, %s124
    %p131 = scmp.eq.s32.totalorder %s18, 3
    %p132 = por %p130, %p131
    %p133 = scmp.ne.s32.totalorder %s124, %s125
    %p134 = scmp.eq.s32.totalorder %s18, 0
    %p135 = por %p133, %p134
    %p136 = scmp.ne.s32.totalorder %s124, %s125
    %p137 = scmp.eq.s32.totalorder %s19, 3
    %p138 = por %p136, %p137
    %p140 = scmp.ne.s32.totalorder %s125, %s139
    %p141 = scmp.eq.s32.totalorder %s19, 0
    %p142 = por %p140, %p141
    %s143 = ssub.s32 %s20, %s32
    %s144 = ssub.s32 %s21, %s28
    %s145 = sor.u32 %s143, %s144
    %p146 = scmp.eq.s32.totalorder %s145, 0
    %s148 = sadd.s32 %s147, 1
    %s149 = scalar_select %p146, %s147, %s148
    %p152 = pneg %p146
    %p153 = scmp.eq.s32.totalorder %s13, 3
    %p154 = por %p152, %p153
    %p155 = scmp.ne.s32.totalorder %s147, %s150
    %p156 = scmp.eq.s32.totalorder %s13, 0
    %p157 = por %p155, %p156
    %p158 = scmp.ne.s32.totalorder %s147, %s150
    %p159 = scmp.eq.s32.totalorder %s18, 3
    %p160 = por %p158, %p159
    %p161 = scmp.ne.s32.totalorder %s150, %s151
    %p162 = scmp.eq.s32.totalorder %s18, 0
    %p163 = por %p161, %p162
    %p164 = scmp.ne.s32.totalorder %s150, %s151
    %p165 = scmp.eq.s32.totalorder %s19, 3
    %p166 = por %p164, %p165
    %p168 = scmp.ne.s32.totalorder %s151, %s167
    %p169 = scmp.eq.s32.totalorder %s19, 0
    %p170 = por %p168, %p169
    %s171 = ssub.s32 %s20, %s32
    %p172 = scmp.eq.s32.totalorder %s171, 0
    %s174 = sadd.s32 %s173, 1
    %s175 = scalar_select %p172, %s173, %s174
    %p178 = pneg %p172
    %p179 = scmp.eq.s32.totalorder %s13, 3
    %p180 = por %p178, %p179
    %p181 = scmp.ne.s32.totalorder %s173, %s176
    %p182 = scmp.eq.s32.totalorder %s13, 0
    %p183 = por %p181, %p182
    %p184 = scmp.ne.s32.totalorder %s173, %s176
    %p185 = scmp.eq.s32.totalorder %s18, 3
    %p186 = por %p184, %p185
    %p187 = scmp.ne.s32.totalorder %s176, %s177
    %p188 = scmp.eq.s32.totalorder %s18, 0
    %p189 = por %p187, %p188
    %p190 = scmp.ne.s32.totalorder %s176, %s177
    %p191 = scmp.eq.s32.totalorder %s19, 3
    %p192 = por %p190, %p191
    %p194 = scmp.ne.s32.totalorder %s177, %s193
    %p195 = scmp.eq.s32.totalorder %s19, 0
    %p196 = por %p194, %p195
    %p197 = scmp.le.s32.totalorder 1, %s13
    %p198 = scmp.lt.s32.totalorder %s13, 5
    %p199 = pnand %p197, %p198
    %p200 = pneg %p199
    // Predicated region
    $region9: #{mbconv_pallas.2} parent=5 // pred_check
      _
    $region10: #{mbconv_pallas.2} parent=5 // pred_check_branch
      %202 = sbr.rel (%p199) target = $region12
    $region11: #{mbconv_pallas.2} parent=5 // pred_region
      %s203 = ssub.s32 %s13, 1
      // Predicated region
      $region13: #{mbconv_pallas.2} parent=11 // pred_check
        %p204 = pneg %p72
      $region14: #{mbconv_pallas.2} parent=11 // pred_check_branch
        %206 = sbr.rel (%p204) target = $region16
      $region15: #{mbconv_pallas.2} parent=11 // pred_region
        _
      $region16: #{mbconv_pallas.2} parent=11 // pred_fallthru
        _
      // Predicated region
      $region17: #{mbconv_pallas.2} parent=11 // pred_check
        %p207 = pneg %p93
      $region18: #{mbconv_pallas.2} parent=11 // pred_check_branch
        %209 = sbr.rel (%p207) target = $region20
      $region19: #{mbconv_pallas.2} parent=11 // pred_region
        _
      $region20: #{mbconv_pallas.2} parent=11 // pred_fallthru
        _
      // Predicated region
      $region21: #{mbconv_pallas.2} parent=11 // pred_check
        %p210 = pneg %p114
      $region22: #{mbconv_pallas.2} parent=11 // pred_check_branch
        %212 = sbr.rel (%p210) target = $region24
      $region23: #{mbconv_pallas.2} parent=11 // pred_region
        _
      $region24: #{mbconv_pallas.2} parent=11 // pred_fallthru
        _
      // Predicated region
      $region25: #{mbconv_pallas.2} parent=11 // pred_check
        %p213 = pneg %p135
      $region26: #{mbconv_pallas.2} parent=11 // pred_check_branch
        %215 = sbr.rel (%p213) target = $region28
      $region27: #{mbconv_pallas.2} parent=11 // pred_region
        _
      $region28: #{mbconv_pallas.2} parent=11 // pred_fallthru
        _
    $region12: #{mbconv_pallas.2} parent=5 // pred_fallthru
      _
    %p216 = scmp.lt.s32.totalorder %s13, 4
    // Predicated region
    $region29: #{mbconv_pallas.2} parent=5 // pred_check
      %p217 = pneg %p216
    $region30: #{mbconv_pallas.2} parent=5 // pred_check_branch
      %219 = sbr.rel (%p217) target = $region32
    $region31: #{mbconv_pallas.2} parent=5 // pred_region
      // Predicated region
      $region33: #{mbconv_pallas.2} parent=31 // pred_check
        %p220 = pneg %p45
      $region34: #{mbconv_pallas.2} parent=31 // pred_check_branch
        %222 = sbr.rel (%p220) target = $region36
      $region35: #{mbconv_pallas.2} parent=31 // pred_region
        %p223 = scmp.lt.s32.totalorder %s20, 1
        %s224 = scalar_select %p223, %s20, 1
        %s225 = smul.addr %s224, 32
        %s226 = smul.addr %s225, 8
        %s227 = scalar_lea.vmem %s0, %s226
      $region36: #{mbconv_pallas.2} parent=31 // pred_fallthru
        _
    $region32: #{mbconv_pallas.2} parent=5 // pred_fallthru
      _
    %p228 = scmp.le.s32.totalorder 1, %s13
    %p229 = scmp.lt.s32.totalorder %s13, 5
    %p230 = pnand %p228, %p229
    %p231 = pneg %p230
    // Predicated region
    $region37: #{mbconv_pallas.2} parent=5 // pred_check
      _
    $region38: #{mbconv_pallas.2} parent=5 // pred_check_branch
      %233 = sbr.rel (%p230) target = $region40
    $region39: #{mbconv_pallas.2} parent=5 // pred_region
      %s234 = ssub.s32 %s13, 1
      %p235 = scmp.lt.s32.totalorder %s22, 1
      %s236 = scalar_select %p235, %s22, 1
      %s237 = smul.addr %s236, 32
      %s238 = smul.addr %s237, 8
      %s239 = scalar_lea.vmem %s0, %s238
      %p240 = pneg %p51
      %p241 = pneg %p48
      %p242 = pneg %p72
      %p243 = pneg %p69
      %p244 = pneg %p93
      %p245 = pneg %p90
      %p246 = pneg %p114
      %p247 = pneg %p111
      %p248 = pneg %p135
      %p249 = pneg %p132
      %p250 = pneg %p163
      %p251 = pneg %p160
      %s252 = smul.u32 8, %s23
      %p253 = scmp.lt.s32.totalorder %s22, 1
      %s254 = scalar_select %p253, %s22, 1
      %p255 = scmp.lt.s32.totalorder %s252, 15
      %s256 = scalar_select %p255, %s252, 15
      %s257 = smul.addr %s256, 2
      %s258 = smul.addr %s254, 32
      %s259 = sadd.s32 %s257, %s258
      %s260 = smul.addr %s259, 4
      %s261 = scalar_lea.vmem %s5, %s260
      %p262 = pneg %p189
      %p263 = pneg %p186
      %p264 = scmp.lt.s32.totalorder %s22, 1
      %s265 = scalar_select %p264, %s22, 1
      %s266 = scalar_lea.vmem %s6, %s265
      %p267 = scmp.lt.s32.totalorder %s22, 1
      %s268 = scalar_select %p267, %s22, 1
      %s269 = smul.addr %s268, 32
      %s270 = smul.addr %s269, 8
      %s271 = scalar_lea.vmem %s0, %s270
      %s272 = smul.u32 8, %s23
      %p273 = scmp.lt.s32.totalorder %s22, 1
      %s274 = scalar_select %p273, %s22, 1
      %p275 = scmp.lt.s32.totalorder %s272, 15
      %s276 = scalar_select %p275, %s272, 15
      %s277 = smul.addr %s276, 2
      %s278 = smul.addr %s274, 32
      %s279 = sadd.s32 %s277, %s278
      %s280 = smul.addr %s279, 4
      %s281 = scalar_lea.vmem %s5, %s280
      %s282 = smul.u32 8, %s23
      %p283 = scmp.lt.s32.totalorder %s22, 1
      %s284 = scalar_select %p283, %s22, 1
      %s285 = scalar_lea.vmem %s6, %s284
      %v287 = vld [vmem:[%s1] sm:$0x3]
      %v288 = vld [vmem:[%s2] sm:$0x1]
      %vm289 = vcmask 125952
      %290 = vst.msk [vmem:[#allocation2] sm:$0xf] %vm289, 0
      %291 = vst.msk [vmem:[#allocation2 + $0x4] sm:$0xf] %vm289, 0
      %vm292 = vcmask 122880
      %293 = vst.msk [vmem:[#allocation2 + $0x8] sm:$0x1] %vm292, 0
      %294 = vst.msk [vmem:[#allocation2 + $0xc] sm:$0xf] %vm289, 0
      %295 = vst.msk [vmem:[#allocation2 + $0x10] sm:$0xf] %vm289, 0
      %296 = vst.msk [vmem:[#allocation2 + $0x14] sm:$0x1] %vm292, 0
      %297 = vst.msk [vmem:[#allocation2 + $0x18] sm:$0xf] %vm289, 0
      %298 = vst.msk [vmem:[#allocation2 + $0x1c] sm:$0xf] %vm289, 0
      %299 = vst.msk [vmem:[#allocation2 + $0x20] sm:$0x1] %vm292, 0
      %300 = vst.msk [vmem:[#allocation2 + $0x24] sm:$0xf] %vm289, 0
      %301 = vst.msk [vmem:[#allocation2 + $0x28] sm:$0xf] %vm289, 0
      %302 = vst.msk [vmem:[#allocation2 + $0x2c] sm:$0x1] %vm292, 0
      %303 = vst.msk [vmem:[#allocation2 + $0x30] sm:$0xf] %vm289, 0
      %304 = vst.msk [vmem:[#allocation2 + $0x34] sm:$0xf] %vm289, 0
      %305 = vst.msk [vmem:[#allocation2 + $0x38] sm:$0x1] %vm292, 0
      %306 = vst.msk [vmem:[#allocation2 + $0x3c] sm:$0xf] %vm289, 0
      %307 = vst.msk [vmem:[#allocation2 + $0x40] sm:$0xf] %vm289, 0
      %308 = vst.msk [vmem:[#allocation2 + $0x44] sm:$0x1] %vm292, 0
      %309 = vst.msk [vmem:[#allocation2 + $0x48] sm:$0xf] %vm289, 0
      %310 = vst.msk [vmem:[#allocation2 + $0x4c] sm:$0xf] %vm289, 0
      %311 = vst.msk [vmem:[#allocation2 + $0x50] sm:$0x1] %vm292, 0
      %312 = vst.msk [vmem:[#allocation2 + $0x54] sm:$0xf] %vm289, 0
      %313 = vst.msk [vmem:[#allocation2 + $0x58] sm:$0xf] %vm289, 0
      %314 = vst.msk [vmem:[#allocation2 + $0x5c] sm:$0x1] %vm292, 0
      %315 = vst.msk [vmem:[#allocation2 + $0x60] sm:$0xf] %vm289, 0
      %316 = vst.msk [vmem:[#allocation2 + $0x64] sm:$0xf] %vm289, 0
      %317 = vst.msk [vmem:[#allocation2 + $0x68] sm:$0x1] %vm292, 0
      %318 = vst.msk [vmem:[#allocation2 + $0x6c] sm:$0xf] %vm289, 0
      %319 = vst.msk [vmem:[#allocation2 + $0x70] sm:$0xf] %vm289, 0
      %320 = vst.msk [vmem:[#allocation2 + $0x74] sm:$0x1] %vm292, 0
      %s321 = smul.u32 %s23, 8
      %s322 = smul.u32 %s321, 16
      %s323 = scalar_lea.vmem %s271, %s322
      %v324 = vld [vmem:[%s323] sm:$0xff]
      %v325 = vld [vmem:[%s323 + $0x8] sm:$0xff]
      %v326 = vld [vmem:[%s323 + $0x10] sm:$0xff]
      %v327 = vld [vmem:[%s323 + $0x18] sm:$0xff]
      %v328 = vld [vmem:[%s323 + $0x20] sm:$0xff]
      %v329 = vld [vmem:[%s323 + $0x28] sm:$0xff]
      %v330 = vld [vmem:[%s323 + $0x30] sm:$0xff]
      %v331 = vld [vmem:[%s323 + $0x38] sm:$0xff]
      %v332 = vld [vmem:[%s323 + $0x40] sm:$0xff]
      %v333 = vld [vmem:[%s323 + $0x48] sm:$0xff]
      %v334 = vld [vmem:[%s323 + $0x50] sm:$0xff]
      %v335 = vld [vmem:[%s323 + $0x58] sm:$0xff]
      %v336 = vld [vmem:[%s323 + $0x60] sm:$0xff]
      %v337 = vld [vmem:[%s323 + $0x68] sm:$0xff]
      %v338 = vld [vmem:[%s323 + $0x70] sm:$0xff]
      %v339 = vld [vmem:[%s323 + $0x78] sm:$0xff]
      %v340 = vpack.c.bf16 %v325, %v324
      %v341 = vpack.c.bf16 %v327, %v326
      %v342 = vpack.c.bf16 %v329, %v328
      %v343 = vpack.c.bf16 %v331, %v330
      %v344 = vpack.c.bf16 %v333, %v332
      %v345 = vpack.c.bf16 %v335, %v334
      %v346 = vpack.c.bf16 %v337, %v336
      %v347 = vpack.c.bf16 %v339, %v338
      %v349 = vperm.slane %v288, 0
      %vm351 = vcmask 31744
      %v353 = vsel %vm351, %v340, 0
      %v356 = vsel %vm351, %v341, 0
      %v359 = vsel %vm351, %v342, 0
      %v362 = vsel %vm351, %v343, 0
      %v365 = vsel %vm351, %v344, 0
      %v368 = vsel %vm351, %v345, 0
      %v371 = vsel %vm351, %v346, 0
      %v374 = vsel %vm351, %v347, 0
      %vm376 = vcmask 1041408
      %v378 = vsel %vm376, %v287, 0
      %380 = vmatpush.bf16.msra.mxu0 0
      %381 = vmatpush.bf16.msra.mxu0 0
      %382 = vmatpush.bf16.msra.mxu0 0
      %383 = vmatpush.bf16.msra.mxu0 0
      %384 = vmatpush.bf16.msra.mxu0 0
      %385 = vmatpush.bf16.msra.mxu0 0
      %386 = vmatpush.bf16.msra.mxu0 0
      %387 = vmatpush.bf16.msra.mxu0 %v378
      %388 = vmatmul.bf16.gmra.mxu0 %v353
      %v389 = vpop.f32.mrf.mxu0
      %v390 = vadd.f32 %v349, %v389
      %v391 = vpop.f32.mrf.mxu0
      %v392 = vadd.f32 %v349, %v391
      %393 = vmatmul.bf16.gmra.mxu0 %v356
      %v394 = vpop.f32.mrf.mxu0
      %v395 = vadd.f32 %v349, %v394
      %v396 = vpop.f32.mrf.mxu0
      %v397 = vadd.f32 %v349, %v396
      %398 = vmatmul.bf16.gmra.mxu0 %v359
      %v399 = vpop.f32.mrf.mxu0
      %v400 = vadd.f32 %v349, %v399
      %v401 = vpop.f32.mrf.mxu0
      %v402 = vadd.f32 %v349, %v401
      %403 = vmatmul.bf16.gmra.mxu0 %v362
      %v404 = vpop.f32.mrf.mxu0
      %v405 = vadd.f32 %v349, %v404
      %v406 = vpop.f32.mrf.mxu0
      %v407 = vadd.f32 %v349, %v406
      %408 = vmatmul.bf16.gmra.mxu0 %v365
      %v409 = vpop.f32.mrf.mxu0
      %v410 = vadd.f32 %v349, %v409
      %v411 = vpop.f32.mrf.mxu0
      %v412 = vadd.f32 %v349, %v411
      %413 = vmatmul.bf16.gmra.mxu0 %v368
      %v414 = vpop.f32.mrf.mxu0
      %v415 = vadd.f32 %v349, %v414
      %v416 = vpop.f32.mrf.mxu0
      %v417 = vadd.f32 %v349, %v416
      %418 = vmatmul.bf16.gmra.mxu0 %v371
      %v419 = vpop.f32.mrf.mxu0
      %v420 = vadd.f32 %v349, %v419
      %v421 = vpop.f32.mrf.mxu0
      %v422 = vadd.f32 %v349, %v421
      %423 = vmatmul.bf16.gmra.mxu0 %v374
      %v424 = vpop.f32.mrf.mxu0
      %v425 = vadd.f32 %v349, %v424
      %v426 = vpop.f32.mrf.mxu0
      %v427 = vadd.f32 %v349, %v426
      %428 = vdwg.mxu0
      %v429 = vxor.u32 %v390, 2147483648
      %v430 = vxor.u32 %v392, 2147483648
      %v431 = vxor.u32 %v395, 2147483648
      %v432 = vxor.u32 %v397, 2147483648
      %v433 = vxor.u32 %v400, 2147483648
      %v434 = vxor.u32 %v402, 2147483648
      %v435 = vxor.u32 %v405, 2147483648
      %v436 = vxor.u32 %v407, 2147483648
      %v437 = vxor.u32 %v410, 2147483648
      %v438 = vxor.u32 %v412, 2147483648
      %v439 = vxor.u32 %v415, 2147483648
      %v440 = vxor.u32 %v417, 2147483648
      %v441 = vxor.u32 %v420, 2147483648
      %v442 = vxor.u32 %v422, 2147483648
      %v443 = vxor.u32 %v425, 2147483648
      %v444 = vxor.u32 %v427, 2147483648
      %v445 = vmul.f32 %v429, 1.442695
      %v446 = vpow.pop %v445
      %v447 = vmul.f32 %v430, 1.442695
      %v448 = vpow.pop %v447
      %v449 = vmul.f32 %v431, 1.442695
      %v450 = vpow.pop %v449
      %v451 = vmul.f32 %v432, 1.442695
      %v452 = vpow.pop %v451
      %v453 = vmul.f32 %v433, 1.442695
      %v454 = vpow.pop %v453
      %v455 = vmul.f32 %v434, 1.442695
      %v456 = vpow.pop %v455
      %v457 = vmul.f32 %v435, 1.442695
      %v458 = vpow.pop %v457
      %v459 = vmul.f32 %v436, 1.442695
      %v460 = vpow.pop %v459
      %v461 = vmul.f32 %v437, 1.442695
      %v462 = vpow.pop %v461
      %v463 = vmul.f32 %v438, 1.442695
      %v464 = vpow.pop %v463
      %v465 = vmul.f32 %v439, 1.442695
      %v466 = vpow.pop %v465
      %v467 = vmul.f32 %v440, 1.442695
      %v468 = vpow.pop %v467
      %v469 = vmul.f32 %v441, 1.442695
      %v470 = vpow.pop %v469
      %v471 = vmul.f32 %v442, 1.442695
      %v472 = vpow.pop %v471
      %v473 = vmul.f32 %v443, 1.442695
      %v474 = vpow.pop %v473
      %v475 = vmul.f32 %v444, 1.442695
      %v476 = vpow.pop %v475
      %v477 = vadd.f32 %v446, 1.0
      %v478 = vadd.f32 %v448, 1.0
      %v479 = vadd.f32 %v450, 1.0
      %v480 = vadd.f32 %v452, 1.0
      %v481 = vadd.f32 %v454, 1.0
      %v482 = vadd.f32 %v456, 1.0
      %v483 = vadd.f32 %v458, 1.0
      %v484 = vadd.f32 %v460, 1.0
      %v485 = vadd.f32 %v462, 1.0
      %v486 = vadd.f32 %v464, 1.0
      %v487 = vadd.f32 %v466, 1.0
      %v488 = vadd.f32 %v468, 1.0
      %v489 = vadd.f32 %v470, 1.0
      %v490 = vadd.f32 %v472, 1.0
      %v491 = vadd.f32 %v474, 1.0
      %v492 = vadd.f32 %v476, 1.0
      %v493 = vrcp.pop %v477
      %v494 = vmul.f32 %v477, %v493
      %v495 = vsub.f32 1.0, %v494
      %v496 = vmul.f32 %v493, %v495
      %v497 = vadd.f32 %v493, %v496
      %vm498 = vweird.f32 %v477
      %vm499 = vweird.f32 %v493
      %vm500 = vmor %vm498, %vm499
      %v501 = vsel %vm500, %v493, %v497
      %v502 = vand.u32 2147483647, %v477
      %vm503 = vcmp.eq.f32.partialorder %v502, 8.507059e+37
      %v504 = vand.u32 %v477, 2147483648
      %v505 = vor.u32 1.1754944e-38, %v504
      %v506 = vsel %vm503, %v505, %v501
      %v507 = vmul.f32 1.0, %v506
      %v508 = vrcp.pop %v478
      %v509 = vmul.f32 %v478, %v508
      %v510 = vsub.f32 1.0, %v509
      %v511 = vmul.f32 %v508, %v510
      %v512 = vadd.f32 %v508, %v511
      %vm513 = vweird.f32 %v478
      %vm514 = vweird.f32 %v508
      %vm515 = vmor %vm513, %vm514
      %v516 = vsel %vm515, %v508, %v512
      %v517 = vand.u32 2147483647, %v478
      %vm518 = vcmp.eq.f32.partialorder %v517, 8.507059e+37
      %v519 = vand.u32 %v478, 2147483648
      %v520 = vor.u32 1.1754944e-38, %v519
      %v521 = vsel %vm518, %v520, %v516
      %v522 = vmul.f32 1.0, %v521
      %v523 = vrcp.pop %v479
      %v524 = vmul.f32 %v479, %v523
      %v525 = vsub.f32 1.0, %v524
      %v526 = vmul.f32 %v523, %v525
      %v527 = vadd.f32 %v523, %v526
      %vm528 = vweird.f32 %v479
      %vm529 = vweird.f32 %v523
      %vm530 = vmor %vm528, %vm529
      %v531 = vsel %vm530, %v523, %v527
      %v532 = vand.u32 2147483647, %v479
      %vm533 = vcmp.eq.f32.partialorder %v532, 8.507059e+37
      %v534 = vand.u32 %v479, 2147483648
      %v535 = vor.u32 1.1754944e-38, %v534
      %v536 = vsel %vm533, %v535, %v531
      %v537 = vmul.f32 1.0, %v536
      %v538 = vrcp.pop %v480
      %v539 = vmul.f32 %v480, %v538
      %v540 = vsub.f32 1.0, %v539
      %v541 = vmul.f32 %v538, %v540
      %v542 = vadd.f32 %v538, %v541
      %vm543 = vweird.f32 %v480
      %vm544 = vweird.f32 %v538
      %vm545 = vmor %vm543, %vm544
      %v546 = vsel %vm545, %v538, %v542
      %v547 = vand.u32 2147483647, %v480
      %vm548 = vcmp.eq.f32.partialorder %v547, 8.507059e+37
      %v549 = vand.u32 %v480, 2147483648
      %v550 = vor.u32 1.1754944e-38, %v549
      %v551 = vsel %vm548, %v550, %v546
      %v552 = vmul.f32 1.0, %v551
      %v553 = vrcp.pop %v481
      %v554 = vmul.f32 %v481, %v553
      %v555 = vsub.f32 1.0, %v554
      %v556 = vmul.f32 %v553, %v555
      %v557 = vadd.f32 %v553, %v556
      %vm558 = vweird.f32 %v481
      %vm559 = vweird.f32 %v553
      %vm560 = vmor %vm558, %vm559
      %v561 = vsel %vm560, %v553, %v557
      %v562 = vand.u32 2147483647, %v481
      %vm563 = vcmp.eq.f32.partialorder %v562, 8.507059e+37
      %v564 = vand.u32 %v481, 2147483648
      %v565 = vor.u32 1.1754944e-38, %v564
      %v566 = vsel %vm563, %v565, %v561
      %v567 = vmul.f32 1.0, %v566
      %v568 = vrcp.pop %v482
      %v569 = vmul.f32 %v482, %v568
      %v570 = vsub.f32 1.0, %v569
      %v571 = vmul.f32 %v568, %v570
      %v572 = vadd.f32 %v568, %v571
      %vm573 = vweird.f32 %v482
      %vm574 = vweird.f32 %v568
      %vm575 = vmor %vm573, %vm574
      %v576 = vsel %vm575, %v568, %v572
      %v577 = vand.u32 2147483647, %v482
      %vm578 = vcmp.eq.f32.partialorder %v577, 8.507059e+37
      %v579 = vand.u32 %v482, 2147483648
      %v580 = vor.u32 1.1754944e-38, %v579
      %v581 = vsel %vm578, %v580, %v576
      %v582 = vmul.f32 1.0, %v581
      %v583 = vrcp.pop %v483
      %v584 = vmul.f32 %v483, %v583
      %v585 = vsub.f32 1.0, %v584
      %v586 = vmul.f32 %v583, %v585
      %v587 = vadd.f32 %v583, %v586
      %vm588 = vweird.f32 %v483
      %vm589 = vweird.f32 %v583
      %vm590 = vmor %vm588, %vm589
      %v591 = vsel %vm590, %v583, %v587
      %v592 = vand.u32 2147483647, %v483
      %vm593 = vcmp.eq.f32.partialorder %v592, 8.507059e+37
      %v594 = vand.u32 %v483, 2147483648
      %v595 = vor.u32 1.1754944e-38, %v594
      %v596 = vsel %vm593, %v595, %v591
      %v597 = vmul.f32 1.0, %v596
      %v598 = vrcp.pop %v484
      %v599 = vmul.f32 %v484, %v598
      %v600 = vsub.f32 1.0, %v599
      %v601 = vmul.f32 %v598, %v600
      %v602 = vadd.f32 %v598, %v601
      %vm603 = vweird.f32 %v484
      %vm604 = vweird.f32 %v598
      %vm605 = vmor %vm603, %vm604
      %v606 = vsel %vm605, %v598, %v602
      %v607 = vand.u32 2147483647, %v484
      %vm608 = vcmp.eq.f32.partialorder %v607, 8.507059e+37
      %v609 = vand.u32 %v484, 2147483648
      %v610 = vor.u32 1.1754944e-38, %v609
      %v611 = vsel %vm608, %v610, %v606
      %v612 = vmul.f32 1.0, %v611
      %v613 = vrcp.pop %v485
      %v614 = vmul.f32 %v485, %v613
      %v615 = vsub.f32 1.0, %v614
      %v616 = vmul.f32 %v613, %v615
      %v617 = vadd.f32 %v613, %v616
      %vm618 = vweird.f32 %v485
      %vm619 = vweird.f32 %v613
      %vm620 = vmor %vm618, %vm619
      %v621 = vsel %vm620, %v613, %v617
      %v622 = vand.u32 2147483647, %v485
      %vm623 = vcmp.eq.f32.partialorder %v622, 8.507059e+37
      %v624 = vand.u32 %v485, 2147483648
      %v625 = vor.u32 1.1754944e-38, %v624
      %v626 = vsel %vm623, %v625, %v621
      %v627 = vmul.f32 1.0, %v626
      %v628 = vrcp.pop %v486
      %v629 = vmul.f32 %v486, %v628
      %v630 = vsub.f32 1.0, %v629
      %v631 = vmul.f32 %v628, %v630
      %v632 = vadd.f32 %v628, %v631
      %vm633 = vweird.f32 %v486
      %vm634 = vweird.f32 %v628
      %vm635 = vmor %vm633, %vm634
      %v636 = vsel %vm635, %v628, %v632
      %v637 = vand.u32 2147483647, %v486
      %vm638 = vcmp.eq.f32.partialorder %v637, 8.507059e+37
      %v639 = vand.u32 %v486, 2147483648
      %v640 = vor.u32 1.1754944e-38, %v639
      %v641 = vsel %vm638, %v640, %v636
      %v642 = vmul.f32 1.0, %v641
      %v643 = vrcp.pop %v487
      %v644 = vmul.f32 %v487, %v643
      %v645 = vsub.f32 1.0, %v644
      %v646 = vmul.f32 %v643, %v645
      %v647 = vadd.f32 %v643, %v646
      %vm648 = vweird.f32 %v487
      %vm649 = vweird.f32 %v643
      %vm650 = vmor %vm648, %vm649
      %v651 = vsel %vm650, %v643, %v647
      %v652 = vand.u32 2147483647, %v487
      %vm653 = vcmp.eq.f32.partialorder %v652, 8.507059e+37
      %v654 = vand.u32 %v487, 2147483648
      %v655 = vor.u32 1.1754944e-38, %v654
      %v656 = vsel %vm653, %v655, %v651
      %v657 = vmul.f32 1.0, %v656
      %v658 = vrcp.pop %v488
      %v659 = vmul.f32 %v488, %v658
      %v660 = vsub.f32 1.0, %v659
      %v661 = vmul.f32 %v658, %v660
      %v662 = vadd.f32 %v658, %v661
      %vm663 = vweird.f32 %v488
      %vm664 = vweird.f32 %v658
      %vm665 = vmor %vm663, %vm664
      %v666 = vsel %vm665, %v658, %v662
      %v667 = vand.u32 2147483647, %v488
      %vm668 = vcmp.eq.f32.partialorder %v667, 8.507059e+37
      %v669 = vand.u32 %v488, 2147483648
      %v670 = vor.u32 1.1754944e-38, %v669
      %v671 = vsel %vm668, %v670, %v666
      %v672 = vmul.f32 1.0, %v671
      %v673 = vrcp.pop %v489
      %v674 = vmul.f32 %v489, %v673
      %v675 = vsub.f32 1.0, %v674
      %v676 = vmul.f32 %v673, %v675
      %v677 = vadd.f32 %v673, %v676
      %vm678 = vweird.f32 %v489
      %vm679 = vweird.f32 %v673
      %vm680 = vmor %vm678, %vm679
      %v681 = vsel %vm680, %v673, %v677
      %v682 = vand.u32 2147483647, %v489
      %vm683 = vcmp.eq.f32.partialorder %v682, 8.507059e+37
      %v684 = vand.u32 %v489, 2147483648
      %v685 = vor.u32 1.1754944e-38, %v684
      %v686 = vsel %vm683, %v685, %v681
      %v687 = vmul.f32 1.0, %v686
      %v688 = vrcp.pop %v490
      %v689 = vmul.f32 %v490, %v688
      %v690 = vsub.f32 1.0, %v689
      %v691 = vmul.f32 %v688, %v690
      %v692 = vadd.f32 %v688, %v691
      %vm693 = vweird.f32 %v490
      %vm694 = vweird.f32 %v688
      %vm695 = vmor %vm693, %vm694
      %v696 = vsel %vm695, %v688, %v692
      %v697 = vand.u32 2147483647, %v490
      %vm698 = vcmp.eq.f32.partialorder %v697, 8.507059e+37
      %v699 = vand.u32 %v490, 2147483648
      %v700 = vor.u32 1.1754944e-38, %v699
      %v701 = vsel %vm698, %v700, %v696
      %v702 = vmul.f32 1.0, %v701
      %v703 = vrcp.pop %v491
      %v704 = vmul.f32 %v491, %v703
      %v705 = vsub.f32 1.0, %v704
      %v706 = vmul.f32 %v703, %v705
      %v707 = vadd.f32 %v703, %v706
      %vm708 = vweird.f32 %v491
      %vm709 = vweird.f32 %v703
      %vm710 = vmor %vm708, %vm709
      %v711 = vsel %vm710, %v703, %v707
      %v712 = vand.u32 2147483647, %v491
      %vm713 = vcmp.eq.f32.partialorder %v712, 8.507059e+37
      %v714 = vand.u32 %v491, 2147483648
      %v715 = vor.u32 1.1754944e-38, %v714
      %v716 = vsel %vm713, %v715, %v711
      %v717 = vmul.f32 1.0, %v716
      %v718 = vrcp.pop %v492
      %v719 = vmul.f32 %v492, %v718
      %v720 = vsub.f32 1.0, %v719
      %v721 = vmul.f32 %v718, %v720
      %v722 = vadd.f32 %v718, %v721
      %vm723 = vweird.f32 %v492
      %vm724 = vweird.f32 %v718
      %vm725 = vmor %vm723, %vm724
      %v726 = vsel %vm725, %v718, %v722
      %v727 = vand.u32 2147483647, %v492
      %vm728 = vcmp.eq.f32.partialorder %v727, 8.507059e+37
      %v729 = vand.u32 %v492, 2147483648
      %v730 = vor.u32 1.1754944e-38, %v729
      %v731 = vsel %vm728, %v730, %v726
      %v732 = vmul.f32 1.0, %v731
      %v733 = vmul.f32 %v390, %v507
      %v734 = vmul.f32 %v392, %v522
      %v735 = vmul.f32 %v395, %v537
      %v736 = vmul.f32 %v397, %v552
      %v737 = vmul.f32 %v400, %v567
      %v738 = vmul.f32 %v402, %v582
      %v739 = vmul.f32 %v405, %v597
      %v740 = vmul.f32 %v407, %v612
      %v741 = vmul.f32 %v410, %v627
      %v742 = vmul.f32 %v412, %v642
      %v743 = vmul.f32 %v415, %v657
      %v744 = vmul.f32 %v417, %v672
      %v745 = vmul.f32 %v420, %v687
      %v746 = vmul.f32 %v422, %v702
      %v747 = vmul.f32 %v425, %v717
      %v748 = vmul.f32 %v427, %v732
      %v749 = vpack.c.bf16 %v733, %v733
      %v750 = vpack.c.bf16 %v734, %v734
      %v751 = vpack.c.bf16 %v735, %v735
      %v752 = vpack.c.bf16 %v736, %v736
      %v753 = vpack.c.bf16 %v737, %v737
      %v754 = vpack.c.bf16 %v738, %v738
      %v755 = vpack.c.bf16 %v739, %v739
      %v756 = vpack.c.bf16 %v740, %v740
      %v757 = vpack.c.bf16 %v741, %v741
      %v758 = vpack.c.bf16 %v742, %v742
      %v759 = vpack.c.bf16 %v743, %v743
      %v760 = vpack.c.bf16 %v744, %v744
      %v761 = vpack.c.bf16 %v745, %v745
      %v762 = vpack.c.bf16 %v746, %v746
      %v763 = vpack.c.bf16 %v747, %v747
      %v764 = vpack.c.bf16 %v748, %v748
      %vm765 = vsmask.f32 256
      %vm766 = vsmask.f32 4368
      %vm767 = vmor %vm765, %vm766
      %v769 = vshrl.u32 %v749, 16
      %v771 = vrot.slane %v769, 7
      %v772 = vshll.u32 %v749, 16
      %v774 = vor.u32 %v771, %v772
      %v775 = vrot.slane %v771, 4
      %v777 = vshrl.u32 %v750, 16
      %v779 = vrot.slane %v777, 7
      %v780 = vshll.u32 %v750, 16
      %v782 = vor.u32 %v779, %v780
      %v783 = vsel %vm767, %v775, %v782
      %v784 = vrot.slane %v779, 4
      %v786 = vshrl.u32 %v751, 16
      %v788 = vrot.slane %v786, 7
      %v789 = vshll.u32 %v751, 16
      %v791 = vor.u32 %v788, %v789
      %v792 = vrot.slane %v788, 4
      %v794 = vshrl.u32 %v752, 16
      %v796 = vrot.slane %v794, 7
      %v797 = vshll.u32 %v752, 16
      %v799 = vor.u32 %v796, %v797
      %v800 = vsel %vm767, %v792, %v799
      %v801 = vrot.slane %v796, 4
      %v803 = vshrl.u32 %v753, 16
      %v805 = vrot.slane %v803, 7
      %v806 = vshll.u32 %v753, 16
      %v808 = vor.u32 %v805, %v806
      %v809 = vrot.slane %v805, 4
      %v811 = vshrl.u32 %v754, 16
      %v813 = vrot.slane %v811, 7
      %v814 = vshll.u32 %v754, 16
      %v816 = vor.u32 %v813, %v814
      %v817 = vsel %vm767, %v809, %v816
      %v818 = vrot.slane %v813, 4
      %v820 = vshrl.u32 %v755, 16
      %v822 = vrot.slane %v820, 7
      %v823 = vshll.u32 %v755, 16
      %v825 = vor.u32 %v822, %v823
      %v826 = vrot.slane %v822, 4
      %v828 = vshrl.u32 %v756, 16
      %v830 = vrot.slane %v828, 7
      %v831 = vshll.u32 %v756, 16
      %v833 = vor.u32 %v830, %v831
      %v834 = vsel %vm767, %v826, %v833
      %v835 = vrot.slane %v830, 4
      %v837 = vshrl.u32 %v757, 16
      %v839 = vrot.slane %v837, 7
      %v840 = vshll.u32 %v757, 16
      %v842 = vor.u32 %v839, %v840
      %v843 = vrot.slane %v839, 4
      %v845 = vshrl.u32 %v758, 16
      %v847 = vrot.slane %v845, 7
      %v848 = vshll.u32 %v758, 16
      %v850 = vor.u32 %v847, %v848
      %v851 = vsel %vm767, %v843, %v850
      %v852 = vrot.slane %v847, 4
      %v854 = vshrl.u32 %v759, 16
      %v856 = vrot.slane %v854, 7
      %v857 = vshll.u32 %v759, 16
      %v859 = vor.u32 %v856, %v857
      %v860 = vrot.slane %v856, 4
      %v862 = vshrl.u32 %v760, 16
      %v864 = vrot.slane %v862, 7
      %v865 = vshll.u32 %v760, 16
      %v867 = vor.u32 %v864, %v865
      %v868 = vsel %vm767, %v860, %v867
      %v869 = vrot.slane %v864, 4
      %v871 = vshrl.u32 %v761, 16
      %v873 = vrot.slane %v871, 7
      %v874 = vshll.u32 %v761, 16
      %v876 = vor.u32 %v873, %v874
      %v877 = vrot.slane %v873, 4
      %v879 = vshrl.u32 %v762, 16
      %v881 = vrot.slane %v879, 7
      %v882 = vshll.u32 %v762, 16
      %v884 = vor.u32 %v881, %v882
      %v885 = vsel %vm767, %v877, %v884
      %v886 = vrot.slane %v881, 4
      %v888 = vshrl.u32 %v763, 16
      %v890 = vrot.slane %v888, 7
      %v891 = vshll.u32 %v763, 16
      %v893 = vor.u32 %v890, %v891
      %v894 = vrot.slane %v890, 4
      %v896 = vshrl.u32 %v764, 16
      %v898 = vrot.slane %v896, 7
      %v899 = vshll.u32 %v764, 16
      %v901 = vor.u32 %v898, %v899
      %v902 = vsel %vm767, %v894, %v901
      %v903 = vrot.slane %v898, 4
      %s928 = scalar_lea.vmem [#allocation2], 12
      %vm929 = vcmask 125952
      %vm930 = vsmask.f32 7938
      %vm931 = vmand %vm929, %vm930
      %v932 = vld [vmem:[%s928] sm:$0xf]
      %v933 = vsel %vm931, %v774, %v932
      %934 = vst [vmem:[%s928] sm:$0xf] %v933
      %935 = vst.msk [vmem:[%s928 + $0x4] sm:$0xf] %vm289, %v783
      %vm936 = vcmask 122880
      %vm937 = vmand %vm936, %vm765
      %v938 = vld [vmem:[%s928 + $0x8] sm:$0x1]
      %v939 = vsel %vm937, %v784, %v938
      %940 = vst [vmem:[%s928 + $0x8] sm:$0x1] %v939
      %v941 = vld [vmem:[%s928 + $0xc] sm:$0xf]
      %v942 = vsel %vm931, %v791, %v941
      %943 = vst [vmem:[%s928 + $0xc] sm:$0xf] %v942
      %944 = vst.msk [vmem:[%s928 + $0x10] sm:$0xf] %vm289, %v800
      %v945 = vld [vmem:[%s928 + $0x14] sm:$0x1]
      %v946 = vsel %vm937, %v801, %v945
      %947 = vst [vmem:[%s928 + $0x14] sm:$0x1] %v946
      %v948 = vld [vmem:[%s928 + $0x18] sm:$0xf]
      %v949 = vsel %vm931, %v808, %v948
      %950 = vst [vmem:[%s928 + $0x18] sm:$0xf] %v949
      %951 = vst.msk [vmem:[%s928 + $0x1c] sm:$0xf] %vm289, %v817
      %v952 = vld [vmem:[%s928 + $0x20] sm:$0x1]
      %v953 = vsel %vm937, %v818, %v952
      %954 = vst [vmem:[%s928 + $0x20] sm:$0x1] %v953
      %v955 = vld [vmem:[%s928 + $0x24] sm:$0xf]
      %v956 = vsel %vm931, %v825, %v955
      %957 = vst [vmem:[%s928 + $0x24] sm:$0xf] %v956
      %958 = vst.msk [vmem:[%s928 + $0x28] sm:$0xf] %vm289, %v834
      %v959 = vld [vmem:[%s928 + $0x2c] sm:$0x1]
      %v960 = vsel %vm937, %v835, %v959
      %961 = vst [vmem:[%s928 + $0x2c] sm:$0x1] %v960
      %v962 = vld [vmem:[%s928 + $0x30] sm:$0xf]
      %v963 = vsel %vm931, %v842, %v962
      %964 = vst [vmem:[%s928 + $0x30] sm:$0xf] %v963
      %965 = vst.msk [vmem:[%s928 + $0x34] sm:$0xf] %vm289, %v851
      %v966 = vld [vmem:[%s928 + $0x38] sm:$0x1]
      %v967 = vsel %vm937, %v852, %v966
      %968 = vst [vmem:[%s928 + $0x38] sm:$0x1] %v967
      %v969 = vld [vmem:[%s928 + $0x3c] sm:$0xf]
      %v970 = vsel %vm931, %v859, %v969
      %971 = vst [vmem:[%s928 + $0x3c] sm:$0xf] %v970
      %972 = vst.msk [vmem:[%s928 + $0x40] sm:$0xf] %vm289, %v868
      %v973 = vld [vmem:[%s928 + $0x44] sm:$0x1]
      %v974 = vsel %vm937, %v869, %v973
      %975 = vst [vmem:[%s928 + $0x44] sm:$0x1] %v974
      %v976 = vld [vmem:[%s928 + $0x48] sm:$0xf]
      %v977 = vsel %vm931, %v876, %v976
      %978 = vst [vmem:[%s928 + $0x48] sm:$0xf] %v977
      %979 = vst.msk [vmem:[%s928 + $0x4c] sm:$0xf] %vm289, %v885
      %v980 = vld [vmem:[%s928 + $0x50] sm:$0x1]
      %v981 = vsel %vm937, %v886, %v980
      %982 = vst [vmem:[%s928 + $0x50] sm:$0x1] %v981
      %v983 = vld [vmem:[%s928 + $0x54] sm:$0xf]
      %v984 = vsel %vm931, %v893, %v983
      %985 = vst [vmem:[%s928 + $0x54] sm:$0xf] %v984
      %986 = vst.msk [vmem:[%s928 + $0x58] sm:$0xf] %vm289, %v902
      %v987 = vld [vmem:[%s928 + $0x5c] sm:$0x1]
      %v988 = vsel %vm937, %v903, %v987
      %989 = vst [vmem:[%s928 + $0x5c] sm:$0x1] %v988
      %p990 = scmp.gt.s32.totalorder %s23, 0
      // Predicated region
      $region41: #{mbconv_pallas.2} parent=39 // pred_check
        %p991 = pneg %p990
      $region42: #{mbconv_pallas.2} parent=39 // pred_check_branch
        %993 = sbr.rel (%p991) target = $region44
      $region43: #{mbconv_pallas.2} parent=39 // pred_region
        %s994 = ssub.s32 %s321, 1
        %s995 = smul.u32 %s994, 16
        %s996 = scalar_lea.vmem %s271, %s995
        %v997 = vld [vmem:[%s996] sm:$0xff]
        %v998 = vld [vmem:[%s996 + $0x8] sm:$0xff]
        %v999 = vpack.c.bf16 %v998, %v997
        %v1001 = vsel %vm351, %v999, 0
        %1003 = vmatpush.bf16.msra.mxu0 0
        %1004 = vmatpush.bf16.msra.mxu0 0
        %1005 = vmatpush.bf16.msra.mxu0 0
        %1006 = vmatpush.bf16.msra.mxu0 0
        %1007 = vmatpush.bf16.msra.mxu0 0
        %1008 = vmatpush.bf16.msra.mxu0 0
        %1009 = vmatpush.bf16.msra.mxu0 0
        %1010 = vmatpush.bf16.msra.mxu0 %v378
        %1011 = vmatmul.bf16.gmra.mxu0 %v1001
        %v1012 = vpop.f32.mrf.mxu0
        %v1013 = vadd.f32 %v349, %v1012
        %v1014 = vpop.f32.mrf.mxu0
        %v1015 = vadd.f32 %v349, %v1014
        %1016 = vdwg.mxu0
        %v1017 = vxor.u32 %v1013, 2147483648
        %v1018 = vxor.u32 %v1015, 2147483648
        %v1019 = vmul.f32 %v1017, 1.442695
        %v1020 = vpow.pop %v1019
        %v1021 = vmul.f32 %v1018, 1.442695
        %v1022 = vpow.pop %v1021
        %v1023 = vadd.f32 %v1020, 1.0
        %v1024 = vadd.f32 %v1022, 1.0
        %v1025 = vrcp.pop %v1023
        %v1026 = vmul.f32 %v1023, %v1025
        %v1027 = vsub.f32 1.0, %v1026
        %v1028 = vmul.f32 %v1025, %v1027
        %v1029 = vadd.f32 %v1025, %v1028
        %vm1030 = vweird.f32 %v1023
        %vm1031 = vweird.f32 %v1025
        %vm1032 = vmor %vm1030, %vm1031
        %v1033 = vsel %vm1032, %v1025, %v1029
        %v1034 = vand.u32 2147483647, %v1023
        %vm1035 = vcmp.eq.f32.partialorder %v1034, 8.507059e+37
        %v1036 = vand.u32 %v1023, 2147483648
        %v1037 = vor.u32 1.1754944e-38, %v1036
        %v1038 = vsel %vm1035, %v1037, %v1033
        %v1039 = vmul.f32 1.0, %v1038
        %v1040 = vrcp.pop %v1024
        %v1041 = vmul.f32 %v1024, %v1040
        %v1042 = vsub.f32 1.0, %v1041
        %v1043 = vmul.f32 %v1040, %v1042
        %v1044 = vadd.f32 %v1040, %v1043
        %vm1045 = vweird.f32 %v1024
        %vm1046 = vweird.f32 %v1040
        %vm1047 = vmor %vm1045, %vm1046
        %v1048 = vsel %vm1047, %v1040, %v1044
        %v1049 = vand.u32 2147483647, %v1024
        %vm1050 = vcmp.eq.f32.partialorder %v1049, 8.507059e+37
        %v1051 = vand.u32 %v1024, 2147483648
        %v1052 = vor.u32 1.1754944e-38, %v1051
        %v1053 = vsel %vm1050, %v1052, %v1048
        %v1054 = vmul.f32 1.0, %v1053
        %v1055 = vmul.f32 %v1013, %v1039
        %v1056 = vmul.f32 %v1015, %v1054
        %v1057 = vpack.c.bf16 %v1055, %v1055
        %v1058 = vpack.c.bf16 %v1056, %v1056
        %v1060 = vshrl.u32 %v1057, 16
        %v1062 = vrot.slane %v1060, 7
        %v1063 = vshll.u32 %v1057, 16
        %v1065 = vor.u32 %v1062, %v1063
        %v1066 = vrot.slane %v1062, 4
        %v1068 = vshrl.u32 %v1058, 16
        %v1070 = vrot.slane %v1068, 7
        %v1071 = vshll.u32 %v1058, 16
        %v1073 = vor.u32 %v1070, %v1071
        %v1074 = vsel %vm767, %v1066, %v1073
        %v1075 = vrot.slane %v1070, 4
        %v1079 = vld [vmem:[#allocation2] sm:$0xf]
        %v1080 = vsel %vm931, %v1065, %v1079
        %1081 = vst [vmem:[#allocation2] sm:$0xf] %v1080
        %1082 = vst.msk [vmem:[#allocation2 + $0x4] sm:$0xf] %vm289, %v1074
        %v1083 = vld [vmem:[#allocation2 + $0x8] sm:$0x1]
        %v1084 = vsel %vm937, %v1075, %v1083
        %1085 = vst [vmem:[#allocation2 + $0x8] sm:$0x1] %v1084
      $region44: #{mbconv_pallas.2} parent=39 // pred_fallthru
        _
      %p1086 = scmp.lt.s32.totalorder %s23, 1
      // Predicated region
      $region45: #{mbconv_pallas.2} parent=39 // pred_check
        %p1087 = pneg %p1086
      $region46: #{mbconv_pallas.2} parent=39 // pred_check_branch
        %1089 = sbr.rel (%p1087) target = $region48
      $region47: #{mbconv_pallas.2} parent=39 // pred_region
        %s1090 = sadd.s32 %s321, 8
        %s1091 = smul.u32 %s1090, 16
        %s1092 = scalar_lea.vmem %s271, %s1091
        %v1093 = vld [vmem:[%s1092] sm:$0xff]
        %v1094 = vld [vmem:[%s1092 + $0x8] sm:$0xff]
        %v1095 = vpack.c.bf16 %v1094, %v1093
        %v1097 = vsel %vm351, %v1095, 0
        %1099 = vmatpush.bf16.msra.mxu0 0
        %1100 = vmatpush.bf16.msra.mxu0 0
        %1101 = vmatpush.bf16.msra.mxu0 0
        %1102 = vmatpush.bf16.msra.mxu0 0
        %1103 = vmatpush.bf16.msra.mxu0 0
        %1104 = vmatpush.bf16.msra.mxu0 0
        %1105 = vmatpush.bf16.msra.mxu0 0
        %1106 = vmatpush.bf16.msra.mxu0 %v378
        %1107 = vmatmul.bf16.gmra.mxu0 %v1097
        %v1108 = vpop.f32.mrf.mxu0
        %v1109 = vadd.f32 %v349, %v1108
        %v1110 = vpop.f32.mrf.mxu0
        %v1111 = vadd.f32 %v349, %v1110
        %1112 = vdwg.mxu0
        %v1113 = vxor.u32 %v1109, 2147483648
        %v1114 = vxor.u32 %v1111, 2147483648
        %v1115 = vmul.f32 %v1113, 1.442695
        %v1116 = vpow.pop %v1115
        %v1117 = vmul.f32 %v1114, 1.442695
        %v1118 = vpow.pop %v1117
        %v1119 = vadd.f32 %v1116, 1.0
        %v1120 = vadd.f32 %v1118, 1.0
        %v1121 = vrcp.pop %v1119
        %v1122 = vmul.f32 %v1119, %v1121
        %v1123 = vsub.f32 1.0, %v1122
        %v1124 = vmul.f32 %v1121, %v1123
        %v1125 = vadd.f32 %v1121, %v1124
        %vm1126 = vweird.f32 %v1119
        %vm1127 = vweird.f32 %v1121
        %vm1128 = vmor %vm1126, %vm1127
        %v1129 = vsel %vm1128, %v1121, %v1125
        %v1130 = vand.u32 2147483647, %v1119
        %vm1131 = vcmp.eq.f32.partialorder %v1130, 8.507059e+37
        %v1132 = vand.u32 %v1119, 2147483648
        %v1133 = vor.u32 1.1754944e-38, %v1132
        %v1134 = vsel %vm1131, %v1133, %v1129
        %v1135 = vmul.f32 1.0, %v1134
        %v1136 = vrcp.pop %v1120
        %v1137 = vmul.f32 %v1120, %v1136
        %v1138 = vsub.f32 1.0, %v1137
        %v1139 = vmul.f32 %v1136, %v1138
        %v1140 = vadd.f32 %v1136, %v1139
        %vm1141 = vweird.f32 %v1120
        %vm1142 = vweird.f32 %v1136
        %vm1143 = vmor %vm1141, %vm1142
        %v1144 = vsel %vm1143, %v1136, %v1140
        %v1145 = vand.u32 2147483647, %v1120
        %vm1146 = vcmp.eq.f32.partialorder %v1145, 8.507059e+37
        %v1147 = vand.u32 %v1120, 2147483648
        %v1148 = vor.u32 1.1754944e-38, %v1147
        %v1149 = vsel %vm1146, %v1148, %v1144
        %v1150 = vmul.f32 1.0, %v1149
        %v1151 = vmul.f32 %v1109, %v1135
        %v1152 = vmul.f32 %v1111, %v1150
        %v1153 = vpack.c.bf16 %v1151, %v1151
        %v1154 = vpack.c.bf16 %v1152, %v1152
        %v1156 = vshrl.u32 %v1153, 16
        %v1158 = vrot.slane %v1156, 7
        %v1159 = vshll.u32 %v1153, 16
        %v1161 = vor.u32 %v1158, %v1159
        %v1162 = vrot.slane %v1158, 4
        %v1164 = vshrl.u32 %v1154, 16
        %v1166 = vrot.slane %v1164, 7
        %v1167 = vshll.u32 %v1154, 16
        %v1169 = vor.u32 %v1166, %v1167
        %v1170 = vsel %vm767, %v1162, %v1169
        %v1171 = vrot.slane %v1166, 4
        %s1175 = scalar_lea.vmem [#allocation2], 108
        %v1176 = vld [vmem:[%s1175] sm:$0xf]
        %v1177 = vsel %vm931, %v1161, %v1176
        %1178 = vst [vmem:[%s1175] sm:$0xf] %v1177
        %1179 = vst.msk [vmem:[%s1175 + $0x4] sm:$0xf] %vm289, %v1170
        %v1180 = vld [vmem:[%s1175 + $0x8] sm:$0x1]
        %v1181 = vsel %vm937, %v1171, %v1180
        %1182 = vst [vmem:[%s1175 + $0x8] sm:$0x1] %v1181
      $region48: #{mbconv_pallas.2} parent=39 // pred_fallthru
        _
      %v1183 = vld [vmem:[%s3] sm:$0x7]
      %v1184 = vld [vmem:[%s3 + $0x4] sm:$0x7]
      %v1185 = vld [vmem:[%s3 + $0x8] sm:$0x7]
      %v1186 = vld [vmem:[#allocation2] sm:$0xf]
      %v1187 = vld [vmem:[#allocation2 + $0x4] sm:$0xf]
      %v1188 = vld [vmem:[#allocation2 + $0xc] sm:$0xf]
      %v1189 = vld [vmem:[#allocation2 + $0x10] sm:$0xf]
      %v1190 = vld [vmem:[#allocation2 + $0x18] sm:$0xf]
      %v1191 = vld [vmem:[#allocation2 + $0x1c] sm:$0xf]
      %v1192 = vld [vmem:[#allocation2 + $0x24] sm:$0xf]
      %v1193 = vld [vmem:[#allocation2 + $0x28] sm:$0xf]
      %v1194 = vld [vmem:[#allocation2 + $0x30] sm:$0xf]
      %v1195 = vld [vmem:[#allocation2 + $0x34] sm:$0xf]
      %v1196 = vld [vmem:[#allocation2 + $0x3c] sm:$0xf]
      %v1197 = vld [vmem:[#allocation2 + $0x40] sm:$0xf]
      %v1198 = vld [vmem:[#allocation2 + $0x48] sm:$0xf]
      %v1199 = vld [vmem:[#allocation2 + $0x4c] sm:$0xf]
      %v1200 = vld [vmem:[#allocation2 + $0x54] sm:$0xf]
      %v1201 = vld [vmem:[#allocation2 + $0x58] sm:$0xf]
      %v1202 = vunpack.c.l.bf16 %v1186
      %v1203 = vunpack.c.l.bf16 %v1187
      %v1204 = vunpack.c.l.bf16 %v1188
      %v1205 = vunpack.c.l.bf16 %v1189
      %v1206 = vunpack.c.l.bf16 %v1190
      %v1207 = vunpack.c.l.bf16 %v1191
      %v1208 = vunpack.c.l.bf16 %v1192
      %v1209 = vunpack.c.l.bf16 %v1193
      %v1210 = vunpack.c.l.bf16 %v1194
      %v1211 = vunpack.c.l.bf16 %v1195
      %v1212 = vunpack.c.l.bf16 %v1196
      %v1213 = vunpack.c.l.bf16 %v1197
      %v1214 = vunpack.c.l.bf16 %v1198
      %v1215 = vunpack.c.l.bf16 %v1199
      %v1216 = vunpack.c.l.bf16 %v1200
      %v1217 = vunpack.c.l.bf16 %v1201
      %v1218 = vperm.slane %v1183, 0
      %v1219 = vmul.f32 %v1202, %v1218
      %v1220 = vmul.f32 %v1203, %v1218
      %v1221 = vmul.f32 %v1204, %v1218
      %v1222 = vmul.f32 %v1205, %v1218
      %v1223 = vmul.f32 %v1206, %v1218
      %v1224 = vmul.f32 %v1207, %v1218
      %v1225 = vmul.f32 %v1208, %v1218
      %v1226 = vmul.f32 %v1209, %v1218
      %v1227 = vmul.f32 %v1210, %v1218
      %v1228 = vmul.f32 %v1211, %v1218
      %v1229 = vmul.f32 %v1212, %v1218
      %v1230 = vmul.f32 %v1213, %v1218
      %v1231 = vmul.f32 %v1214, %v1218
      %v1232 = vmul.f32 %v1215, %v1218
      %v1233 = vmul.f32 %v1216, %v1218
      %v1234 = vmul.f32 %v1217, %v1218
      %v1235 = vld [vmem:[#allocation2 + $0x8] sm:$0x1]
      %v1236 = vld [vmem:[#allocation2 + $0x14] sm:$0x1]
      %v1237 = vld [vmem:[#allocation2 + $0x20] sm:$0x1]
      %v1238 = vld [vmem:[#allocation2 + $0x2c] sm:$0x1]
      %v1239 = vld [vmem:[#allocation2 + $0x38] sm:$0x1]
      %v1240 = vld [vmem:[#allocation2 + $0x44] sm:$0x1]
      %v1241 = vld [vmem:[#allocation2 + $0x50] sm:$0x1]
      %v1242 = vld [vmem:[#allocation2 + $0x5c] sm:$0x1]
      %v1243 = vunpack.c.l.bf16 %v1235
      %v1244 = vunpack.c.l.bf16 %v1236
      %v1245 = vunpack.c.l.bf16 %v1237
      %v1246 = vunpack.c.l.bf16 %v1238
      %v1247 = vunpack.c.l.bf16 %v1239
      %v1248 = vunpack.c.l.bf16 %v1240
      %v1249 = vunpack.c.l.bf16 %v1241
      %v1250 = vunpack.c.l.bf16 %v1242
      %v1251 = vperm.slane %v1183, 1
      %v1252 = vmul.f32 %v1202, %v1251
      %v1253 = vmul.f32 %v1203, %v1251
      %v1254 = vmul.f32 %v1243, %v1251
      %v1255 = vmul.f32 %v1204, %v1251
      %v1256 = vmul.f32 %v1205, %v1251
      %v1257 = vmul.f32 %v1244, %v1251
      %v1258 = vmul.f32 %v1206, %v1251
      %v1259 = vmul.f32 %v1207, %v1251
      %v1260 = vmul.f32 %v1245, %v1251
      %v1261 = vmul.f32 %v1208, %v1251
      %v1262 = vmul.f32 %v1209, %v1251
      %v1263 = vmul.f32 %v1246, %v1251
      %v1264 = vmul.f32 %v1210, %v1251
      %v1265 = vmul.f32 %v1211, %v1251
      %v1266 = vmul.f32 %v1247, %v1251
      %v1267 = vmul.f32 %v1212, %v1251
      %v1268 = vmul.f32 %v1213, %v1251
      %v1269 = vmul.f32 %v1248, %v1251
      %v1270 = vmul.f32 %v1214, %v1251
      %v1271 = vmul.f32 %v1215, %v1251
      %v1272 = vmul.f32 %v1249, %v1251
      %v1273 = vmul.f32 %v1216, %v1251
      %v1274 = vmul.f32 %v1217, %v1251
      %v1275 = vmul.f32 %v1250, %v1251
      %vm1300 = vcmask 1046528
      %v1301 = vrot.slane %v1252, 1
      %v1302 = vrot.slane %v1253, 1
      %v1303 = vsel %vm1300, %v1301, %v1302
      %v1304 = vrot.slane %v1254, 1
      %v1305 = vsel %vm1300, %v1302, %v1304
      %v1306 = vrot.slane %v1255, 1
      %v1307 = vrot.slane %v1256, 1
      %v1308 = vsel %vm1300, %v1306, %v1307
      %v1309 = vrot.slane %v1257, 1
      %v1310 = vsel %vm1300, %v1307, %v1309
      %v1311 = vrot.slane %v1258, 1
      %v1312 = vrot.slane %v1259, 1
      %v1313 = vsel %vm1300, %v1311, %v1312
      %v1314 = vrot.slane %v1260, 1
      %v1315 = vsel %vm1300, %v1312, %v1314
      %v1316 = vrot.slane %v1261, 1
      %v1317 = vrot.slane %v1262, 1
      %v1318 = vsel %vm1300, %v1316, %v1317
      %v1319 = vrot.slane %v1263, 1
      %v1320 = vsel %vm1300, %v1317, %v1319
      %v1321 = vrot.slane %v1264, 1
      %v1322 = vrot.slane %v1265, 1
      %v1323 = vsel %vm1300, %v1321, %v1322
      %v1324 = vrot.slane %v1266, 1
      %v1325 = vsel %vm1300, %v1322, %v1324
      %v1326 = vrot.slane %v1267, 1
      %v1327 = vrot.slane %v1268, 1
      %v1328 = vsel %vm1300, %v1326, %v1327
      %v1329 = vrot.slane %v1269, 1
      %v1330 = vsel %vm1300, %v1327, %v1329
      %v1331 = vrot.slane %v1270, 1
      %v1332 = vrot.slane %v1271, 1
      %v1333 = vsel %vm1300, %v1331, %v1332
      %v1334 = vrot.slane %v1272, 1
      %v1335 = vsel %vm1300, %v1332, %v1334
      %v1336 = vrot.slane %v1273, 1
      %v1337 = vrot.slane %v1274, 1
      %v1338 = vsel %vm1300, %v1336, %v1337
      %v1339 = vrot.slane %v1275, 1
      %v1340 = vsel %vm1300, %v1337, %v1339
      %v1357 = vadd.f32 %v1219, %v1303
      %v1358 = vadd.f32 %v1220, %v1305
      %v1359 = vadd.f32 %v1221, %v1308
      %v1360 = vadd.f32 %v1222, %v1310
      %v1361 = vadd.f32 %v1223, %v1313
      %v1362 = vadd.f32 %v1224, %v1315
      %v1363 = vadd.f32 %v1225, %v1318
      %v1364 = vadd.f32 %v1226, %v1320
      %v1365 = vadd.f32 %v1227, %v1323
      %v1366 = vadd.f32 %v1228, %v1325
      %v1367 = vadd.f32 %v1229, %v1328
      %v1368 = vadd.f32 %v1230, %v1330
      %v1369 = vadd.f32 %v1231, %v1333
      %v1370 = vadd.f32 %v1232, %v1335
      %v1371 = vadd.f32 %v1233, %v1338
      %v1372 = vadd.f32 %v1234, %v1340
      %v1373 = vld [vmem:[#allocation2] sm:$0xe]
      %v1374 = vld [vmem:[#allocation2 + $0xc] sm:$0xe]
      %v1375 = vld [vmem:[#allocation2 + $0x18] sm:$0xe]
      %v1376 = vld [vmem:[#allocation2 + $0x24] sm:$0xe]
      %v1377 = vld [vmem:[#allocation2 + $0x30] sm:$0xe]
      %v1378 = vld [vmem:[#allocation2 + $0x3c] sm:$0xe]
      %v1379 = vld [vmem:[#allocation2 + $0x48] sm:$0xe]
      %v1380 = vld [vmem:[#allocation2 + $0x54] sm:$0xe]
      %v1381 = vunpack.c.l.bf16 %v1373
      %v1382 = vunpack.c.l.bf16 %v1374
      %v1383 = vunpack.c.l.bf16 %v1375
      %v1384 = vunpack.c.l.bf16 %v1376
      %v1385 = vunpack.c.l.bf16 %v1377
      %v1386 = vunpack.c.l.bf16 %v1378
      %v1387 = vunpack.c.l.bf16 %v1379
      %v1388 = vunpack.c.l.bf16 %v1380
      %v1389 = vperm.slane %v1183, 2
      %v1390 = vmul.f32 %v1381, %v1389
      %v1391 = vmul.f32 %v1203, %v1389
      %v1392 = vmul.f32 %v1243, %v1389
      %v1393 = vmul.f32 %v1382, %v1389
      %v1394 = vmul.f32 %v1205, %v1389
      %v1395 = vmul.f32 %v1244, %v1389
      %v1396 = vmul.f32 %v1383, %v1389
      %v1397 = vmul.f32 %v1207, %v1389
      %v1398 = vmul.f32 %v1245, %v1389
      %v1399 = vmul.f32 %v1384, %v1389
      %v1400 = vmul.f32 %v1209, %v1389
      %v1401 = vmul.f32 %v1246, %v1389
      %v1402 = vmul.f32 %v1385, %v1389
      %v1403 = vmul.f32 %v1211, %v1389
      %v1404 = vmul.f32 %v1247, %v1389
      %v1405 = vmul.f32 %v1386, %v1389
      %v1406 = vmul.f32 %v1213, %v1389
      %v1407 = vmul.f32 %v1248, %v1389
      %v1408 = vmul.f32 %v1387, %v1389
      %v1409 = vmul.f32 %v1215, %v1389
      %v1410 = vmul.f32 %v1249, %v1389
      %v1411 = vmul.f32 %v1388, %v1389
      %v1412 = vmul.f32 %v1217, %v1389
      %v1413 = vmul.f32 %v1250, %v1389
      %vm1438 = vcmask 1045504
      %v1439 = vrot.slane %v1390, 2
      %v1440 = vrot.slane %v1391, 2
      %v1441 = vsel %vm1438, %v1439, %v1440
      %v1442 = vrot.slane %v1392, 2
      %v1443 = vsel %vm1438, %v1440, %v1442
      %v1444 = vrot.slane %v1393, 2
      %v1445 = vrot.slane %v1394, 2
      %v1446 = vsel %vm1438, %v1444, %v1445
      %v1447 = vrot.slane %v1395, 2
      %v1448 = vsel %vm1438, %v1445, %v1447
      %v1449 = vrot.slane %v1396, 2
      %v1450 = vrot.slane %v1397, 2
      %v1451 = vsel %vm1438, %v1449, %v1450
      %v1452 = vrot.slane %v1398, 2
      %v1453 = vsel %vm1438, %v1450, %v1452
      %v1454 = vrot.slane %v1399, 2
      %v1455 = vrot.slane %v1400, 2
      %v1456 = vsel %vm1438, %v1454, %v1455
      %v1457 = vrot.slane %v1401, 2
      %v1458 = vsel %vm1438, %v1455, %v1457
      %v1459 = vrot.slane %v1402, 2
      %v1460 = vrot.slane %v1403, 2
      %v1461 = vsel %vm1438, %v1459, %v1460
      %v1462 = vrot.slane %v1404, 2
      %v1463 = vsel %vm1438, %v1460, %v1462
      %v1464 = vrot.slane %v1405, 2
      %v1465 = vrot.slane %v1406, 2
      %v1466 = vsel %vm1438, %v1464, %v1465
      %v1467 = vrot.slane %v1407, 2
      %v1468 = vsel %vm1438, %v1465, %v1467
      %v1469 = vrot.slane %v1408, 2
      %v1470 = vrot.slane %v1409, 2
      %v1471 = vsel %vm1438, %v1469, %v1470
      %v1472 = vrot.slane %v1410, 2
      %v1473 = vsel %vm1438, %v1470, %v1472
      %v1474 = vrot.slane %v1411, 2
      %v1475 = vrot.slane %v1412, 2
      %v1476 = vsel %vm1438, %v1474, %v1475
      %v1477 = vrot.slane %v1413, 2
      %v1478 = vsel %vm1438, %v1475, %v1477
      %v1495 = vadd.f32 %v1357, %v1441
      %v1496 = vadd.f32 %v1358, %v1443
      %v1497 = vadd.f32 %v1359, %v1446
      %v1498 = vadd.f32 %v1360, %v1448
      %v1499 = vadd.f32 %v1361, %v1451
      %v1500 = vadd.f32 %v1362, %v1453
      %v1501 = vadd.f32 %v1363, %v1456
      %v1502 = vadd.f32 %v1364, %v1458
      %v1503 = vadd.f32 %v1365, %v1461
      %v1504 = vadd.f32 %v1366, %v1463
      %v1505 = vadd.f32 %v1367, %v1466
      %v1506 = vadd.f32 %v1368, %v1468
      %v1507 = vadd.f32 %v1369, %v1471
      %v1508 = vadd.f32 %v1370, %v1473
      %v1509 = vadd.f32 %v1371, %v1476
      %v1510 = vadd.f32 %v1372, %v1478
      %v1511 = vld [vmem:[%s928] sm:$0xf]
      %v1512 = vld [vmem:[%s928 + $0x4] sm:$0xf]
      %v1513 = vld [vmem:[%s928 + $0xc] sm:$0xf]
      %v1514 = vld [vmem:[%s928 + $0x10] sm:$0xf]
      %v1515 = vld [vmem:[%s928 + $0x18] sm:$0xf]
      %v1516 = vld [vmem:[%s928 + $0x1c] sm:$0xf]
      %v1517 = vld [vmem:[%s928 + $0x24] sm:$0xf]
      %v1518 = vld [vmem:[%s928 + $0x28] sm:$0xf]
      %v1519 = vld [vmem:[%s928 + $0x30] sm:$0xf]
      %v1520 = vld [vmem:[%s928 + $0x34] sm:$0xf]
      %v1521 = vld [vmem:[%s928 + $0x3c] sm:$0xf]
      %v1522 = vld [vmem:[%s928 + $0x40] sm:$0xf]
      %v1523 = vld [vmem:[%s928 + $0x48] sm:$0xf]
      %v1524 = vld [vmem:[%s928 + $0x4c] sm:$0xf]
      %v1525 = vld [vmem:[%s928 + $0x54] sm:$0xf]
      %v1526 = vld [vmem:[%s928 + $0x58] sm:$0xf]
      %v1527 = vunpack.c.l.bf16 %v1511
      %v1528 = vunpack.c.l.bf16 %v1512
      %v1529 = vunpack.c.l.bf16 %v1513
      %v1530 = vunpack.c.l.bf16 %v1514
      %v1531 = vunpack.c.l.bf16 %v1515
      %v1532 = vunpack.c.l.bf16 %v1516
      %v1533 = vunpack.c.l.bf16 %v1517
      %v1534 = vunpack.c.l.bf16 %v1518
      %v1535 = vunpack.c.l.bf16 %v1519
      %v1536 = vunpack.c.l.bf16 %v1520
      %v1537 = vunpack.c.l.bf16 %v1521
      %v1538 = vunpack.c.l.bf16 %v1522
      %v1539 = vunpack.c.l.bf16 %v1523
      %v1540 = vunpack.c.l.bf16 %v1524
      %v1541 = vunpack.c.l.bf16 %v1525
      %v1542 = vunpack.c.l.bf16 %v1526
      %v1543 = vperm.slane %v1184, 0
      %v1544 = vmul.f32 %v1527, %v1543
      %v1545 = vmul.f32 %v1528, %v1543
      %v1546 = vmul.f32 %v1529, %v1543
      %v1547 = vmul.f32 %v1530, %v1543
      %v1548 = vmul.f32 %v1531, %v1543
      %v1549 = vmul.f32 %v1532, %v1543
      %v1550 = vmul.f32 %v1533, %v1543
      %v1551 = vmul.f32 %v1534, %v1543
      %v1552 = vmul.f32 %v1535, %v1543
      %v1553 = vmul.f32 %v1536, %v1543
      %v1554 = vmul.f32 %v1537, %v1543
      %v1555 = vmul.f32 %v1538, %v1543
      %v1556 = vmul.f32 %v1539, %v1543
      %v1557 = vmul.f32 %v1540, %v1543
      %v1558 = vmul.f32 %v1541, %v1543
      %v1559 = vmul.f32 %v1542, %v1543
      %v1560 = vadd.f32 %v1495, %v1544
      %v1561 = vadd.f32 %v1496, %v1545
      %v1562 = vadd.f32 %v1497, %v1546
      %v1563 = vadd.f32 %v1498, %v1547
      %v1564 = vadd.f32 %v1499, %v1548
      %v1565 = vadd.f32 %v1500, %v1549
      %v1566 = vadd.f32 %v1501, %v1550
      %v1567 = vadd.f32 %v1502, %v1551
      %v1568 = vadd.f32 %v1503, %v1552
      %v1569 = vadd.f32 %v1504, %v1553
      %v1570 = vadd.f32 %v1505, %v1554
      %v1571 = vadd.f32 %v1506, %v1555
      %v1572 = vadd.f32 %v1507, %v1556
      %v1573 = vadd.f32 %v1508, %v1557
      %v1574 = vadd.f32 %v1509, %v1558
      %v1575 = vadd.f32 %v1510, %v1559
      %v1576 = vld [vmem:[%s928 + $0x8] sm:$0x1]
      %v1577 = vld [vmem:[%s928 + $0x14] sm:$0x1]
      %v1578 = vld [vmem:[%s928 + $0x20] sm:$0x1]
      %v1579 = vld [vmem:[%s928 + $0x2c] sm:$0x1]
      %v1580 = vld [vmem:[%s928 + $0x38] sm:$0x1]
      %v1581 = vld [vmem:[%s928 + $0x44] sm:$0x1]
      %v1582 = vld [vmem:[%s928 + $0x50] sm:$0x1]
      %v1583 = vld [vmem:[%s928 + $0x5c] sm:$0x1]
      %v1584 = vunpack.c.l.bf16 %v1576
      %v1585 = vunpack.c.l.bf16 %v1577
      %v1586 = vunpack.c.l.bf16 %v1578
      %v1587 = vunpack.c.l.bf16 %v1579
      %v1588 = vunpack.c.l.bf16 %v1580
      %v1589 = vunpack.c.l.bf16 %v1581
      %v1590 = vunpack.c.l.bf16 %v1582
      %v1591 = vunpack.c.l.bf16 %v1583
      %v1592 = vperm.slane %v1184, 1
      %v1593 = vmul.f32 %v1527, %v1592
      %v1594 = vmul.f32 %v1528, %v1592
      %v1595 = vmul.f32 %v1584, %v1592
      %v1596 = vmul.f32 %v1529, %v1592
      %v1597 = vmul.f32 %v1530, %v1592
      %v1598 = vmul.f32 %v1585, %v1592
      %v1599 = vmul.f32 %v1531, %v1592
      %v1600 = vmul.f32 %v1532, %v1592
      %v1601 = vmul.f32 %v1586, %v1592
      %v1602 = vmul.f32 %v1533, %v1592
      %v1603 = vmul.f32 %v1534, %v1592
      %v1604 = vmul.f32 %v1587, %v1592
      %v1605 = vmul.f32 %v1535, %v1592
      %v1606 = vmul.f32 %v1536, %v1592
      %v1607 = vmul.f32 %v1588, %v1592
      %v1608 = vmul.f32 %v1537, %v1592
      %v1609 = vmul.f32 %v1538, %v1592
      %v1610 = vmul.f32 %v1589, %v1592
      %v1611 = vmul.f32 %v1539, %v1592
      %v1612 = vmul.f32 %v1540, %v1592
      %v1613 = vmul.f32 %v1590, %v1592
      %v1614 = vmul.f32 %v1541, %v1592
      %v1615 = vmul.f32 %v1542, %v1592
      %v1616 = vmul.f32 %v1591, %v1592
      %v1641 = vrot.slane %v1593, 1
      %v1642 = vrot.slane %v1594, 1
      %v1643 = vsel %vm1300, %v1641, %v1642
      %v1644 = vrot.slane %v1595, 1
      %v1645 = vsel %vm1300, %v1642, %v1644
      %v1646 = vrot.slane %v1596, 1
      %v1647 = vrot.slane %v1597, 1
      %v1648 = vsel %vm1300, %v1646, %v1647
      %v1649 = vrot.slane %v1598, 1
      %v1650 = vsel %vm1300, %v1647, %v1649
      %v1651 = vrot.slane %v1599, 1
      %v1652 = vrot.slane %v1600, 1
      %v1653 = vsel %vm1300, %v1651, %v1652
      %v1654 = vrot.slane %v1601, 1
      %v1655 = vsel %vm1300, %v1652, %v1654
      %v1656 = vrot.slane %v1602, 1
      %v1657 = vrot.slane %v1603, 1
      %v1658 = vsel %vm1300, %v1656, %v1657
      %v1659 = vrot.slane %v1604, 1
      %v1660 = vsel %vm1300, %v1657, %v1659
      %v1661 = vrot.slane %v1605, 1
      %v1662 = vrot.slane %v1606, 1
      %v1663 = vsel %vm1300, %v1661, %v1662
      %v1664 = vrot.slane %v1607, 1
      %v1665 = vsel %vm1300, %v1662, %v1664
      %v1666 = vrot.slane %v1608, 1
      %v1667 = vrot.slane %v1609, 1
      %v1668 = vsel %vm1300, %v1666, %v1667
      %v1669 = vrot.slane %v1610, 1
      %v1670 = vsel %vm1300, %v1667, %v1669
      %v1671 = vrot.slane %v1611, 1
      %v1672 = vrot.slane %v1612, 1
      %v1673 = vsel %vm1300, %v1671, %v1672
      %v1674 = vrot.slane %v1613, 1
      %v1675 = vsel %vm1300, %v1672, %v1674
      %v1676 = vrot.slane %v1614, 1
      %v1677 = vrot.slane %v1615, 1
      %v1678 = vsel %vm1300, %v1676, %v1677
      %v1679 = vrot.slane %v1616, 1
      %v1680 = vsel %vm1300, %v1677, %v1679
      %v1697 = vadd.f32 %v1560, %v1643
      %v1698 = vadd.f32 %v1561, %v1645
      %v1699 = vadd.f32 %v1562, %v1648
      %v1700 = vadd.f32 %v1563, %v1650
      %v1701 = vadd.f32 %v1564, %v1653
      %v1702 = vadd.f32 %v1565, %v1655
      %v1703 = vadd.f32 %v1566, %v1658
      %v1704 = vadd.f32 %v1567, %v1660
      %v1705 = vadd.f32 %v1568, %v1663
      %v1706 = vadd.f32 %v1569, %v1665
      %v1707 = vadd.f32 %v1570, %v1668
      %v1708 = vadd.f32 %v1571, %v1670
      %v1709 = vadd.f32 %v1572, %v1673
      %v1710 = vadd.f32 %v1573, %v1675
      %v1711 = vadd.f32 %v1574, %v1678
      %v1712 = vadd.f32 %v1575, %v1680
      %v1713 = vld [vmem:[%s928] sm:$0xe]
      %v1714 = vld [vmem:[%s928 + $0xc] sm:$0xe]
      %v1715 = vld [vmem:[%s928 + $0x18] sm:$0xe]
      %v1716 = vld [vmem:[%s928 + $0x24] sm:$0xe]
      %v1717 = vld [vmem:[%s928 + $0x30] sm:$0xe]
      %v1718 = vld [vmem:[%s928 + $0x3c] sm:$0xe]
      %v1719 = vld [vmem:[%s928 + $0x48] sm:$0xe]
      %v1720 = vld [vmem:[%s928 + $0x54] sm:$0xe]
      %v1721 = vunpack.c.l.bf16 %v1713
      %v1722 = vunpack.c.l.bf16 %v1714
      %v1723 = vunpack.c.l.bf16 %v1715
      %v1724 = vunpack.c.l.bf16 %v1716
      %v1725 = vunpack.c.l.bf16 %v1717
      %v1726 = vunpack.c.l.bf16 %v1718
      %v1727 = vunpack.c.l.bf16 %v1719
      %v1728 = vunpack.c.l.bf16 %v1720
      %v1729 = vperm.slane %v1184, 2
      %v1730 = vmul.f32 %v1721, %v1729
      %v1731 = vmul.f32 %v1528, %v1729
      %v1732 = vmul.f32 %v1584, %v1729
      %v1733 = vmul.f32 %v1722, %v1729
      %v1734 = vmul.f32 %v1530, %v1729
      %v1735 = vmul.f32 %v1585, %v1729
      %v1736 = vmul.f32 %v1723, %v1729
      %v1737 = vmul.f32 %v1532, %v1729
      %v1738 = vmul.f32 %v1586, %v1729
      %v1739 = vmul.f32 %v1724, %v1729
      %v1740 = vmul.f32 %v1534, %v1729
      %v1741 = vmul.f32 %v1587, %v1729
      %v1742 = vmul.f32 %v1725, %v1729
      %v1743 = vmul.f32 %v1536, %v1729
      %v1744 = vmul.f32 %v1588, %v1729
      %v1745 = vmul.f32 %v1726, %v1729
      %v1746 = vmul.f32 %v1538, %v1729
      %v1747 = vmul.f32 %v1589, %v1729
      %v1748 = vmul.f32 %v1727, %v1729
      %v1749 = vmul.f32 %v1540, %v1729
      %v1750 = vmul.f32 %v1590, %v1729
      %v1751 = vmul.f32 %v1728, %v1729
      %v1752 = vmul.f32 %v1542, %v1729
      %v1753 = vmul.f32 %v1591, %v1729
      %v1778 = vrot.slane %v1730, 2
      %v1779 = vrot.slane %v1731, 2
      %v1780 = vsel %vm1438, %v1778, %v1779
      %v1781 = vrot.slane %v1732, 2
      %v1782 = vsel %vm1438, %v1779, %v1781
      %v1783 = vrot.slane %v1733, 2
      %v1784 = vrot.slane %v1734, 2
      %v1785 = vsel %vm1438, %v1783, %v1784
      %v1786 = vrot.slane %v1735, 2
      %v1787 = vsel %vm1438, %v1784, %v1786
      %v1788 = vrot.slane %v1736, 2
      %v1789 = vrot.slane %v1737, 2
      %v1790 = vsel %vm1438, %v1788, %v1789
      %v1791 = vrot.slane %v1738, 2
      %v1792 = vsel %vm1438, %v1789, %v1791
      %v1793 = vrot.slane %v1739, 2
      %v1794 = vrot.slane %v1740, 2
      %v1795 = vsel %vm1438, %v1793, %v1794
      %v1796 = vrot.slane %v1741, 2
      %v1797 = vsel %vm1438, %v1794, %v1796
      %v1798 = vrot.slane %v1742, 2
      %v1799 = vrot.slane %v1743, 2
      %v1800 = vsel %vm1438, %v1798, %v1799
      %v1801 = vrot.slane %v1744, 2
      %v1802 = vsel %vm1438, %v1799, %v1801
      %v1803 = vrot.slane %v1745, 2
      %v1804 = vrot.slane %v1746, 2
      %v1805 = vsel %vm1438, %v1803, %v1804
      %v1806 = vrot.slane %v1747, 2
      %v1807 = vsel %vm1438, %v1804, %v1806
      %v1808 = vrot.slane %v1748, 2
      %v1809 = vrot.slane %v1749, 2
      %v1810 = vsel %vm1438, %v1808, %v1809
      %v1811 = vrot.slane %v1750, 2
      %v1812 = vsel %vm1438, %v1809, %v1811
      %v1813 = vrot.slane %v1751, 2
      %v1814 = vrot.slane %v1752, 2
      %v1815 = vsel %vm1438, %v1813, %v1814
      %v1816 = vrot.slane %v1753, 2
      %v1817 = vsel %vm1438, %v1814, %v1816
      %v1834 = vadd.f32 %v1697, %v1780
      %v1835 = vadd.f32 %v1698, %v1782
      %v1836 = vadd.f32 %v1699, %v1785
      %v1837 = vadd.f32 %v1700, %v1787
      %v1838 = vadd.f32 %v1701, %v1790
      %v1839 = vadd.f32 %v1702, %v1792
      %v1840 = vadd.f32 %v1703, %v1795
      %v1841 = vadd.f32 %v1704, %v1797
      %v1842 = vadd.f32 %v1705, %v1800
      %v1843 = vadd.f32 %v1706, %v1802
      %v1844 = vadd.f32 %v1707, %v1805
      %v1845 = vadd.f32 %v1708, %v1807
      %v1846 = vadd.f32 %v1709, %v1810
      %v1847 = vadd.f32 %v1710, %v1812
      %v1848 = vadd.f32 %v1711, %v1815
      %v1849 = vadd.f32 %v1712, %v1817
      %s1850 = scalar_lea.vmem [#allocation2], 24
      %v1851 = vld [vmem:[%s1850] sm:$0xf]
      %v1852 = vld [vmem:[%s1850 + $0x4] sm:$0xf]
      %v1853 = vld [vmem:[%s1850 + $0xc] sm:$0xf]
      %v1854 = vld [vmem:[%s1850 + $0x10] sm:$0xf]
      %v1855 = vld [vmem:[%s1850 + $0x18] sm:$0xf]
      %v1856 = vld [vmem:[%s1850 + $0x1c] sm:$0xf]
      %v1857 = vld [vmem:[%s1850 + $0x24] sm:$0xf]
      %v1858 = vld [vmem:[%s1850 + $0x28] sm:$0xf]
      %v1859 = vld [vmem:[%s1850 + $0x30] sm:$0xf]
      %v1860 = vld [vmem:[%s1850 + $0x34] sm:$0xf]
      %v1861 = vld [vmem:[%s1850 + $0x3c] sm:$0xf]
      %v1862 = vld [vmem:[%s1850 + $0x40] sm:$0xf]
      %v1863 = vld [vmem:[%s1850 + $0x48] sm:$0xf]
      %v1864 = vld [vmem:[%s1850 + $0x4c] sm:$0xf]
      %v1865 = vld [vmem:[%s1850 + $0x54] sm:$0xf]
      %v1866 = vld [vmem:[%s1850 + $0x58] sm:$0xf]
      %v1867 = vunpack.c.l.bf16 %v1851
      %v1868 = vunpack.c.l.bf16 %v1852
      %v1869 = vunpack.c.l.bf16 %v1853
      %v1870 = vunpack.c.l.bf16 %v1854
      %v1871 = vunpack.c.l.bf16 %v1855
      %v1872 = vunpack.c.l.bf16 %v1856
      %v1873 = vunpack.c.l.bf16 %v1857
      %v1874 = vunpack.c.l.bf16 %v1858
      %v1875 = vunpack.c.l.bf16 %v1859
      %v1876 = vunpack.c.l.bf16 %v1860
      %v1877 = vunpack.c.l.bf16 %v1861
      %v1878 = vunpack.c.l.bf16 %v1862
      %v1879 = vunpack.c.l.bf16 %v1863
      %v1880 = vunpack.c.l.bf16 %v1864
      %v1881 = vunpack.c.l.bf16 %v1865
      %v1882 = vunpack.c.l.bf16 %v1866
      %v1883 = vperm.slane %v1185, 0
      %v1884 = vmul.f32 %v1867, %v1883
      %v1885 = vmul.f32 %v1868, %v1883
      %v1886 = vmul.f32 %v1869, %v1883
      %v1887 = vmul.f32 %v1870, %v1883
      %v1888 = vmul.f32 %v1871, %v1883
      %v1889 = vmul.f32 %v1872, %v1883
      %v1890 = vmul.f32 %v1873, %v1883
      %v1891 = vmul.f32 %v1874, %v1883
      %v1892 = vmul.f32 %v1875, %v1883
      %v1893 = vmul.f32 %v1876, %v1883
      %v1894 = vmul.f32 %v1877, %v1883
      %v1895 = vmul.f32 %v1878, %v1883
      %v1896 = vmul.f32 %v1879, %v1883
      %v1897 = vmul.f32 %v1880, %v1883
      %v1898 = vmul.f32 %v1881, %v1883
      %v1899 = vmul.f32 %v1882, %v1883
      %v1900 = vadd.f32 %v1834, %v1884
      %v1901 = vadd.f32 %v1835, %v1885
      %v1902 = vadd.f32 %v1836, %v1886
      %v1903 = vadd.f32 %v1837, %v1887
      %v1904 = vadd.f32 %v1838, %v1888
      %v1905 = vadd.f32 %v1839, %v1889
      %v1906 = vadd.f32 %v1840, %v1890
      %v1907 = vadd.f32 %v1841, %v1891
      %v1908 = vadd.f32 %v1842, %v1892
      %v1909 = vadd.f32 %v1843, %v1893
      %v1910 = vadd.f32 %v1844, %v1894
      %v1911 = vadd.f32 %v1845, %v1895
      %v1912 = vadd.f32 %v1846, %v1896
      %v1913 = vadd.f32 %v1847, %v1897
      %v1914 = vadd.f32 %v1848, %v1898
      %v1915 = vadd.f32 %v1849, %v1899
      %v1916 = vld [vmem:[%s1850 + $0x8] sm:$0x1]
      %v1917 = vld [vmem:[%s1850 + $0x14] sm:$0x1]
      %v1918 = vld [vmem:[%s1850 + $0x20] sm:$0x1]
      %v1919 = vld [vmem:[%s1850 + $0x2c] sm:$0x1]
      %v1920 = vld [vmem:[%s1850 + $0x38] sm:$0x1]
      %v1921 = vld [vmem:[%s1850 + $0x44] sm:$0x1]
      %v1922 = vld [vmem:[%s1850 + $0x50] sm:$0x1]
      %v1923 = vld [vmem:[%s1850 + $0x5c] sm:$0x1]
      %v1924 = vunpack.c.l.bf16 %v1916
      %v1925 = vunpack.c.l.bf16 %v1917
      %v1926 = vunpack.c.l.bf16 %v1918
      %v1927 = vunpack.c.l.bf16 %v1919
      %v1928 = vunpack.c.l.bf16 %v1920
      %v1929 = vunpack.c.l.bf16 %v1921
      %v1930 = vunpack.c.l.bf16 %v1922
      %v1931 = vunpack.c.l.bf16 %v1923
      %v1932 = vperm.slane %v1185, 1
      %v1933 = vmul.f32 %v1867, %v1932
      %v1934 = vmul.f32 %v1868, %v1932
      %v1935 = vmul.f32 %v1924, %v1932
      %v1936 = vmul.f32 %v1869, %v1932
      %v1937 = vmul.f32 %v1870, %v1932
      %v1938 = vmul.f32 %v1925, %v1932
      %v1939 = vmul.f32 %v1871, %v1932
      %v1940 = vmul.f32 %v1872, %v1932
      %v1941 = vmul.f32 %v1926, %v1932
      %v1942 = vmul.f32 %v1873, %v1932
      %v1943 = vmul.f32 %v1874, %v1932
      %v1944 = vmul.f32 %v1927, %v1932
      %v1945 = vmul.f32 %v1875, %v1932
      %v1946 = vmul.f32 %v1876, %v1932
      %v1947 = vmul.f32 %v1928, %v1932
      %v1948 = vmul.f32 %v1877, %v1932
      %v1949 = vmul.f32 %v1878, %v1932
      %v1950 = vmul.f32 %v1929, %v1932
      %v1951 = vmul.f32 %v1879, %v1932
      %v1952 = vmul.f32 %v1880, %v1932
      %v1953 = vmul.f32 %v1930, %v1932
      %v1954 = vmul.f32 %v1881, %v1932
      %v1955 = vmul.f32 %v1882, %v1932
      %v1956 = vmul.f32 %v1931, %v1932
      %v1981 = vrot.slane %v1933, 1
      %v1982 = vrot.slane %v1934, 1
      %v1983 = vsel %vm1300, %v1981, %v1982
      %v1984 = vrot.slane %v1935, 1
      %v1985 = vsel %vm1300, %v1982, %v1984
      %v1986 = vrot.slane %v1936, 1
      %v1987 = vrot.slane %v1937, 1
      %v1988 = vsel %vm1300, %v1986, %v1987
      %v1989 = vrot.slane %v1938, 1
      %v1990 = vsel %vm1300, %v1987, %v1989
      %v1991 = vrot.slane %v1939, 1
      %v1992 = vrot.slane %v1940, 1
      %v1993 = vsel %vm1300, %v1991, %v1992
      %v1994 = vrot.slane %v1941, 1
      %v1995 = vsel %vm1300, %v1992, %v1994
      %v1996 = vrot.slane %v1942, 1
      %v1997 = vrot.slane %v1943, 1
      %v1998 = vsel %vm1300, %v1996, %v1997
      %v1999 = vrot.slane %v1944, 1
      %v2000 = vsel %vm1300, %v1997, %v1999
      %v2001 = vrot.slane %v1945, 1
      %v2002 = vrot.slane %v1946, 1
      %v2003 = vsel %vm1300, %v2001, %v2002
      %v2004 = vrot.slane %v1947, 1
      %v2005 = vsel %vm1300, %v2002, %v2004
      %v2006 = vrot.slane %v1948, 1
      %v2007 = vrot.slane %v1949, 1
      %v2008 = vsel %vm1300, %v2006, %v2007
      %v2009 = vrot.slane %v1950, 1
      %v2010 = vsel %vm1300, %v2007, %v2009
      %v2011 = vrot.slane %v1951, 1
      %v2012 = vrot.slane %v1952, 1
      %v2013 = vsel %vm1300, %v2011, %v2012
      %v2014 = vrot.slane %v1953, 1
      %v2015 = vsel %vm1300, %v2012, %v2014
      %v2016 = vrot.slane %v1954, 1
      %v2017 = vrot.slane %v1955, 1
      %v2018 = vsel %vm1300, %v2016, %v2017
      %v2019 = vrot.slane %v1956, 1
      %v2020 = vsel %vm1300, %v2017, %v2019
      %v2037 = vadd.f32 %v1900, %v1983
      %v2038 = vadd.f32 %v1901, %v1985
      %v2039 = vadd.f32 %v1902, %v1988
      %v2040 = vadd.f32 %v1903, %v1990
      %v2041 = vadd.f32 %v1904, %v1993
      %v2042 = vadd.f32 %v1905, %v1995
      %v2043 = vadd.f32 %v1906, %v1998
      %v2044 = vadd.f32 %v1907, %v2000
      %v2045 = vadd.f32 %v1908, %v2003
      %v2046 = vadd.f32 %v1909, %v2005
      %v2047 = vadd.f32 %v1910, %v2008
      %v2048 = vadd.f32 %v1911, %v2010
      %v2049 = vadd.f32 %v1912, %v2013
      %v2050 = vadd.f32 %v1913, %v2015
      %v2051 = vadd.f32 %v1914, %v2018
      %v2052 = vadd.f32 %v1915, %v2020
      %v2053 = vld [vmem:[%s1850] sm:$0xe]
      %v2054 = vld [vmem:[%s1850 + $0xc] sm:$0xe]
      %v2055 = vld [vmem:[%s1850 + $0x18] sm:$0xe]
      %v2056 = vld [vmem:[%s1850 + $0x24] sm:$0xe]
      %v2057 = vld [vmem:[%s1850 + $0x30] sm:$0xe]
      %v2058 = vld [vmem:[%s1850 + $0x3c] sm:$0xe]
      %v2059 = vld [vmem:[%s1850 + $0x48] sm:$0xe]
      %v2060 = vld [vmem:[%s1850 + $0x54] sm:$0xe]
      %v2061 = vunpack.c.l.bf16 %v2053
      %v2062 = vunpack.c.l.bf16 %v2054
      %v2063 = vunpack.c.l.bf16 %v2055
      %v2064 = vunpack.c.l.bf16 %v2056
      %v2065 = vunpack.c.l.bf16 %v2057
      %v2066 = vunpack.c.l.bf16 %v2058
      %v2067 = vunpack.c.l.bf16 %v2059
      %v2068 = vunpack.c.l.bf16 %v2060
      %v2069 = vperm.slane %v1185, 2
      %v2070 = vmul.f32 %v2061, %v2069
      %v2071 = vmul.f32 %v1868, %v2069
      %v2072 = vmul.f32 %v1924, %v2069
      %v2073 = vmul.f32 %v2062, %v2069
      %v2074 = vmul.f32 %v1870, %v2069
      %v2075 = vmul.f32 %v1925, %v2069
      %v2076 = vmul.f32 %v2063, %v2069
      %v2077 = vmul.f32 %v1872, %v2069
      %v2078 = vmul.f32 %v1926, %v2069
      %v2079 = vmul.f32 %v2064, %v2069
      %v2080 = vmul.f32 %v1874, %v2069
      %v2081 = vmul.f32 %v1927, %v2069
      %v2082 = vmul.f32 %v2065, %v2069
      %v2083 = vmul.f32 %v1876, %v2069
      %v2084 = vmul.f32 %v1928, %v2069
      %v2085 = vmul.f32 %v2066, %v2069
      %v2086 = vmul.f32 %v1878, %v2069
      %v2087 = vmul.f32 %v1929, %v2069
      %v2088 = vmul.f32 %v2067, %v2069
      %v2089 = vmul.f32 %v1880, %v2069
      %v2090 = vmul.f32 %v1930, %v2069
      %v2091 = vmul.f32 %v2068, %v2069
      %v2092 = vmul.f32 %v1882, %v2069
      %v2093 = vmul.f32 %v1931, %v2069
      %v2118 = vrot.slane %v2070, 2
      %v2119 = vrot.slane %v2071, 2
      %v2120 = vsel %vm1438, %v2118, %v2119
      %v2121 = vrot.slane %v2072, 2
      %v2122 = vsel %vm1438, %v2119, %v2121
      %v2123 = vrot.slane %v2073, 2
      %v2124 = vrot.slane %v2074, 2
      %v2125 = vsel %vm1438, %v2123, %v2124
      %v2126 = vrot.slane %v2075, 2
      %v2127 = vsel %vm1438, %v2124, %v2126
      %v2128 = vrot.slane %v2076, 2
      %v2129 = vrot.slane %v2077, 2
      %v2130 = vsel %vm1438, %v2128, %v2129
      %v2131 = vrot.slane %v2078, 2
      %v2132 = vsel %vm1438, %v2129, %v2131
      %v2133 = vrot.slane %v2079, 2
      %v2134 = vrot.slane %v2080, 2
      %v2135 = vsel %vm1438, %v2133, %v2134
      %v2136 = vrot.slane %v2081, 2
      %v2137 = vsel %vm1438, %v2134, %v2136
      %v2138 = vrot.slane %v2082, 2
      %v2139 = vrot.slane %v2083, 2
      %v2140 = vsel %vm1438, %v2138, %v2139
      %v2141 = vrot.slane %v2084, 2
      %v2142 = vsel %vm1438, %v2139, %v2141
      %v2143 = vrot.slane %v2085, 2
      %v2144 = vrot.slane %v2086, 2
      %v2145 = vsel %vm1438, %v2143, %v2144
      %v2146 = vrot.slane %v2087, 2
      %v2147 = vsel %vm1438, %v2144, %v2146
      %v2148 = vrot.slane %v2088, 2
      %v2149 = vrot.slane %v2089, 2
      %v2150 = vsel %vm1438, %v2148, %v2149
      %v2151 = vrot.slane %v2090, 2
      %v2152 = vsel %vm1438, %v2149, %v2151
      %v2153 = vrot.slane %v2091, 2
      %v2154 = vrot.slane %v2092, 2
      %v2155 = vsel %vm1438, %v2153, %v2154
      %v2156 = vrot.slane %v2093, 2
      %v2157 = vsel %vm1438, %v2154, %v2156
      %v2174 = vadd.f32 %v2037, %v2120
      %v2175 = vadd.f32 %v2038, %v2122
      %v2176 = vadd.f32 %v2039, %v2125
      %v2177 = vadd.f32 %v2040, %v2127
      %v2178 = vadd.f32 %v2041, %v2130
      %v2179 = vadd.f32 %v2042, %v2132
      %v2180 = vadd.f32 %v2043, %v2135
      %v2181 = vadd.f32 %v2044, %v2137
      %v2182 = vadd.f32 %v2045, %v2140
      %v2183 = vadd.f32 %v2046, %v2142
      %v2184 = vadd.f32 %v2047, %v2145
      %v2185 = vadd.f32 %v2048, %v2147
      %v2186 = vadd.f32 %v2049, %v2150
      %v2187 = vadd.f32 %v2050, %v2152
      %v2188 = vadd.f32 %v2051, %v2155
      %v2189 = vadd.f32 %v2052, %v2157
      %v2190 = vld [vmem:[%s4] sm:$0x1]
      %v2192 = vperm.slane %v2190, 0
      %v2194 = vadd.f32 %v2174, %v2192
      %v2195 = vadd.f32 %v2175, %v2192
      %v2196 = vadd.f32 %v2176, %v2192
      %v2197 = vadd.f32 %v2177, %v2192
      %v2198 = vadd.f32 %v2178, %v2192
      %v2199 = vadd.f32 %v2179, %v2192
      %v2200 = vadd.f32 %v2180, %v2192
      %v2201 = vadd.f32 %v2181, %v2192
      %v2202 = vadd.f32 %v2182, %v2192
      %v2203 = vadd.f32 %v2183, %v2192
      %v2204 = vadd.f32 %v2184, %v2192
      %v2205 = vadd.f32 %v2185, %v2192
      %v2206 = vadd.f32 %v2186, %v2192
      %v2207 = vadd.f32 %v2187, %v2192
      %v2208 = vadd.f32 %v2188, %v2192
      %v2209 = vadd.f32 %v2189, %v2192
      %v2210 = vxor.u32 %v2194, 2147483648
      %v2211 = vxor.u32 %v2195, 2147483648
      %v2212 = vxor.u32 %v2196, 2147483648
      %v2213 = vxor.u32 %v2197, 2147483648
      %v2214 = vxor.u32 %v2198, 2147483648
      %v2215 = vxor.u32 %v2199, 2147483648
      %v2216 = vxor.u32 %v2200, 2147483648
      %v2217 = vxor.u32 %v2201, 2147483648
      %v2218 = vxor.u32 %v2202, 2147483648
      %v2219 = vxor.u32 %v2203, 2147483648
      %v2220 = vxor.u32 %v2204, 2147483648
      %v2221 = vxor.u32 %v2205, 2147483648
      %v2222 = vxor.u32 %v2206, 2147483648
      %v2223 = vxor.u32 %v2207, 2147483648
      %v2224 = vxor.u32 %v2208, 2147483648
      %v2225 = vxor.u32 %v2209, 2147483648
      %v2226 = vmul.f32 %v2210, 1.442695
      %v2227 = vpow.pop %v2226
      %v2228 = vmul.f32 %v2211, 1.442695
      %v2229 = vpow.pop %v2228
      %v2230 = vmul.f32 %v2212, 1.442695
      %v2231 = vpow.pop %v2230
      %v2232 = vmul.f32 %v2213, 1.442695
      %v2233 = vpow.pop %v2232
      %v2234 = vmul.f32 %v2214, 1.442695
      %v2235 = vpow.pop %v2234
      %v2236 = vmul.f32 %v2215, 1.442695
      %v2237 = vpow.pop %v2236
      %v2238 = vmul.f32 %v2216, 1.442695
      %v2239 = vpow.pop %v2238
      %v2240 = vmul.f32 %v2217, 1.442695
      %v2241 = vpow.pop %v2240
      %v2242 = vmul.f32 %v2218, 1.442695
      %v2243 = vpow.pop %v2242
      %v2244 = vmul.f32 %v2219, 1.442695
      %v2245 = vpow.pop %v2244
      %v2246 = vmul.f32 %v2220, 1.442695
      %v2247 = vpow.pop %v2246
      %v2248 = vmul.f32 %v2221, 1.442695
      %v2249 = vpow.pop %v2248
      %v2250 = vmul.f32 %v2222, 1.442695
      %v2251 = vpow.pop %v2250
      %v2252 = vmul.f32 %v2223, 1.442695
      %v2253 = vpow.pop %v2252
      %v2254 = vmul.f32 %v2224, 1.442695
      %v2255 = vpow.pop %v2254
      %v2256 = vmul.f32 %v2225, 1.442695
      %v2257 = vpow.pop %v2256
      %v2258 = vadd.f32 %v2227, 1.0
      %v2259 = vadd.f32 %v2229, 1.0
      %v2260 = vadd.f32 %v2231, 1.0
      %v2261 = vadd.f32 %v2233, 1.0
      %v2262 = vadd.f32 %v2235, 1.0
      %v2263 = vadd.f32 %v2237, 1.0
      %v2264 = vadd.f32 %v2239, 1.0
      %v2265 = vadd.f32 %v2241, 1.0
      %v2266 = vadd.f32 %v2243, 1.0
      %v2267 = vadd.f32 %v2245, 1.0
      %v2268 = vadd.f32 %v2247, 1.0
      %v2269 = vadd.f32 %v2249, 1.0
      %v2270 = vadd.f32 %v2251, 1.0
      %v2271 = vadd.f32 %v2253, 1.0
      %v2272 = vadd.f32 %v2255, 1.0
      %v2273 = vadd.f32 %v2257, 1.0
      %v2274 = vrcp.pop %v2258
      %v2275 = vmul.f32 %v2258, %v2274
      %v2276 = vsub.f32 1.0, %v2275
      %v2277 = vmul.f32 %v2274, %v2276
      %v2278 = vadd.f32 %v2274, %v2277
      %vm2279 = vweird.f32 %v2258
      %vm2280 = vweird.f32 %v2274
      %vm2281 = vmor %vm2279, %vm2280
      %v2282 = vsel %vm2281, %v2274, %v2278
      %v2283 = vand.u32 2147483647, %v2258
      %vm2284 = vcmp.eq.f32.partialorder %v2283, 8.507059e+37
      %v2285 = vand.u32 %v2258, 2147483648
      %v2286 = vor.u32 1.1754944e-38, %v2285
      %v2287 = vsel %vm2284, %v2286, %v2282
      %v2288 = vmul.f32 1.0, %v2287
      %v2289 = vrcp.pop %v2259
      %v2290 = vmul.f32 %v2259, %v2289
      %v2291 = vsub.f32 1.0, %v2290
      %v2292 = vmul.f32 %v2289, %v2291
      %v2293 = vadd.f32 %v2289, %v2292
      %vm2294 = vweird.f32 %v2259
      %vm2295 = vweird.f32 %v2289
      %vm2296 = vmor %vm2294, %vm2295
      %v2297 = vsel %vm2296, %v2289, %v2293
      %v2298 = vand.u32 2147483647, %v2259
      %vm2299 = vcmp.eq.f32.partialorder %v2298, 8.507059e+37
      %v2300 = vand.u32 %v2259, 2147483648
      %v2301 = vor.u32 1.1754944e-38, %v2300
      %v2302 = vsel %vm2299, %v2301, %v2297
      %v2303 = vmul.f32 1.0, %v2302
      %v2304 = vrcp.pop %v2260
      %v2305 = vmul.f32 %v2260, %v2304
      %v2306 = vsub.f32 1.0, %v2305
      %v2307 = vmul.f32 %v2304, %v2306
      %v2308 = vadd.f32 %v2304, %v2307
      %vm2309 = vweird.f32 %v2260
      %vm2310 = vweird.f32 %v2304
      %vm2311 = vmor %vm2309, %vm2310
      %v2312 = vsel %vm2311, %v2304, %v2308
      %v2313 = vand.u32 2147483647, %v2260
      %vm2314 = vcmp.eq.f32.partialorder %v2313, 8.507059e+37
      %v2315 = vand.u32 %v2260, 2147483648
      %v2316 = vor.u32 1.1754944e-38, %v2315
      %v2317 = vsel %vm2314, %v2316, %v2312
      %v2318 = vmul.f32 1.0, %v2317
      %v2319 = vrcp.pop %v2261
      %v2320 = vmul.f32 %v2261, %v2319
      %v2321 = vsub.f32 1.0, %v2320
      %v2322 = vmul.f32 %v2319, %v2321
      %v2323 = vadd.f32 %v2319, %v2322
      %vm2324 = vweird.f32 %v2261
      %vm2325 = vweird.f32 %v2319
      %vm2326 = vmor %vm2324, %vm2325
      %v2327 = vsel %vm2326, %v2319, %v2323
      %v2328 = vand.u32 2147483647, %v2261
      %vm2329 = vcmp.eq.f32.partialorder %v2328, 8.507059e+37
      %v2330 = vand.u32 %v2261, 2147483648
      %v2331 = vor.u32 1.1754944e-38, %v2330
      %v2332 = vsel %vm2329, %v2331, %v2327
      %v2333 = vmul.f32 1.0, %v2332
      %v2334 = vrcp.pop %v2262
      %v2335 = vmul.f32 %v2262, %v2334
      %v2336 = vsub.f32 1.0, %v2335
      %v2337 = vmul.f32 %v2334, %v2336
      %v2338 = vadd.f32 %v2334, %v2337
      %vm2339 = vweird.f32 %v2262
      %vm2340 = vweird.f32 %v2334
      %vm2341 = vmor %vm2339, %vm2340
      %v2342 = vsel %vm2341, %v2334, %v2338
      %v2343 = vand.u32 2147483647, %v2262
      %vm2344 = vcmp.eq.f32.partialorder %v2343, 8.507059e+37
      %v2345 = vand.u32 %v2262, 2147483648
      %v2346 = vor.u32 1.1754944e-38, %v2345
      %v2347 = vsel %vm2344, %v2346, %v2342
      %v2348 = vmul.f32 1.0, %v2347
      %v2349 = vrcp.pop %v2263
      %v2350 = vmul.f32 %v2263, %v2349
      %v2351 = vsub.f32 1.0, %v2350
      %v2352 = vmul.f32 %v2349, %v2351
      %v2353 = vadd.f32 %v2349, %v2352
      %vm2354 = vweird.f32 %v2263
      %vm2355 = vweird.f32 %v2349
      %vm2356 = vmor %vm2354, %vm2355
      %v2357 = vsel %vm2356, %v2349, %v2353
      %v2358 = vand.u32 2147483647, %v2263
      %vm2359 = vcmp.eq.f32.partialorder %v2358, 8.507059e+37
      %v2360 = vand.u32 %v2263, 2147483648
      %v2361 = vor.u32 1.1754944e-38, %v2360
      %v2362 = vsel %vm2359, %v2361, %v2357
      %v2363 = vmul.f32 1.0, %v2362
      %v2364 = vrcp.pop %v2264
      %v2365 = vmul.f32 %v2264, %v2364
      %v2366 = vsub.f32 1.0, %v2365
      %v2367 = vmul.f32 %v2364, %v2366
      %v2368 = vadd.f32 %v2364, %v2367
      %vm2369 = vweird.f32 %v2264
      %vm2370 = vweird.f32 %v2364
      %vm2371 = vmor %vm2369, %vm2370
      %v2372 = vsel %vm2371, %v2364, %v2368
      %v2373 = vand.u32 2147483647, %v2264
      %vm2374 = vcmp.eq.f32.partialorder %v2373, 8.507059e+37
      %v2375 = vand.u32 %v2264, 2147483648
      %v2376 = vor.u32 1.1754944e-38, %v2375
      %v2377 = vsel %vm2374, %v2376, %v2372
      %v2378 = vmul.f32 1.0, %v2377
      %v2379 = vrcp.pop %v2265
      %v2380 = vmul.f32 %v2265, %v2379
      %v2381 = vsub.f32 1.0, %v2380
      %v2382 = vmul.f32 %v2379, %v2381
      %v2383 = vadd.f32 %v2379, %v2382
      %vm2384 = vweird.f32 %v2265
      %vm2385 = vweird.f32 %v2379
      %vm2386 = vmor %vm2384, %vm2385
      %v2387 = vsel %vm2386, %v2379, %v2383
      %v2388 = vand.u32 2147483647, %v2265
      %vm2389 = vcmp.eq.f32.partialorder %v2388, 8.507059e+37
      %v2390 = vand.u32 %v2265, 2147483648
      %v2391 = vor.u32 1.1754944e-38, %v2390
      %v2392 = vsel %vm2389, %v2391, %v2387
      %v2393 = vmul.f32 1.0, %v2392
      %v2394 = vrcp.pop %v2266
      %v2395 = vmul.f32 %v2266, %v2394
      %v2396 = vsub.f32 1.0, %v2395
      %v2397 = vmul.f32 %v2394, %v2396
      %v2398 = vadd.f32 %v2394, %v2397
      %vm2399 = vweird.f32 %v2266
      %vm2400 = vweird.f32 %v2394
      %vm2401 = vmor %vm2399, %vm2400
      %v2402 = vsel %vm2401, %v2394, %v2398
      %v2403 = vand.u32 2147483647, %v2266
      %vm2404 = vcmp.eq.f32.partialorder %v2403, 8.507059e+37
      %v2405 = vand.u32 %v2266, 2147483648
      %v2406 = vor.u32 1.1754944e-38, %v2405
      %v2407 = vsel %vm2404, %v2406, %v2402
      %v2408 = vmul.f32 1.0, %v2407
      %v2409 = vrcp.pop %v2267
      %v2410 = vmul.f32 %v2267, %v2409
      %v2411 = vsub.f32 1.0, %v2410
      %v2412 = vmul.f32 %v2409, %v2411
      %v2413 = vadd.f32 %v2409, %v2412
      %vm2414 = vweird.f32 %v2267
      %vm2415 = vweird.f32 %v2409
      %vm2416 = vmor %vm2414, %vm2415
      %v2417 = vsel %vm2416, %v2409, %v2413
      %v2418 = vand.u32 2147483647, %v2267
      %vm2419 = vcmp.eq.f32.partialorder %v2418, 8.507059e+37
      %v2420 = vand.u32 %v2267, 2147483648
      %v2421 = vor.u32 1.1754944e-38, %v2420
      %v2422 = vsel %vm2419, %v2421, %v2417
      %v2423 = vmul.f32 1.0, %v2422
      %v2424 = vrcp.pop %v2268
      %v2425 = vmul.f32 %v2268, %v2424
      %v2426 = vsub.f32 1.0, %v2425
      %v2427 = vmul.f32 %v2424, %v2426
      %v2428 = vadd.f32 %v2424, %v2427
      %vm2429 = vweird.f32 %v2268
      %vm2430 = vweird.f32 %v2424
      %vm2431 = vmor %vm2429, %vm2430
      %v2432 = vsel %vm2431, %v2424, %v2428
      %v2433 = vand.u32 2147483647, %v2268
      %vm2434 = vcmp.eq.f32.partialorder %v2433, 8.507059e+37
      %v2435 = vand.u32 %v2268, 2147483648
      %v2436 = vor.u32 1.1754944e-38, %v2435
      %v2437 = vsel %vm2434, %v2436, %v2432
      %v2438 = vmul.f32 1.0, %v2437
      %v2439 = vrcp.pop %v2269
      %v2440 = vmul.f32 %v2269, %v2439
      %v2441 = vsub.f32 1.0, %v2440
      %v2442 = vmul.f32 %v2439, %v2441
      %v2443 = vadd.f32 %v2439, %v2442
      %vm2444 = vweird.f32 %v2269
      %vm2445 = vweird.f32 %v2439
      %vm2446 = vmor %vm2444, %vm2445
      %v2447 = vsel %vm2446, %v2439, %v2443
      %v2448 = vand.u32 2147483647, %v2269
      %vm2449 = vcmp.eq.f32.partialorder %v2448, 8.507059e+37
      %v2450 = vand.u32 %v2269, 2147483648
      %v2451 = vor.u32 1.1754944e-38, %v2450
      %v2452 = vsel %vm2449, %v2451, %v2447
      %v2453 = vmul.f32 1.0, %v2452
      %v2454 = vrcp.pop %v2270
      %v2455 = vmul.f32 %v2270, %v2454
      %v2456 = vsub.f32 1.0, %v2455
      %v2457 = vmul.f32 %v2454, %v2456
      %v2458 = vadd.f32 %v2454, %v2457
      %vm2459 = vweird.f32 %v2270
      %vm2460 = vweird.f32 %v2454
      %vm2461 = vmor %vm2459, %vm2460
      %v2462 = vsel %vm2461, %v2454, %v2458
      %v2463 = vand.u32 2147483647, %v2270
      %vm2464 = vcmp.eq.f32.partialorder %v2463, 8.507059e+37
      %v2465 = vand.u32 %v2270, 2147483648
      %v2466 = vor.u32 1.1754944e-38, %v2465
      %v2467 = vsel %vm2464, %v2466, %v2462
      %v2468 = vmul.f32 1.0, %v2467
      %v2469 = vrcp.pop %v2271
      %v2470 = vmul.f32 %v2271, %v2469
      %v2471 = vsub.f32 1.0, %v2470
      %v2472 = vmul.f32 %v2469, %v2471
      %v2473 = vadd.f32 %v2469, %v2472
      %vm2474 = vweird.f32 %v2271
      %vm2475 = vweird.f32 %v2469
      %vm2476 = vmor %vm2474, %vm2475
      %v2477 = vsel %vm2476, %v2469, %v2473
      %v2478 = vand.u32 2147483647, %v2271
      %vm2479 = vcmp.eq.f32.partialorder %v2478, 8.507059e+37
      %v2480 = vand.u32 %v2271, 2147483648
      %v2481 = vor.u32 1.1754944e-38, %v2480
      %v2482 = vsel %vm2479, %v2481, %v2477
      %v2483 = vmul.f32 1.0, %v2482
      %v2484 = vrcp.pop %v2272
      %v2485 = vmul.f32 %v2272, %v2484
      %v2486 = vsub.f32 1.0, %v2485
      %v2487 = vmul.f32 %v2484, %v2486
      %v2488 = vadd.f32 %v2484, %v2487
      %vm2489 = vweird.f32 %v2272
      %vm2490 = vweird.f32 %v2484
      %vm2491 = vmor %vm2489, %vm2490
      %v2492 = vsel %vm2491, %v2484, %v2488
      %v2493 = vand.u32 2147483647, %v2272
      %vm2494 = vcmp.eq.f32.partialorder %v2493, 8.507059e+37
      %v2495 = vand.u32 %v2272, 2147483648
      %v2496 = vor.u32 1.1754944e-38, %v2495
      %v2497 = vsel %vm2494, %v2496, %v2492
      %v2498 = vmul.f32 1.0, %v2497
      %v2499 = vrcp.pop %v2273
      %v2500 = vmul.f32 %v2273, %v2499
      %v2501 = vsub.f32 1.0, %v2500
      %v2502 = vmul.f32 %v2499, %v2501
      %v2503 = vadd.f32 %v2499, %v2502
      %vm2504 = vweird.f32 %v2273
      %vm2505 = vweird.f32 %v2499
      %vm2506 = vmor %vm2504, %vm2505
      %v2507 = vsel %vm2506, %v2499, %v2503
      %v2508 = vand.u32 2147483647, %v2273
      %vm2509 = vcmp.eq.f32.partialorder %v2508, 8.507059e+37
      %v2510 = vand.u32 %v2273, 2147483648
      %v2511 = vor.u32 1.1754944e-38, %v2510
      %v2512 = vsel %vm2509, %v2511, %v2507
      %v2513 = vmul.f32 1.0, %v2512
      %v2514 = vmul.f32 %v2194, %v2288
      %v2515 = vmul.f32 %v2195, %v2303
      %v2516 = vmul.f32 %v2196, %v2318
      %v2517 = vmul.f32 %v2197, %v2333
      %v2518 = vmul.f32 %v2198, %v2348
      %v2519 = vmul.f32 %v2199, %v2363
      %v2520 = vmul.f32 %v2200, %v2378
      %v2521 = vmul.f32 %v2201, %v2393
      %v2522 = vmul.f32 %v2202, %v2408
      %v2523 = vmul.f32 %v2203, %v2423
      %v2524 = vmul.f32 %v2204, %v2438
      %v2525 = vmul.f32 %v2205, %v2453
      %v2526 = vmul.f32 %v2206, %v2468
      %v2527 = vmul.f32 %v2207, %v2483
      %v2528 = vmul.f32 %v2208, %v2498
      %v2529 = vmul.f32 %v2209, %v2513
      %v2530 = vpack.c.bf16 %v2514, %v2514
      %v2531 = vpack.c.bf16 %v2515, %v2515
      %v2532 = vpack.c.bf16 %v2516, %v2516
      %v2533 = vpack.c.bf16 %v2517, %v2517
      %v2534 = vpack.c.bf16 %v2518, %v2518
      %v2535 = vpack.c.bf16 %v2519, %v2519
      %v2536 = vpack.c.bf16 %v2520, %v2520
      %v2537 = vpack.c.bf16 %v2521, %v2521
      %v2538 = vpack.c.bf16 %v2522, %v2522
      %v2539 = vpack.c.bf16 %v2523, %v2523
      %v2540 = vpack.c.bf16 %v2524, %v2524
      %v2541 = vpack.c.bf16 %v2525, %v2525
      %v2542 = vpack.c.bf16 %v2526, %v2526
      %v2543 = vpack.c.bf16 %v2527, %v2527
      %v2544 = vpack.c.bf16 %v2528, %v2528
      %v2545 = vpack.c.bf16 %v2529, %v2529
      %2546 = vst.msk [vmem:[%s281] sm:$0xf] %vm289, %v2530
      %2547 = vst.msk [vmem:[%s281 + $0x4] sm:$0xf] %vm289, %v2531
      %2548 = vst.msk [vmem:[%s281 + $0x8] sm:$0xf] %vm289, %v2532
      %2549 = vst.msk [vmem:[%s281 + $0xc] sm:$0xf] %vm289, %v2533
      %2550 = vst.msk [vmem:[%s281 + $0x10] sm:$0xf] %vm289, %v2534
      %2551 = vst.msk [vmem:[%s281 + $0x14] sm:$0xf] %vm289, %v2535
      %2552 = vst.msk [vmem:[%s281 + $0x18] sm:$0xf] %vm289, %v2536
      %2553 = vst.msk [vmem:[%s281 + $0x1c] sm:$0xf] %vm289, %v2537
      %2554 = vst.msk [vmem:[%s281 + $0x20] sm:$0xf] %vm289, %v2538
      %2555 = vst.msk [vmem:[%s281 + $0x24] sm:$0xf] %vm289, %v2539
      %2556 = vst.msk [vmem:[%s281 + $0x28] sm:$0xf] %vm289, %v2540
      %2557 = vst.msk [vmem:[%s281 + $0x2c] sm:$0xf] %vm289, %v2541
      %2558 = vst.msk [vmem:[%s281 + $0x30] sm:$0xf] %vm289, %v2542
      %2559 = vst.msk [vmem:[%s281 + $0x34] sm:$0xf] %vm289, %v2543
      %2560 = vst.msk [vmem:[%s281 + $0x38] sm:$0xf] %vm289, %v2544
      %2561 = vst.msk [vmem:[%s281 + $0x3c] sm:$0xf] %vm289, %v2545
      %p2562 = scmp.eq.s32.totalorder %s23, 0
      // Predicated region
      $region49: #{mbconv_pallas.2} parent=39 // pred_check
        %p2563 = pneg %p2562
      $region50: #{mbconv_pallas.2} parent=39 // pred_check_branch
        %2565 = sbr.rel (%p2563) target = $region52
      $region51: #{mbconv_pallas.2} parent=39 // pred_region
        %2566 = vst.msk [vmem:[%s285] sm:$0x1] %vm292, 0.0
      $region52: #{mbconv_pallas.2} parent=39 // pred_fallthru
        _
      %v2567 = vld [vmem:[%s285] sm:$0x1]
      %vm2568 = vcmask 130048
      %v2569 = vsel %vm2568, %v2514, 0.0
      %v2570 = vsel %vm2568, %v2515, 0.0
      %v2571 = vadd.f32 %v2569, %v2570
      %v2572 = vsel %vm2568, %v2516, 0.0
      %v2573 = vadd.f32 %v2571, %v2572
      %v2574 = vsel %vm2568, %v2517, 0.0
      %v2575 = vadd.f32 %v2573, %v2574
      %v2576 = vsel %vm2568, %v2518, 0.0
      %v2577 = vadd.f32 %v2575, %v2576
      %v2578 = vsel %vm2568, %v2519, 0.0
      %v2579 = vadd.f32 %v2577, %v2578
      %v2580 = vsel %vm2568, %v2520, 0.0
      %v2581 = vadd.f32 %v2579, %v2580
      %v2582 = vsel %vm2568, %v2521, 0.0
      %v2583 = vadd.f32 %v2581, %v2582
      %v2584 = vsel %vm2568, %v2522, 0.0
      %v2585 = vadd.f32 %v2583, %v2584
      %v2586 = vsel %vm2568, %v2523, 0.0
      %v2587 = vadd.f32 %v2585, %v2586
      %v2588 = vsel %vm2568, %v2524, 0.0
      %v2589 = vadd.f32 %v2587, %v2588
      %v2590 = vsel %vm2568, %v2525, 0.0
      %v2591 = vadd.f32 %v2589, %v2590
      %v2592 = vsel %vm2568, %v2526, 0.0
      %v2593 = vadd.f32 %v2591, %v2592
      %v2594 = vsel %vm2568, %v2527, 0.0
      %v2595 = vadd.f32 %v2593, %v2594
      %v2596 = vsel %vm2568, %v2528, 0.0
      %v2597 = vadd.f32 %v2595, %v2596
      %v2598 = vsel %vm2568, %v2529, 0.0
      %v2599 = vadd.f32 %v2597, %v2598
      %v2600 = vrot.slane %v2599, 4
      %v2601 = vadd.f32 %v2599, %v2600
      %v2602 = vrot.slane %v2601, 2
      %v2603 = vadd.f32 %v2601, %v2602
      %v2604 = vrot.slane %v2603, 1
      %v2605 = vadd.f32 %v2603, %v2604
      %v2606 = vadd.f32 %v2567, %v2605
      %2607 = vst.msk [vmem:[%s285] sm:$0x1] %vm292, %v2606
      %s2608 = smul.u32 8, %s23
      %p2609 = scmp.lt.s32.totalorder %s22, 1
      %s2610 = scalar_select %p2609, %s22, 1
      %p2611 = scmp.lt.s32.totalorder %s2608, 15
      %s2612 = scalar_select %p2611, %s2608, 15
      %s2613 = smul.addr %s2612, 2
      %s2614 = smul.addr %s2610, 32
      %s2615 = sadd.s32 %s2613, %s2614
      %s2616 = smul.addr %s2615, 4
      %s2617 = scalar_lea.vmem %s5, %s2616
      %p2618 = scmp.lt.s32.totalorder %s22, 1
      %s2619 = scalar_select %p2618, %s22, 1
      %s2620 = scalar_lea.vmem %s6, %s2619
      // Predicated region
      $region53: #{mbconv_pallas.2} parent=39 // pred_check
        %p2621 = pneg %p160
      $region54: #{mbconv_pallas.2} parent=39 // pred_check_branch
        %2623 = sbr.rel (%p2621) target = $region56
      $region55: #{mbconv_pallas.2} parent=39 // pred_region
        %s2624 = smul.u32 8, %s23
      $region56: #{mbconv_pallas.2} parent=39 // pred_fallthru
        _
      // Predicated region
      $region57: #{mbconv_pallas.2} parent=39 // pred_check
        %p2625 = pneg %p186
      $region58: #{mbconv_pallas.2} parent=39 // pred_check_branch
        %2627 = sbr.rel (%p2625) target = $region60
      $region59: #{mbconv_pallas.2} parent=39 // pred_region
        _
      $region60: #{mbconv_pallas.2} parent=39 // pred_fallthru
        _
    $region40: #{mbconv_pallas.2} parent=5 // pred_fallthru
      _
    %p2628 = scmp.le.s32.totalorder 2, %s13
    // Predicated region
    $region61: #{mbconv_pallas.2} parent=5 // pred_check
      %p2629 = pneg %p2628
    $region62: #{mbconv_pallas.2} parent=5 // pred_check_branch
      %2631 = sbr.rel (%p2629) target = $region64
    $region63: #{mbconv_pallas.2} parent=5 // pred_region
      %s2632 = ssub.s32 %s13, 2
      // Predicated region
      $region65: #{mbconv_pallas.2} parent=63 // pred_check
        %p2633 = pneg %p166
      $region66: #{mbconv_pallas.2} parent=63 // pred_check_branch
        %2635 = sbr.rel (%p2633) target = $region68
      $region67: #{mbconv_pallas.2} parent=63 // pred_region
        %s2636 = smul.u32 8, %s25
        %p2637 = scmp.lt.s32.totalorder %s24, 1
        %s2638 = scalar_select %p2637, %s24, 1
        %p2639 = scmp.lt.s32.totalorder %s2636, 15
        %s2640 = scalar_select %p2639, %s2636, 15
        %s2641 = smul.addr %s2640, 2
        %s2642 = smul.addr %s2638, 32
        %s2643 = sadd.s32 %s2641, %s2642
        %s2644 = smul.addr %s2643, 4
        %s2645 = scalar_lea.vmem %s5, %s2644
      $region68: #{mbconv_pallas.2} parent=63 // pred_fallthru
        _
      // Predicated region
      $region69: #{mbconv_pallas.2} parent=63 // pred_check
        %p2646 = pneg %p192
      $region70: #{mbconv_pallas.2} parent=63 // pred_check_branch
        %2648 = sbr.rel (%p2646) target = $region72
      $region71: #{mbconv_pallas.2} parent=63 // pred_region
        %p2649 = scmp.lt.s32.totalorder %s24, 1
        %s2650 = scalar_select %p2649, %s24, 1
        %s2651 = scalar_lea.vmem %s6, %s2650
      $region72: #{mbconv_pallas.2} parent=63 // pred_fallthru
        _
    $region64: #{mbconv_pallas.2} parent=5 // pred_fallthru
      _
  $region6: #{mbconv_pallas.2} parent=0 // loop_footer
    %s17 = sadd.s32 1, %s13
  $region7: #{mbconv_pallas.2} parent=0 // loop_footer_branch
    %12 = sbr.rel target = $region3
  $region8: #{mbconv_pallas.2} parent=0 // loop_exit
    _

</llo_original>
